<compile_context>
chip_gen: v5e
topology: v5e:2x2
jax: 0.10.0
libtpu: 0.0.40
codegen_flags: <defaults>
</compile_context>

<pallas_src>
import math

import jax
import jax.numpy as jnp
from jax import lax
from jax.experimental import pallas as pl
from jax.experimental.pallas import tpu as pltpu


def _round_up(n: int, m: int) -> int:
    return ((n + m - 1) // m) * m


def _choose_channel_block(C: int, per_channel_bytes: int,
                          budget_bytes: int = 6 * 1024 * 1024) -> int:
    """Largest channel block G with C % G == 0 and (G == C or G % 8 == 0) that fits
    the VMEM budget; prefers >= 2 grid steps so the 'parallel' axis feeds both
    TensorCores on v7x."""
    cands = [g for g in range(1, C + 1) if C % g == 0 and (g == C or g % 8 == 0)]
    fits = [g for g in cands if g * per_channel_bytes <= budget_bytes]
    pool = fits if fits else [min(cands)]
    multi = [g for g in pool if C // g >= 2]
    return max(multi) if multi else max(pool)


def sae_with_channel_forward(x, w_enc, b_enc, b_dec, *,
                             compute_dtype=jnp.bfloat16,
                             channel_block_size=None):
    """x: (B, *ch, I); W_enc: (*ch, H, I); b_enc: (*ch, H); b_dec: (*ch, I).
    Returns (x_reconstructed, {'post_act', 'pre_act'}) matching SAEWithChannel.forward
    on its default (relu, no mask/topk/neuron_weight) path."""
    out_dtype = x.dtype
    B = x.shape[0]
    I = x.shape[-1]
    ch_dims = x.shape[1:-1]
    C = int(math.prod(ch_dims)) if ch_dims else 1
    H = w_enc.shape[-2]
    assert w_enc.shape == (*ch_dims, H, I)
    assert b_enc.shape == (*ch_dims, H)
    assert b_dec.shape == (*ch_dims, I)

    # Flatten channel dims (pure reshapes, no data movement); stream weights narrow.
    # TODO(synk): in production store W_enc in bf16 at parameter creation so this
    # cast is not paid on every call.
    x3 = x.reshape(B, C, I)
    w3 = w_enc.reshape(C, H, I).astype(compute_dtype)
    be3 = b_enc.reshape(C, 1, H).astype(jnp.float32)
    bd3 = b_dec.reshape(C, 1, I).astype(jnp.float32)

    # Pad lane (last) dims to multiples of 128 -> lane-dense loads/stores.
    Hp, Ip = _round_up(H, 128), _round_up(I, 128)
    if Ip != I:
        x3 = jnp.pad(x3, ((0, 0), (0, 0), (0, Ip - I)))
        w3 = jnp.pad(w3, ((0, 0), (0, 0), (0, Ip - I)))
        bd3 = jnp.pad(bd3, ((0, 0), (0, 0), (0, Ip - I)))
    if Hp != H:
        w3 = jnp.pad(w3, ((0, 0), (0, Hp - H), (0, 0)))
        be3 = jnp.pad(be3, ((0, 0), (0, 0), (0, Hp - H)))

    w_bytes = jnp.dtype(compute_dtype).itemsize
    a_bytes = jnp.dtype(out_dtype).itemsize
    per_channel_bytes = (Hp * Ip * w_bytes                 # weight slab
                         + B * Ip * a_bytes                # x slice
                         + (Hp + Ip) * 4                   # biases
                         + B * (2 * Hp + Ip) * a_bytes)    # outputs
    if channel_block_size is None:
        G = _choose_channel_block(C, per_channel_bytes)
    else:
        G = int(channel_block_size)
        assert C % G == 0 and (G == C or G % 8 == 0), "invalid channel block size"
    num_blocks = C // G

    def kernel(x_ref, w_ref, be_ref, bd_ref, rec_ref, post_ref, pre_ref):
        # Static unrolled loop over the channels of this block: each channel is two
        # small lane-dense matmuls that share the resident bf16 weight slab.
        for g in range(G):
            w_g = w_ref[g]                       # (Hp, Ip), compute_dtype
            b_dec_g = bd_ref[g]                  # (1, Ip)  f32
            b_enc_g = be_ref[g]                  # (1, Hp)  f32
            xc = x_ref[:, g, :] - b_dec_g        # (B, Ip)  f32 centered input
            # Encoder: contract I = dim 1 of BOTH operands -> no weight transpose.
            pre = lax.dot_general(
                xc.astype(compute_dtype), w_g,
                dimension_numbers=(((1,), (1,)), ((), ())),
                preferred_element_type=jnp.float32) + b_enc_g          # (B, Hp)
            post = jnp.maximum(pre, 0.0)         # ReLU
            # Decoder: standard (B,Hp) @ (Hp,Ip) with the SAME weight slab.
            rec = lax.dot_general(
                post.astype(compute_dtype), w_g,
                dimension_numbers=(((1,), (0,)), ((), ())),
                preferred_element_type=jnp.float32) + b_dec_g          # (B, Ip)
            pre_ref[:, g, :] = pre.astype(pre_ref.dtype)
            post_ref[:, g, :] = post.astype(post_ref.dtype)
            rec_ref[:, g, :] = rec.astype(rec_ref.dtype)

    flops = 4 * B * C * Hp * Ip
    bytes_accessed = (w3.size * w_bytes + x3.size * a_bytes
                      + (be3.size + bd3.size) * 4
                      + B * C * (2 * Hp + Ip) * a_bytes)

    est_vmem = 2 * G * per_channel_bytes          # double-buffered blocks
    cp_kwargs = dict(dimension_semantics=("parallel",))
    if est_vmem > 30 * 1024 * 1024:
        cp_kwargs["vmem_limit_bytes"] = min(int(est_vmem * 1.3) + (2 << 20),
                                            120 * 1024 * 1024)

    rec3, post3, pre3 = pl.pallas_call(
        kernel,
        out_shape=(
            jax.ShapeDtypeStruct((B, C, Ip), out_dtype),   # x_reconstructed
            jax.ShapeDtypeStruct((B, C, Hp), out_dtype),   # post_act
            jax.ShapeDtypeStruct((B, C, Hp), out_dtype),   # pre_act
        ),
        grid_spec=pltpu.PrefetchScalarGridSpec(
            num_scalar_prefetch=0,
            grid=(num_blocks,),
            in_specs=[
                pl.BlockSpec((B, G, Ip), lambda c: (0, c, 0)),    # x
                pl.BlockSpec((G, Hp, Ip), lambda c: (c, 0, 0)),   # W_enc (bf16)
                pl.BlockSpec((G, 1, Hp), lambda c: (c, 0, 0)),    # b_enc
                pl.BlockSpec((G, 1, Ip), lambda c: (c, 0, 0)),    # b_dec
            ],
            out_specs=[
                pl.BlockSpec((B, G, Ip), lambda c: (0, c, 0)),    # x_rec, final layout
                pl.BlockSpec((B, G, Hp), lambda c: (0, c, 0)),    # post_act
                pl.BlockSpec((B, G, Hp), lambda c: (0, c, 0)),    # pre_act
            ],
        ),
        compiler_params=pltpu.CompilerParams(**cp_kwargs),
        cost_estimate=pl.CostEstimate(flops=flops, transcendentals=0,
                                      bytes_accessed=bytes_accessed),
    )(x3, w3, be3, bd3)

    # Strip lane padding (no-op when H, I already multiples of 128) and restore the
    # original channel dims — pure slices/reshapes, no transpose, no extra HBM pass
    # when unpadded.
    x_rec = rec3[..., :I].reshape(B, *ch_dims, I)
    post = post3[..., :H].reshape(B, *ch_dims, H)
    pre = pre3[..., :H].reshape(B, *ch_dims, H)
    # TODO(synk): optional paths not implemented (topk masking via torch.topk,
    # neuron_mask, neuron_weight, ThresholdReLU/JumpReLU/PowerReLU/SigmoidLU);
    # only the default relu / topk=None / no-mask forward is covered.
    return x_rec, {"post_act": post, "pre_act": pre}


if __name__ == "__main__":
    # Small but lane-dense shapes: batch=8, channel_size_ls=(16,), hidden=256,
    # input=128 (H, I multiples of 128; channel blocks of 8 -> a 2-step parallel grid).
    B, C, H, I = 8, 16, 256, 128

    key = jax.random.PRNGKey(0)
    kx, kw, kbe, kbd = jax.random.split(key, 4)
    x = jax.random.normal(kx, (B, C, I), dtype=jnp.float32)
    w_enc = jax.random.normal(kw, (C, H, I), dtype=jnp.float32) / math.sqrt(I)
    b_enc = 0.01 * jax.random.normal(kbe, (C, H), dtype=jnp.float32)
    b_dec = 0.1 * jax.random.normal(kbd, (C, I), dtype=jnp.float32)

    x_rec, aux = sae_with_channel_forward(x, w_enc, b_enc, b_dec)
    x_rec, post, pre = jax.block_until_ready((x_rec, aux["post_act"], aux["pre_act"]))

    # Pure-JAX reference that mirrors the kernel's bf16 weight/activation rounding
    # (with exact f32 accumulation), so the check isolates the Pallas lowering.
    hp = lax.Precision.HIGHEST
    w_q = w_enc.astype(jnp.bfloat16).astype(jnp.float32)
    xc_q = (x - b_dec[None]).astype(jnp.bfloat16).astype(jnp.float32)
    pre_ref = jnp.einsum("chi,bci->bch", w_q, xc_q, precision=hp) + b_enc[None]
    post_ref = jnp.maximum(pre_ref, 0.0)
    post_q = post_ref.astype(jnp.bfloat16).astype(jnp.float32)
    rec_ref = jnp.einsum("chi,bch->bci", w_q, post_q, precision=hp) + b_dec[None]

    assert x_rec.shape == (B, C, I)
    assert pre.shape == (B, C, H) and post.shape == (B, C, H)
    assert jnp.allclose(pre, pre_ref, atol=2e-2, rtol=2e-2)
    assert jnp.allclose(post, post_ref, atol=2e-2, rtol=2e-2)
    assert jnp.allclose(x_rec, rec_ref, atol=2e-2, rtol=2e-2)

    print("KERNEL_OK")
</pallas_src>

<mosaic_0001>
module attributes {stable_mosaic.version = 11 : i64} {
  func.func @kernel(%arg0: i32, %arg1: memref<8x8x128xf32, #tpu.memory_space<vmem>>, %arg2: memref<8x256x128xbf16, #tpu.memory_space<vmem>>, %arg3: memref<8x1x256xf32, #tpu.memory_space<vmem>>, %arg4: memref<8x1x128xf32, #tpu.memory_space<vmem>>, %arg5: memref<8x8x128xf32, #tpu.memory_space<vmem>>, %arg6: memref<8x8x256xf32, #tpu.memory_space<vmem>>, %arg7: memref<8x8x256xf32, #tpu.memory_space<vmem>>) attributes {dimension_semantics = [#tpu.dimension_semantics<parallel>], iteration_bounds = array<i64: 2>, scalar_prefetch = 0 : i64, scratch_operands = 0 : i64, tpu.core_type = #tpu.core_type<tc>, window_params = [{transform_indices = @transform_0, window_bounds = array<i64: 8, 8, 128>}, {transform_indices = @transform_1, window_bounds = array<i64: 8, 256, 128>}, {transform_indices = @transform_2, window_bounds = array<i64: 8, 1, 256>}, {transform_indices = @transform_3, window_bounds = array<i64: 8, 1, 128>}, {transform_indices = @transform_4, window_bounds = array<i64: 8, 8, 128>}, {transform_indices = @transform_5, window_bounds = array<i64: 8, 8, 256>}, {transform_indices = @transform_6, window_bounds = array<i64: 8, 8, 256>}]} {
    %c0 = arith.constant 0 : index
    %c0_0 = arith.constant 0 : index
    %c0_1 = arith.constant 0 : index
    %0 = vector.load %arg2[%c0, %c0_0, %c0_1] : memref<8x256x128xbf16, #tpu.memory_space<vmem>>, vector<1x256x128xbf16>
    %1 = vector.shape_cast %0 : vector<1x256x128xbf16> to vector<256x128xbf16>
    %c0_2 = arith.constant 0 : index
    %c0_3 = arith.constant 0 : index
    %c0_4 = arith.constant 0 : index
    %2 = vector.load %arg4[%c0_2, %c0_3, %c0_4] : memref<8x1x128xf32, #tpu.memory_space<vmem>>, vector<1x1x128xf32>
    %3 = vector.shape_cast %2 : vector<1x1x128xf32> to vector<1x128xf32>
    %c0_5 = arith.constant 0 : index
    %c0_6 = arith.constant 0 : index
    %c0_7 = arith.constant 0 : index
    %4 = vector.load %arg3[%c0_5, %c0_6, %c0_7] : memref<8x1x256xf32, #tpu.memory_space<vmem>>, vector<1x1x256xf32>
    %5 = vector.shape_cast %4 : vector<1x1x256xf32> to vector<1x256xf32>
    %c0_8 = arith.constant 0 : index
    %c0_9 = arith.constant 0 : index
    %c0_10 = arith.constant 0 : index
    %6 = vector.load %arg1[%c0_8, %c0_9, %c0_10] : memref<8x8x128xf32, #tpu.memory_space<vmem>>, vector<8x1x128xf32>
    %7 = vector.shape_cast %6 : vector<8x1x128xf32> to vector<8x128xf32>
    %8 = vector.broadcast %3 : vector<1x128xf32> to vector<8x128xf32>
    %9 = arith.subf %7, %8 : vector<8x128xf32>
    %10 = arith.truncf %9 : vector<8x128xf32> to vector<8x128xbf16>
    %cst = arith.constant dense<0.000000e+00> : vector<8x256xf32>
    %11 = tpu.matmul %10, %1, %cst {dimension_numbers = #tpu.dot_dimension_numbers<[1], [1], [0], [0], [0, 0, 1, 0], [], []>} : vector<8x128xbf16>, vector<256x128xbf16>, vector<8x256xf32> -> vector<8x256xf32>
    %12 = vector.broadcast %5 : vector<1x256xf32> to vector<8x256xf32>
    %13 = arith.addf %11, %12 : vector<8x256xf32>
    %cst_11 = arith.constant 0.000000e+00 : f32
    %14 = vector.broadcast %cst_11 : f32 to vector<8x256xf32>
    %15 = arith.maximumf %13, %14 : vector<8x256xf32>
    %16 = arith.truncf %15 : vector<8x256xf32> to vector<8x256xbf16>
    %cst_12 = arith.constant dense<0.000000e+00> : vector<8x128xf32>
    %17 = tpu.matmul %16, %1, %cst_12 {dimension_numbers = #tpu.dot_dimension_numbers<[1], [0], [0], [1], [0, 0, 1, 1], [], []>} : vector<8x256xbf16>, vector<256x128xbf16>, vector<8x128xf32> -> vector<8x128xf32>
    %18 = vector.broadcast %3 : vector<1x128xf32> to vector<8x128xf32>
    %19 = arith.addf %17, %18 : vector<8x128xf32>
    %c0_13 = arith.constant 0 : index
    %c0_14 = arith.constant 0 : index
    %c0_15 = arith.constant 0 : index
    %20 = vector.load %arg7[%c0_13, %c0_14, %c0_15] : memref<8x8x256xf32, #tpu.memory_space<vmem>>, vector<8x1x256xf32>
    %21 = vector.shape_cast %20 : vector<8x1x256xf32> to vector<8x256xf32>
    %22 = vector.shape_cast %13 : vector<8x256xf32> to vector<8x1x256xf32>
    tpu.vector_store %arg7[%c0_13, %c0_14, %c0_15], %22 {strides = array<i32>} : memref<8x8x256xf32, #tpu.memory_space<vmem>>, vector<8x1x256xf32>,
    %c0_16 = arith.constant 0 : index
    %c0_17 = arith.constant 0 : index
    %c0_18 = arith.constant 0 : index
    %23 = vector.load %arg6[%c0_16, %c0_17, %c0_18] : memref<8x8x256xf32, #tpu.memory_space<vmem>>, vector<8x1x256xf32>
    %24 = vector.shape_cast %23 : vector<8x1x256xf32> to vector<8x256xf32>
    %25 = vector.shape_cast %15 : vector<8x256xf32> to vector<8x1x256xf32>
    tpu.vector_store %arg6[%c0_16, %c0_17, %c0_18], %25 {strides = array<i32>} : memref<8x8x256xf32, #tpu.memory_space<vmem>>, vector<8x1x256xf32>,
    %c0_19 = arith.constant 0 : index
    %c0_20 = arith.constant 0 : index
    %c0_21 = arith.constant 0 : index
    %26 = vector.load %arg5[%c0_19, %c0_20, %c0_21] : memref<8x8x128xf32, #tpu.memory_space<vmem>>, vector<8x1x128xf32>
    %27 = vector.shape_cast %26 : vector<8x1x128xf32> to vector<8x128xf32>
    %28 = vector.shape_cast %19 : vector<8x128xf32> to vector<8x1x128xf32>
    tpu.vector_store %arg5[%c0_19, %c0_20, %c0_21], %28 {strides = array<i32>} : memref<8x8x128xf32, #tpu.memory_space<vmem>>, vector<8x1x128xf32>,
    %c1 = arith.constant 1 : index
    %c0_22 = arith.constant 0 : index
    %c0_23 = arith.constant 0 : index
    %29 = vector.load %arg2[%c1, %c0_22, %c0_23] : memref<8x256x128xbf16, #tpu.memory_space<vmem>>, vector<1x256x128xbf16>
    %30 = vector.shape_cast %29 : vector<1x256x128xbf16> to vector<256x128xbf16>
    %c1_24 = arith.constant 1 : index
    %c0_25 = arith.constant 0 : index
    %c0_26 = arith.constant 0 : index
    %31 = vector.load %arg4[%c1_24, %c0_25, %c0_26] : memref<8x1x128xf32, #tpu.memory_space<vmem>>, vector<1x1x128xf32>
    %32 = vector.shape_cast %31 : vector<1x1x128xf32> to vector<1x128xf32>
    %c1_27 = arith.constant 1 : index
    %c0_28 = arith.constant 0 : index
    %c0_29 = arith.constant 0 : index
    %33 = vector.load %arg3[%c1_27, %c0_28, %c0_29] : memref<8x1x256xf32, #tpu.memory_space<vmem>>, vector<1x1x256xf32>
    %34 = vector.shape_cast %33 : vector<1x1x256xf32> to vector<1x256xf32>
    %c0_30 = arith.constant 0 : index
    %c1_31 = arith.constant 1 : index
    %c0_32 = arith.constant 0 : index
    %35 = vector.load %arg1[%c0_30, %c1_31, %c0_32] : memref<8x8x128xf32, #tpu.memory_space<vmem>>, vector<8x1x128xf32>
    %36 = vector.shape_cast %35 : vector<8x1x128xf32> to vector<8x128xf32>
    %37 = vector.broadcast %32 : vector<1x128xf32> to vector<8x128xf32>
    %38 = arith.subf %36, %37 : vector<8x128xf32>
    %39 = arith.truncf %38 : vector<8x128xf32> to vector<8x128xbf16>
    %cst_33 = arith.constant dense<0.000000e+00> : vector<8x256xf32>
    %40 = tpu.matmul %39, %30, %cst_33 {dimension_numbers = #tpu.dot_dimension_numbers<[1], [1], [0], [0], [0, 0, 1, 0], [], []>} : vector<8x128xbf16>, vector<256x128xbf16>, vector<8x256xf32> -> vector<8x256xf32>
    %41 = vector.broadcast %34 : vector<1x256xf32> to vector<8x256xf32>
    %42 = arith.addf %40, %41 : vector<8x256xf32>
    %cst_34 = arith.constant 0.000000e+00 : f32
    %43 = vector.broadcast %cst_34 : f32 to vector<8x256xf32>
    %44 = arith.maximumf %42, %43 : vector<8x256xf32>
    %45 = arith.truncf %44 : vector<8x256xf32> to vector<8x256xbf16>
    %cst_35 = arith.constant dense<0.000000e+00> : vector<8x128xf32>
    %46 = tpu.matmul %45, %30, %cst_35 {dimension_numbers = #tpu.dot_dimension_numbers<[1], [0], [0], [1], [0, 0, 1, 1], [], []>} : vector<8x256xbf16>, vector<256x128xbf16>, vector<8x128xf32> -> vector<8x128xf32>
    %47 = vector.broadcast %32 : vector<1x128xf32> to vector<8x128xf32>
    %48 = arith.addf %46, %47 : vector<8x128xf32>
    %c0_36 = arith.constant 0 : index
    %c1_37 = arith.constant 1 : index
    %c0_38 = arith.constant 0 : index
    %49 = vector.load %arg7[%c0_36, %c1_37, %c0_38] : memref<8x8x256xf32, #tpu.memory_space<vmem>>, vector<8x1x256xf32>
    %50 = vector.shape_cast %49 : vector<8x1x256xf32> to vector<8x256xf32>
    %51 = vector.shape_cast %42 : vector<8x256xf32> to vector<8x1x256xf32>
    tpu.vector_store %arg7[%c0_36, %c1_37, %c0_38], %51 {strides = array<i32>} : memref<8x8x256xf32, #tpu.memory_space<vmem>>, vector<8x1x256xf32>,
    %c0_39 = arith.constant 0 : index
    %c1_40 = arith.constant 1 : index
    %c0_41 = arith.constant 0 : index
    %52 = vector.load %arg6[%c0_39, %c1_40, %c0_41] : memref<8x8x256xf32, #tpu.memory_space<vmem>>, vector<8x1x256xf32>
    %53 = vector.shape_cast %52 : vector<8x1x256xf32> to vector<8x256xf32>
    %54 = vector.shape_cast %44 : vector<8x256xf32> to vector<8x1x256xf32>
    tpu.vector_store %arg6[%c0_39, %c1_40, %c0_41], %54 {strides = array<i32>} : memref<8x8x256xf32, #tpu.memory_space<vmem>>, vector<8x1x256xf32>,
    %c0_42 = arith.constant 0 : index
    %c1_43 = arith.constant 1 : index
    %c0_44 = arith.constant 0 : index
    %55 = vector.load %arg5[%c0_42, %c1_43, %c0_44] : memref<8x8x128xf32, #tpu.memory_space<vmem>>, vector<8x1x128xf32>
    %56 = vector.shape_cast %55 : vector<8x1x128xf32> to vector<8x128xf32>
    %57 = vector.shape_cast %48 : vector<8x128xf32> to vector<8x1x128xf32>
    tpu.vector_store %arg5[%c0_42, %c1_43, %c0_44], %57 {strides = array<i32>} : memref<8x8x128xf32, #tpu.memory_space<vmem>>, vector<8x1x128xf32>,
    %c2 = arith.constant 2 : index
    %c0_45 = arith.constant 0 : index
    %c0_46 = arith.constant 0 : index
    %58 = vector.load %arg2[%c2, %c0_45, %c0_46] : memref<8x256x128xbf16, #tpu.memory_space<vmem>>, vector<1x256x128xbf16>
    %59 = vector.shape_cast %58 : vector<1x256x128xbf16> to vector<256x128xbf16>
    %c2_47 = arith.constant 2 : index
    %c0_48 = arith.constant 0 : index
    %c0_49 = arith.constant 0 : index
    %60 = vector.load %arg4[%c2_47, %c0_48, %c0_49] : memref<8x1x128xf32, #tpu.memory_space<vmem>>, vector<1x1x128xf32>
    %61 = vector.shape_cast %60 : vector<1x1x128xf32> to vector<1x128xf32>
    %c2_50 = arith.constant 2 : index
    %c0_51 = arith.constant 0 : index
    %c0_52 = arith.constant 0 : index
    %62 = vector.load %arg3[%c2_50, %c0_51, %c0_52] : memref<8x1x256xf32, #tpu.memory_space<vmem>>, vector<1x1x256xf32>
    %63 = vector.shape_cast %62 : vector<1x1x256xf32> to vector<1x256xf32>
    %c0_53 = arith.constant 0 : index
    %c2_54 = arith.constant 2 : index
    %c0_55 = arith.constant 0 : index
    %64 = vector.load %arg1[%c0_53, %c2_54, %c0_55] : memref<8x8x128xf32, #tpu.memory_space<vmem>>, vector<8x1x128xf32>
    %65 = vector.shape_cast %64 : vector<8x1x128xf32> to vector<8x128xf32>
    %66 = vector.broadcast %61 : vector<1x128xf32> to vector<8x128xf32>
    %67 = arith.subf %65, %66 : vector<8x128xf32>
    %68 = arith.truncf %67 : vector<8x128xf32> to vector<8x128xbf16>
    %cst_56 = arith.constant dense<0.000000e+00> : vector<8x256xf32>
    %69 = tpu.matmul %68, %59, %cst_56 {dimension_numbers = #tpu.dot_dimension_numbers<[1], [1], [0], [0], [0, 0, 1, 0], [], []>} : vector<8x128xbf16>, vector<256x128xbf16>, vector<8x256xf32> -> vector<8x256xf32>
    %70 = vector.broadcast %63 : vector<1x256xf32> to vector<8x256xf32>
    %71 = arith.addf %69, %70 : vector<8x256xf32>
    %cst_57 = arith.constant 0.000000e+00 : f32
    %72 = vector.broadcast %cst_57 : f32 to vector<8x256xf32>
    %73 = arith.maximumf %71, %72 : vector<8x256xf32>
    %74 = arith.truncf %73 : vector<8x256xf32> to vector<8x256xbf16>
    %cst_58 = arith.constant dense<0.000000e+00> : vector<8x128xf32>
    %75 = tpu.matmul %74, %59, %cst_58 {dimension_numbers = #tpu.dot_dimension_numbers<[1], [0], [0], [1], [0, 0, 1, 1], [], []>} : vector<8x256xbf16>, vector<256x128xbf16>, vector<8x128xf32> -> vector<8x128xf32>
    %76 = vector.broadcast %61 : vector<1x128xf32> to vector<8x128xf32>
    %77 = arith.addf %75, %76 : vector<8x128xf32>
    %c0_59 = arith.constant 0 : index
    %c2_60 = arith.constant 2 : index
    %c0_61 = arith.constant 0 : index
    %78 = vector.load %arg7[%c0_59, %c2_60, %c0_61] : memref<8x8x256xf32, #tpu.memory_space<vmem>>, vector<8x1x256xf32>
    %79 = vector.shape_cast %78 : vector<8x1x256xf32> to vector<8x256xf32>
    %80 = vector.shape_cast %71 : vector<8x256xf32> to vector<8x1x256xf32>
    tpu.vector_store %arg7[%c0_59, %c2_60, %c0_61], %80 {strides = array<i32>} : memref<8x8x256xf32, #tpu.memory_space<vmem>>, vector<8x1x256xf32>,
    %c0_62 = arith.constant 0 : index
    %c2_63 = arith.constant 2 : index
    %c0_64 = arith.constant 0 : index
    %81 = vector.load %arg6[%c0_62, %c2_63, %c0_64] : memref<8x8x256xf32, #tpu.memory_space<vmem>>, vector<8x1x256xf32>
    %82 = vector.shape_cast %81 : vector<8x1x256xf32> to vector<8x256xf32>
    %83 = vector.shape_cast %73 : vector<8x256xf32> to vector<8x1x256xf32>
    tpu.vector_store %arg6[%c0_62, %c2_63, %c0_64], %83 {strides = array<i32>} : memref<8x8x256xf32, #tpu.memory_space<vmem>>, vector<8x1x256xf32>,
    %c0_65 = arith.constant 0 : index
    %c2_66 = arith.constant 2 : index
    %c0_67 = arith.constant 0 : index
    %84 = vector.load %arg5[%c0_65, %c2_66, %c0_67] : memref<8x8x128xf32, #tpu.memory_space<vmem>>, vector<8x1x128xf32>
    %85 = vector.shape_cast %84 : vector<8x1x128xf32> to vector<8x128xf32>
    %86 = vector.shape_cast %77 : vector<8x128xf32> to vector<8x1x128xf32>
    tpu.vector_store %arg5[%c0_65, %c2_66, %c0_67], %86 {strides = array<i32>} : memref<8x8x128xf32, #tpu.memory_space<vmem>>, vector<8x1x128xf32>,
    %c3 = arith.constant 3 : index
    %c0_68 = arith.constant 0 : index
    %c0_69 = arith.constant 0 : index
    %87 = vector.load %arg2[%c3, %c0_68, %c0_69] : memref<8x256x128xbf16, #tpu.memory_space<vmem>>, vector<1x256x128xbf16>
    %88 = vector.shape_cast %87 : vector<1x256x128xbf16> to vector<256x128xbf16>
    %c3_70 = arith.constant 3 : index
    %c0_71 = arith.constant 0 : index
    %c0_72 = arith.constant 0 : index
    %89 = vector.load %arg4[%c3_70, %c0_71, %c0_72] : memref<8x1x128xf32, #tpu.memory_space<vmem>>, vector<1x1x128xf32>
    %90 = vector.shape_cast %89 : vector<1x1x128xf32> to vector<1x128xf32>
    %c3_73 = arith.constant 3 : index
    %c0_74 = arith.constant 0 : index
    %c0_75 = arith.constant 0 : index
    %91 = vector.load %arg3[%c3_73, %c0_74, %c0_75] : memref<8x1x256xf32, #tpu.memory_space<vmem>>, vector<1x1x256xf32>
    %92 = vector.shape_cast %91 : vector<1x1x256xf32> to vector<1x256xf32>
    %c0_76 = arith.constant 0 : index
    %c3_77 = arith.constant 3 : index
    %c0_78 = arith.constant 0 : index
    %93 = vector.load %arg1[%c0_76, %c3_77, %c0_78] : memref<8x8x128xf32, #tpu.memory_space<vmem>>, vector<8x1x128xf32>
    %94 = vector.shape_cast %93 : vector<8x1x128xf32> to vector<8x128xf32>
    %95 = vector.broadcast %90 : vector<1x128xf32> to vector<8x128xf32>
    %96 = arith.subf %94, %95 : vector<8x128xf32>
    %97 = arith.truncf %96 : vector<8x128xf32> to vector<8x128xbf16>
    %cst_79 = arith.constant dense<0.000000e+00> : vector<8x256xf32>
    %98 = tpu.matmul %97, %88, %cst_79 {dimension_numbers = #tpu.dot_dimension_numbers<[1], [1], [0], [0], [0, 0, 1, 0], [], []>} : vector<8x128xbf16>, vector<256x128xbf16>, vector<8x256xf32> -> vector<8x256xf32>
    %99 = vector.broadcast %92 : vector<1x256xf32> to vector<8x256xf32>
    %100 = arith.addf %98, %99 : vector<8x256xf32>
    %cst_80 = arith.constant 0.000000e+00 : f32
    %101 = vector.broadcast %cst_80 : f32 to vector<8x256xf32>
    %102 = arith.maximumf %100, %101 : vector<8x256xf32>
    %103 = arith.truncf %102 : vector<8x256xf32> to vector<8x256xbf16>
    %cst_81 = arith.constant dense<0.000000e+00> : vector<8x128xf32>
    %104 = tpu.matmul %103, %88, %cst_81 {dimension_numbers = #tpu.dot_dimension_numbers<[1], [0], [0], [1], [0, 0, 1, 1], [], []>} : vector<8x256xbf16>, vector<256x128xbf16>, vector<8x128xf32> -> vector<8x128xf32>
    %105 = vector.broadcast %90 : vector<1x128xf32> to vector<8x128xf32>
    %106 = arith.addf %104, %105 : vector<8x128xf32>
    %c0_82 = arith.constant 0 : index
    %c3_83 = arith.constant 3 : index
    %c0_84 = arith.constant 0 : index
    %107 = vector.load %arg7[%c0_82, %c3_83, %c0_84] : memref<8x8x256xf32, #tpu.memory_space<vmem>>, vector<8x1x256xf32>
    %108 = vector.shape_cast %107 : vector<8x1x256xf32> to vector<8x256xf32>
    %109 = vector.shape_cast %100 : vector<8x256xf32> to vector<8x1x256xf32>
    tpu.vector_store %arg7[%c0_82, %c3_83, %c0_84], %109 {strides = array<i32>} : memref<8x8x256xf32, #tpu.memory_space<vmem>>, vector<8x1x256xf32>,
    %c0_85 = arith.constant 0 : index
    %c3_86 = arith.constant 3 : index
    %c0_87 = arith.constant 0 : index
    %110 = vector.load %arg6[%c0_85, %c3_86, %c0_87] : memref<8x8x256xf32, #tpu.memory_space<vmem>>, vector<8x1x256xf32>
    %111 = vector.shape_cast %110 : vector<8x1x256xf32> to vector<8x256xf32>
    %112 = vector.shape_cast %102 : vector<8x256xf32> to vector<8x1x256xf32>
    tpu.vector_store %arg6[%c0_85, %c3_86, %c0_87], %112 {strides = array<i32>} : memref<8x8x256xf32, #tpu.memory_space<vmem>>, vector<8x1x256xf32>,
    %c0_88 = arith.constant 0 : index
    %c3_89 = arith.constant 3 : index
    %c0_90 = arith.constant 0 : index
    %113 = vector.load %arg5[%c0_88, %c3_89, %c0_90] : memref<8x8x128xf32, #tpu.memory_space<vmem>>, vector<8x1x128xf32>
    %114 = vector.shape_cast %113 : vector<8x1x128xf32> to vector<8x128xf32>
    %115 = vector.shape_cast %106 : vector<8x128xf32> to vector<8x1x128xf32>
    tpu.vector_store %arg5[%c0_88, %c3_89, %c0_90], %115 {strides = array<i32>} : memref<8x8x128xf32, #tpu.memory_space<vmem>>, vector<8x1x128xf32>,
    %c4 = arith.constant 4 : index
    %c0_91 = arith.constant 0 : index
    %c0_92 = arith.constant 0 : index
    %116 = vector.load %arg2[%c4, %c0_91, %c0_92] : memref<8x256x128xbf16, #tpu.memory_space<vmem>>, vector<1x256x128xbf16>
    %117 = vector.shape_cast %116 : vector<1x256x128xbf16> to vector<256x128xbf16>
    %c4_93 = arith.constant 4 : index
    %c0_94 = arith.constant 0 : index
    %c0_95 = arith.constant 0 : index
    %118 = vector.load %arg4[%c4_93, %c0_94, %c0_95] : memref<8x1x128xf32, #tpu.memory_space<vmem>>, vector<1x1x128xf32>
    %119 = vector.shape_cast %118 : vector<1x1x128xf32> to vector<1x128xf32>
    %c4_96 = arith.constant 4 : index
    %c0_97 = arith.constant 0 : index
    %c0_98 = arith.constant 0 : index
    %120 = vector.load %arg3[%c4_96, %c0_97, %c0_98] : memref<8x1x256xf32, #tpu.memory_space<vmem>>, vector<1x1x256xf32>
    %121 = vector.shape_cast %120 : vector<1x1x256xf32> to vector<1x256xf32>
    %c0_99 = arith.constant 0 : index
    %c4_100 = arith.constant 4 : index
    %c0_101 = arith.constant 0 : index
    %122 = vector.load %arg1[%c0_99, %c4_100, %c0_101] : memref<8x8x128xf32, #tpu.memory_space<vmem>>, vector<8x1x128xf32>
    %123 = vector.shape_cast %122 : vector<8x1x128xf32> to vector<8x128xf32>
    %124 = vector.broadcast %119 : vector<1x128xf32> to vector<8x128xf32>
    %125 = arith.subf %123, %124 : vector<8x128xf32>
    %126 = arith.truncf %125 : vector<8x128xf32> to vector<8x128xbf16>
    %cst_102 = arith.constant dense<0.000000e+00> : vector<8x256xf32>
    %127 = tpu.matmul %126, %117, %cst_102 {dimension_numbers = #tpu.dot_dimension_numbers<[1], [1], [0], [0], [0, 0, 1, 0], [], []>} : vector<8x128xbf16>, vector<256x128xbf16>, vector<8x256xf32> -> vector<8x256xf32>
    %128 = vector.broadcast %121 : vector<1x256xf32> to vector<8x256xf32>
    %129 = arith.addf %127, %128 : vector<8x256xf32>
    %cst_103 = arith.constant 0.000000e+00 : f32
    %130 = vector.broadcast %cst_103 : f32 to vector<8x256xf32>
    %131 = arith.maximumf %129, %130 : vector<8x256xf32>
    %132 = arith.truncf %131 : vector<8x256xf32> to vector<8x256xbf16>
    %cst_104 = arith.constant dense<0.000000e+00> : vector<8x128xf32>
    %133 = tpu.matmul %132, %117, %cst_104 {dimension_numbers = #tpu.dot_dimension_numbers<[1], [0], [0], [1], [0, 0, 1, 1], [], []>} : vector<8x256xbf16>, vector<256x128xbf16>, vector<8x128xf32> -> vector<8x128xf32>
    %134 = vector.broadcast %119 : vector<1x128xf32> to vector<8x128xf32>
    %135 = arith.addf %133, %134 : vector<8x128xf32>
    %c0_105 = arith.constant 0 : index
    %c4_106 = arith.constant 4 : index
    %c0_107 = arith.constant 0 : index
    %136 = vector.load %arg7[%c0_105, %c4_106, %c0_107] : memref<8x8x256xf32, #tpu.memory_space<vmem>>, vector<8x1x256xf32>
    %137 = vector.shape_cast %136 : vector<8x1x256xf32> to vector<8x256xf32>
    %138 = vector.shape_cast %129 : vector<8x256xf32> to vector<8x1x256xf32>
    tpu.vector_store %arg7[%c0_105, %c4_106, %c0_107], %138 {strides = array<i32>} : memref<8x8x256xf32, #tpu.memory_space<vmem>>, vector<8x1x256xf32>,
    %c0_108 = arith.constant 0 : index
    %c4_109 = arith.constant 4 : index
    %c0_110 = arith.constant 0 : index
    %139 = vector.load %arg6[%c0_108, %c4_109, %c0_110] : memref<8x8x256xf32, #tpu.memory_space<vmem>>, vector<8x1x256xf32>
    %140 = vector.shape_cast %139 : vector<8x1x256xf32> to vector<8x256xf32>
    %141 = vector.shape_cast %131 : vector<8x256xf32> to vector<8x1x256xf32>
    tpu.vector_store %arg6[%c0_108, %c4_109, %c0_110], %141 {strides = array<i32>} : memref<8x8x256xf32, #tpu.memory_space<vmem>>, vector<8x1x256xf32>,
    %c0_111 = arith.constant 0 : index
    %c4_112 = arith.constant 4 : index
    %c0_113 = arith.constant 0 : index
    %142 = vector.load %arg5[%c0_111, %c4_112, %c0_113] : memref<8x8x128xf32, #tpu.memory_space<vmem>>, vector<8x1x128xf32>
    %143 = vector.shape_cast %142 : vector<8x1x128xf32> to vector<8x128xf32>
    %144 = vector.shape_cast %135 : vector<8x128xf32> to vector<8x1x128xf32>
    tpu.vector_store %arg5[%c0_111, %c4_112, %c0_113], %144 {strides = array<i32>} : memref<8x8x128xf32, #tpu.memory_space<vmem>>, vector<8x1x128xf32>,
    %c5 = arith.constant 5 : index
    %c0_114 = arith.constant 0 : index
    %c0_115 = arith.constant 0 : index
    %145 = vector.load %arg2[%c5, %c0_114, %c0_115] : memref<8x256x128xbf16, #tpu.memory_space<vmem>>, vector<1x256x128xbf16>
    %146 = vector.shape_cast %145 : vector<1x256x128xbf16> to vector<256x128xbf16>
    %c5_116 = arith.constant 5 : index
    %c0_117 = arith.constant 0 : index
    %c0_118 = arith.constant 0 : index
    %147 = vector.load %arg4[%c5_116, %c0_117, %c0_118] : memref<8x1x128xf32, #tpu.memory_space<vmem>>, vector<1x1x128xf32>
    %148 = vector.shape_cast %147 : vector<1x1x128xf32> to vector<1x128xf32>
    %c5_119 = arith.constant 5 : index
    %c0_120 = arith.constant 0 : index
    %c0_121 = arith.constant 0 : index
    %149 = vector.load %arg3[%c5_119, %c0_120, %c0_121] : memref<8x1x256xf32, #tpu.memory_space<vmem>>, vector<1x1x256xf32>
    %150 = vector.shape_cast %149 : vector<1x1x256xf32> to vector<1x256xf32>
    %c0_122 = arith.constant 0 : index
    %c5_123 = arith.constant 5 : index
    %c0_124 = arith.constant 0 : index
    %151 = vector.load %arg1[%c0_122, %c5_123, %c0_124] : memref<8x8x128xf32, #tpu.memory_space<vmem>>, vector<8x1x128xf32>
    %152 = vector.shape_cast %151 : vector<8x1x128xf32> to vector<8x128xf32>
    %153 = vector.broadcast %148 : vector<1x128xf32> to vector<8x128xf32>
    %154 = arith.subf %152, %153 : vector<8x128xf32>
    %155 = arith.truncf %154 : vector<8x128xf32> to vector<8x128xbf16>
    %cst_125 = arith.constant dense<0.000000e+00> : vector<8x256xf32>
    %156 = tpu.matmul %155, %146, %cst_125 {dimension_numbers = #tpu.dot_dimension_numbers<[1], [1], [0], [0], [0, 0, 1, 0], [], []>} : vector<8x128xbf16>, vector<256x128xbf16>, vector<8x256xf32> -> vector<8x256xf32>
    %157 = vector.broadcast %150 : vector<1x256xf32> to vector<8x256xf32>
    %158 = arith.addf %156, %157 : vector<8x256xf32>
    %cst_126 = arith.constant 0.000000e+00 : f32
    %159 = vector.broadcast %cst_126 : f32 to vector<8x256xf32>
    %160 = arith.maximumf %158, %159 : vector<8x256xf32>
    %161 = arith.truncf %160 : vector<8x256xf32> to vector<8x256xbf16>
    %cst_127 = arith.constant dense<0.000000e+00> : vector<8x128xf32>
    %162 = tpu.matmul %161, %146, %cst_127 {dimension_numbers = #tpu.dot_dimension_numbers<[1], [0], [0], [1], [0, 0, 1, 1], [], []>} : vector<8x256xbf16>, vector<256x128xbf16>, vector<8x128xf32> -> vector<8x128xf32>
    %163 = vector.broadcast %148 : vector<1x128xf32> to vector<8x128xf32>
    %164 = arith.addf %162, %163 : vector<8x128xf32>
    %c0_128 = arith.constant 0 : index
    %c5_129 = arith.constant 5 : index
    %c0_130 = arith.constant 0 : index
    %165 = vector.load %arg7[%c0_128, %c5_129, %c0_130] : memref<8x8x256xf32, #tpu.memory_space<vmem>>, vector<8x1x256xf32>
    %166 = vector.shape_cast %165 : vector<8x1x256xf32> to vector<8x256xf32>
    %167 = vector.shape_cast %158 : vector<8x256xf32> to vector<8x1x256xf32>
    tpu.vector_store %arg7[%c0_128, %c5_129, %c0_130], %167 {strides = array<i32>} : memref<8x8x256xf32, #tpu.memory_space<vmem>>, vector<8x1x256xf32>,
    %c0_131 = arith.constant 0 : index
    %c5_132 = arith.constant 5 : index
    %c0_133 = arith.constant 0 : index
    %168 = vector.load %arg6[%c0_131, %c5_132, %c0_133] : memref<8x8x256xf32, #tpu.memory_space<vmem>>, vector<8x1x256xf32>
    %169 = vector.shape_cast %168 : vector<8x1x256xf32> to vector<8x256xf32>
    %170 = vector.shape_cast %160 : vector<8x256xf32> to vector<8x1x256xf32>
    tpu.vector_store %arg6[%c0_131, %c5_132, %c0_133], %170 {strides = array<i32>} : memref<8x8x256xf32, #tpu.memory_space<vmem>>, vector<8x1x256xf32>,
    %c0_134 = arith.constant 0 : index
    %c5_135 = arith.constant 5 : index
    %c0_136 = arith.constant 0 : index
    %171 = vector.load %arg5[%c0_134, %c5_135, %c0_136] : memref<8x8x128xf32, #tpu.memory_space<vmem>>, vector<8x1x128xf32>
    %172 = vector.shape_cast %171 : vector<8x1x128xf32> to vector<8x128xf32>
    %173 = vector.shape_cast %164 : vector<8x128xf32> to vector<8x1x128xf32>
    tpu.vector_store %arg5[%c0_134, %c5_135, %c0_136], %173 {strides = array<i32>} : memref<8x8x128xf32, #tpu.memory_space<vmem>>, vector<8x1x128xf32>,
    %c6 = arith.constant 6 : index
    %c0_137 = arith.constant 0 : index
    %c0_138 = arith.constant 0 : index
    %174 = vector.load %arg2[%c6, %c0_137, %c0_138] : memref<8x256x128xbf16, #tpu.memory_space<vmem>>, vector<1x256x128xbf16>
    %175 = vector.shape_cast %174 : vector<1x256x128xbf16> to vector<256x128xbf16>
    %c6_139 = arith.constant 6 : index
    %c0_140 = arith.constant 0 : index
    %c0_141 = arith.constant 0 : index
    %176 = vector.load %arg4[%c6_139, %c0_140, %c0_141] : memref<8x1x128xf32, #tpu.memory_space<vmem>>, vector<1x1x128xf32>
    %177 = vector.shape_cast %176 : vector<1x1x128xf32> to vector<1x128xf32>
    %c6_142 = arith.constant 6 : index
    %c0_143 = arith.constant 0 : index
    %c0_144 = arith.constant 0 : index
    %178 = vector.load %arg3[%c6_142, %c0_143, %c0_144] : memref<8x1x256xf32, #tpu.memory_space<vmem>>, vector<1x1x256xf32>
    %179 = vector.shape_cast %178 : vector<1x1x256xf32> to vector<1x256xf32>
    %c0_145 = arith.constant 0 : index
    %c6_146 = arith.constant 6 : index
    %c0_147 = arith.constant 0 : index
    %180 = vector.load %arg1[%c0_145, %c6_146, %c0_147] : memref<8x8x128xf32, #tpu.memory_space<vmem>>, vector<8x1x128xf32>
    %181 = vector.shape_cast %180 : vector<8x1x128xf32> to vector<8x128xf32>
    %182 = vector.broadcast %177 : vector<1x128xf32> to vector<8x128xf32>
    %183 = arith.subf %181, %182 : vector<8x128xf32>
    %184 = arith.truncf %183 : vector<8x128xf32> to vector<8x128xbf16>
    %cst_148 = arith.constant dense<0.000000e+00> : vector<8x256xf32>
    %185 = tpu.matmul %184, %175, %cst_148 {dimension_numbers = #tpu.dot_dimension_numbers<[1], [1], [0], [0], [0, 0, 1, 0], [], []>} : vector<8x128xbf16>, vector<256x128xbf16>, vector<8x256xf32> -> vector<8x256xf32>
    %186 = vector.broadcast %179 : vector<1x256xf32> to vector<8x256xf32>
    %187 = arith.addf %185, %186 : vector<8x256xf32>
    %cst_149 = arith.constant 0.000000e+00 : f32
    %188 = vector.broadcast %cst_149 : f32 to vector<8x256xf32>
    %189 = arith.maximumf %187, %188 : vector<8x256xf32>
    %190 = arith.truncf %189 : vector<8x256xf32> to vector<8x256xbf16>
    %cst_150 = arith.constant dense<0.000000e+00> : vector<8x128xf32>
    %191 = tpu.matmul %190, %175, %cst_150 {dimension_numbers = #tpu.dot_dimension_numbers<[1], [0], [0], [1], [0, 0, 1, 1], [], []>} : vector<8x256xbf16>, vector<256x128xbf16>, vector<8x128xf32> -> vector<8x128xf32>
    %192 = vector.broadcast %177 : vector<1x128xf32> to vector<8x128xf32>
    %193 = arith.addf %191, %192 : vector<8x128xf32>
    %c0_151 = arith.constant 0 : index
    %c6_152 = arith.constant 6 : index
    %c0_153 = arith.constant 0 : index
    %194 = vector.load %arg7[%c0_151, %c6_152, %c0_153] : memref<8x8x256xf32, #tpu.memory_space<vmem>>, vector<8x1x256xf32>
    %195 = vector.shape_cast %194 : vector<8x1x256xf32> to vector<8x256xf32>
    %196 = vector.shape_cast %187 : vector<8x256xf32> to vector<8x1x256xf32>
    tpu.vector_store %arg7[%c0_151, %c6_152, %c0_153], %196 {strides = array<i32>} : memref<8x8x256xf32, #tpu.memory_space<vmem>>, vector<8x1x256xf32>,
    %c0_154 = arith.constant 0 : index
    %c6_155 = arith.constant 6 : index
    %c0_156 = arith.constant 0 : index
    %197 = vector.load %arg6[%c0_154, %c6_155, %c0_156] : memref<8x8x256xf32, #tpu.memory_space<vmem>>, vector<8x1x256xf32>
    %198 = vector.shape_cast %197 : vector<8x1x256xf32> to vector<8x256xf32>
    %199 = vector.shape_cast %189 : vector<8x256xf32> to vector<8x1x256xf32>
    tpu.vector_store %arg6[%c0_154, %c6_155, %c0_156], %199 {strides = array<i32>} : memref<8x8x256xf32, #tpu.memory_space<vmem>>, vector<8x1x256xf32>,
    %c0_157 = arith.constant 0 : index
    %c6_158 = arith.constant 6 : index
    %c0_159 = arith.constant 0 : index
    %200 = vector.load %arg5[%c0_157, %c6_158, %c0_159] : memref<8x8x128xf32, #tpu.memory_space<vmem>>, vector<8x1x128xf32>
    %201 = vector.shape_cast %200 : vector<8x1x128xf32> to vector<8x128xf32>
    %202 = vector.shape_cast %193 : vector<8x128xf32> to vector<8x1x128xf32>
    tpu.vector_store %arg5[%c0_157, %c6_158, %c0_159], %202 {strides = array<i32>} : memref<8x8x128xf32, #tpu.memory_space<vmem>>, vector<8x1x128xf32>,
    %c7 = arith.constant 7 : index
    %c0_160 = arith.constant 0 : index
    %c0_161 = arith.constant 0 : index
    %203 = vector.load %arg2[%c7, %c0_160, %c0_161] : memref<8x256x128xbf16, #tpu.memory_space<vmem>>, vector<1x256x128xbf16>
    %204 = vector.shape_cast %203 : vector<1x256x128xbf16> to vector<256x128xbf16>
    %c7_162 = arith.constant 7 : index
    %c0_163 = arith.constant 0 : index
    %c0_164 = arith.constant 0 : index
    %205 = vector.load %arg4[%c7_162, %c0_163, %c0_164] : memref<8x1x128xf32, #tpu.memory_space<vmem>>, vector<1x1x128xf32>
    %206 = vector.shape_cast %205 : vector<1x1x128xf32> to vector<1x128xf32>
    %c7_165 = arith.constant 7 : index
    %c0_166 = arith.constant 0 : index
    %c0_167 = arith.constant 0 : index
    %207 = vector.load %arg3[%c7_165, %c0_166, %c0_167] : memref<8x1x256xf32, #tpu.memory_space<vmem>>, vector<1x1x256xf32>
    %208 = vector.shape_cast %207 : vector<1x1x256xf32> to vector<1x256xf32>
    %c0_168 = arith.constant 0 : index
    %c7_169 = arith.constant 7 : index
    %c0_170 = arith.constant 0 : index
    %209 = vector.load %arg1[%c0_168, %c7_169, %c0_170] : memref<8x8x128xf32, #tpu.memory_space<vmem>>, vector<8x1x128xf32>
    %210 = vector.shape_cast %209 : vector<8x1x128xf32> to vector<8x128xf32>
    %211 = vector.broadcast %206 : vector<1x128xf32> to vector<8x128xf32>
    %212 = arith.subf %210, %211 : vector<8x128xf32>
    %213 = arith.truncf %212 : vector<8x128xf32> to vector<8x128xbf16>
    %cst_171 = arith.constant dense<0.000000e+00> : vector<8x256xf32>
    %214 = tpu.matmul %213, %204, %cst_171 {dimension_numbers = #tpu.dot_dimension_numbers<[1], [1], [0], [0], [0, 0, 1, 0], [], []>} : vector<8x128xbf16>, vector<256x128xbf16>, vector<8x256xf32> -> vector<8x256xf32>
    %215 = vector.broadcast %208 : vector<1x256xf32> to vector<8x256xf32>
    %216 = arith.addf %214, %215 : vector<8x256xf32>
    %cst_172 = arith.constant 0.000000e+00 : f32
    %217 = vector.broadcast %cst_172 : f32 to vector<8x256xf32>
    %218 = arith.maximumf %216, %217 : vector<8x256xf32>
    %219 = arith.truncf %218 : vector<8x256xf32> to vector<8x256xbf16>
    %cst_173 = arith.constant dense<0.000000e+00> : vector<8x128xf32>
    %220 = tpu.matmul %219, %204, %cst_173 {dimension_numbers = #tpu.dot_dimension_numbers<[1], [0], [0], [1], [0, 0, 1, 1], [], []>} : vector<8x256xbf16>, vector<256x128xbf16>, vector<8x128xf32> -> vector<8x128xf32>
    %221 = vector.broadcast %206 : vector<1x128xf32> to vector<8x128xf32>
    %222 = arith.addf %220, %221 : vector<8x128xf32>
    %c0_174 = arith.constant 0 : index
    %c7_175 = arith.constant 7 : index
    %c0_176 = arith.constant 0 : index
    %223 = vector.load %arg7[%c0_174, %c7_175, %c0_176] : memref<8x8x256xf32, #tpu.memory_space<vmem>>, vector<8x1x256xf32>
    %224 = vector.shape_cast %223 : vector<8x1x256xf32> to vector<8x256xf32>
    %225 = vector.shape_cast %216 : vector<8x256xf32> to vector<8x1x256xf32>
    tpu.vector_store %arg7[%c0_174, %c7_175, %c0_176], %225 {strides = array<i32>} : memref<8x8x256xf32, #tpu.memory_space<vmem>>, vector<8x1x256xf32>,
    %c0_177 = arith.constant 0 : index
    %c7_178 = arith.constant 7 : index
    %c0_179 = arith.constant 0 : index
    %226 = vector.load %arg6[%c0_177, %c7_178, %c0_179] : memref<8x8x256xf32, #tpu.memory_space<vmem>>, vector<8x1x256xf32>
    %227 = vector.shape_cast %226 : vector<8x1x256xf32> to vector<8x256xf32>
    %228 = vector.shape_cast %218 : vector<8x256xf32> to vector<8x1x256xf32>
    tpu.vector_store %arg6[%c0_177, %c7_178, %c0_179], %228 {strides = array<i32>} : memref<8x8x256xf32, #tpu.memory_space<vmem>>, vector<8x1x256xf32>,
    %c0_180 = arith.constant 0 : index
    %c7_181 = arith.constant 7 : index
    %c0_182 = arith.constant 0 : index
    %229 = vector.load %arg5[%c0_180, %c7_181, %c0_182] : memref<8x8x128xf32, #tpu.memory_space<vmem>>, vector<8x1x128xf32>
    %230 = vector.shape_cast %229 : vector<8x1x128xf32> to vector<8x128xf32>
    %231 = vector.shape_cast %222 : vector<8x128xf32> to vector<8x1x128xf32>
    tpu.vector_store %arg5[%c0_180, %c7_181, %c0_182], %231 {strides = array<i32>} : memref<8x8x128xf32, #tpu.memory_space<vmem>>, vector<8x1x128xf32>,
    return
  }
  func.func @transform_0(%arg0: i32) -> (i32, i32, i32) {
    %c0_i32 = arith.constant 0 : i32
    %c0_i32_0 = arith.constant 0 : i32
    %c0_i32_1 = arith.constant 0 : i32
    return %c0_i32, %arg0, %c0_i32_0 : i32, i32, i32
  }
  func.func @transform_1(%arg0: i32) -> (i32, i32, i32) {
    %c0_i32 = arith.constant 0 : i32
    %c0_i32_0 = arith.constant 0 : i32
    %c0_i32_1 = arith.constant 0 : i32
    return %arg0, %c0_i32, %c0_i32_0 : i32, i32, i32
  }
  func.func @transform_2(%arg0: i32) -> (i32, i32, i32) {
    %c0_i32 = arith.constant 0 : i32
    %c0_i32_0 = arith.constant 0 : i32
    %c0_i32_1 = arith.constant 0 : i32
    return %arg0, %c0_i32, %c0_i32_0 : i32, i32, i32
  }
  func.func @transform_3(%arg0: i32) -> (i32, i32, i32) {
    %c0_i32 = arith.constant 0 : i32
    %c0_i32_0 = arith.constant 0 : i32
    %c0_i32_1 = arith.constant 0 : i32
    return %arg0, %c0_i32, %c0_i32_0 : i32, i32, i32
  }
  func.func @transform_4(%arg0: i32) -> (i32, i32, i32) {
    %c0_i32 = arith.constant 0 : i32
    %c0_i32_0 = arith.constant 0 : i32
    %c0_i32_1 = arith.constant 0 : i32
    return %c0_i32, %arg0, %c0_i32_0 : i32, i32, i32
  }
  func.func @transform_5(%arg0: i32) -> (i32, i32, i32) {
    %c0_i32 = arith.constant 0 : i32
    %c0_i32_0 = arith.constant 0 : i32
    %c0_i32_1 = arith.constant 0 : i32
    return %c0_i32, %arg0, %c0_i32_0 : i32, i32, i32
  }
  func.func @transform_6(%arg0: i32) -> (i32, i32, i32) {
    %c0_i32 = arith.constant 0 : i32
    %c0_i32_0 = arith.constant 0 : i32
    %c0_i32_1 = arith.constant 0 : i32
    return %c0_i32, %arg0, %c0_i32_0 : i32, i32, i32
  }
}

</mosaic_0001>

<llo_original>
// kernel: tpu_custom_call.1
$region0: #{tpu_custom_call.1}
  #allocation0 [shape = 'u32[]', space=smem, size = 0x4, offset = 0x4, fixed_abs, tag = 'smem constant byte address 0x4 - core index']
  #allocation1 [shape = 'u32[72,128]{1,0:T(1,128)}', space=vmem, size = 0x9000, scoped, tag = 'internal scratch']
  %s0 = inlined_call_operand.hbm [shape: f32[8,16,128], index: 0, kind: input, shape index: {}]
  %s1 = inlined_call_operand.hbm [shape: bf16[16,256,128], index: 1, kind: input, shape index: {}]
  %s2 = inlined_call_operand.hbm [shape: f32[16,1,256], index: 2, kind: input, shape index: {}]
  %s3 = inlined_call_operand.hbm [shape: f32[16,1,128], index: 3, kind: input, shape index: {}]
  %s4 = inlined_call_operand.hbm [shape: f32[8,16,128], index: 4, kind: output, shape index: {0}]
  %s5 = inlined_call_operand.hbm [shape: f32[8,16,256], index: 5, kind: output, shape index: {1}]
  %s6 = inlined_call_operand.hbm [shape: f32[8,16,256], index: 6, kind: output, shape index: {2}]
  %7 = xla_tuple %s4, %s5, %s6
  %s8 = sld [smem:[#allocation0]]
  $region81: #{tpu_custom_call.1} parent=0
    _
  %s10 = ssub.s32 1, %s8
  %s11 = scalar_select 0, %s10, %s8
  $region1: #{tpu_custom_call.1} parent=0
    #allocation2 [shape = 'u8[65536]{0}', space=vmem, size = 0x10000, scoped, tag = 'input window, operand 0']
    #allocation3 [shape = 's32[2]{0}', space=sflag, size = 0x8, scoped, tag = 'scoped memory for tpu_custom_call.1']
    #allocation4 [shape = 's32[2]{0}', space=sflag, size = 0x8, scoped, tag = 'scoped memory for tpu_custom_call.1']
    #allocation5 [shape = 'u8[1048576]{0}', space=vmem, size = 0x100000, scoped, tag = 'input window, operand 1']
    #allocation6 [shape = 's32[2]{0}', space=sflag, size = 0x8, scoped, tag = 'scoped memory for tpu_custom_call.1']
    #allocation7 [shape = 'u8[16384]{0}', space=vmem, size = 0x4000, scoped, tag = 'input window, operand 2']
    #allocation8 [shape = 'u8[8192]{0}', space=vmem, size = 0x2000, scoped, tag = 'input window, operand 3']
    #allocation9 [shape = 's32[2]{0}', space=sflag, size = 0x8, scoped, tag = 'scoped memory for tpu_custom_call.1']
    #allocation10 [shape = 'u8[65536]{0}', space=vmem, size = 0x10000, scoped, tag = 'output window, operand 0']
    #allocation11 [shape = 'u8[131072]{0}', space=vmem, size = 0x20000, scoped, tag = 'output window, operand 1']
    #allocation12 [shape = 's32[2]{0}', space=sflag, size = 0x8, scoped, tag = 'scoped memory for tpu_custom_call.1']
    #allocation13 [shape = 'u8[131072]{0}', space=vmem, size = 0x20000, scoped, tag = 'output window, operand 2']
    %12 = vsyncpa [#allocation3], 0
    %s13 = scalar_lea.sflag [#allocation3], 1
    %14 = vsyncpa %s13, 0
    %15 = vsyncpa [#allocation6], 0
    %s16 = scalar_lea.sflag [#allocation6], 1
    %17 = vsyncpa %s16, 0
    %18 = vsyncpa [#allocation9], 0
    %s19 = scalar_lea.sflag [#allocation9], 1
    %20 = vsyncpa %s19, 0
    %21 = vsyncpa [#allocation4], 0
    %s22 = scalar_lea.sflag [#allocation4], 1
    %23 = vsyncpa %s22, 0
    %24 = vsyncpa [#allocation12], 0
    %s25 = scalar_lea.sflag [#allocation12], 1
    %26 = vsyncpa %s25, 0
    loop: start=0, step=1, limit=4
    $region2: #{tpu_custom_call.1} parent=1 // loop_pre_header
      _
    $region3: #{tpu_custom_call.1} parent=1 // loop_header
      %s28 = sphi 0, %s32
      %p29 = scmp.ge.s32.totalorder %s28, 4
      %s38 = sphi 0, %s40
      %s41 = sphi 0, %s38
      %s42 = sphi 0, %s41
      %s58 = sphi 0, %s42
      %s64 = sphi 0, %s66
      %s67 = sphi 0, %s64
      %s68 = sphi 0, %s67
      %s84 = sphi 0, %s68
      %s90 = sphi 0, %s92
      %s93 = sphi 0, %s90
      %s94 = sphi 0, %s93
      %s110 = sphi 0, %s94
      %s116 = sphi 0, %s118
      %s119 = sphi 0, %s116
      %s120 = sphi 0, %s119
      %s136 = sphi 0, %s120
      %s142 = sphi 0, %s144
      %s145 = sphi 0, %s142
      %s146 = sphi 0, %s145
      %s162 = sphi 0, %s146
      %s168 = sphi 0, %s170
      %s171 = sphi 0, %s168
      %s172 = sphi 0, %s171
      %s188 = sphi 0, %s172
      %s194 = sphi 0, %s196
      %s197 = sphi 0, %s194
      %s198 = sphi 0, %s197
      %s214 = sphi 0, %s198
    $region4: #{tpu_custom_call.1} parent=1 // loop_header_branch
      %31 = sbr.rel (%p29) target = $region8
    $region5: #{tpu_custom_call.1} parent=1 // loop_body
      %s33 = ssub.s32 %s28, 1
      %s34 = ssub.s32 %s28, 2
      %s35 = sadd.s32 %s28, 1
      %s36 = ssub.s32 %s28, %s35
      %p37 = scmp.eq.s32.totalorder %s36, 0
      %s39 = sadd.s32 %s38, 1
      %s40 = scalar_select %p37, %s38, %s39
      %p43 = pneg %p37
      %p44 = scmp.eq.s32.totalorder %s28, 1
      %p45 = por %p43, %p44
      %p46 = scmp.ne.s32.totalorder %s38, %s41
      %p47 = scmp.eq.s32.totalorder %s28, 0
      %p48 = por %p46, %p47
      %p49 = scmp.ne.s32.totalorder %s38, %s41
      %p50 = scmp.eq.s32.totalorder %s33, 1
      %p51 = por %p49, %p50
      %p52 = scmp.ne.s32.totalorder %s41, %s42
      %p53 = scmp.eq.s32.totalorder %s33, 0
      %p54 = por %p52, %p53
      %p55 = scmp.ne.s32.totalorder %s41, %s42
      %p56 = scmp.eq.s32.totalorder %s34, 1
      %p57 = por %p55, %p56
      %p59 = scmp.ne.s32.totalorder %s42, %s58
      %p60 = scmp.eq.s32.totalorder %s34, 0
      %p61 = por %p59, %p60
      %s62 = ssub.s32 %s28, %s35
      %p63 = scmp.eq.s32.totalorder %s62, 0
      %s65 = sadd.s32 %s64, 1
      %s66 = scalar_select %p63, %s64, %s65
      %p69 = pneg %p63
      %p70 = scmp.eq.s32.totalorder %s28, 1
      %p71 = por %p69, %p70
      %p72 = scmp.ne.s32.totalorder %s64, %s67
      %p73 = scmp.eq.s32.totalorder %s28, 0
      %p74 = por %p72, %p73
      %p75 = scmp.ne.s32.totalorder %s64, %s67
      %p76 = scmp.eq.s32.totalorder %s33, 1
      %p77 = por %p75, %p76
      %p78 = scmp.ne.s32.totalorder %s67, %s68
      %p79 = scmp.eq.s32.totalorder %s33, 0
      %p80 = por %p78, %p79
      %p81 = scmp.ne.s32.totalorder %s67, %s68
      %p82 = scmp.eq.s32.totalorder %s34, 1
      %p83 = por %p81, %p82
      %p85 = scmp.ne.s32.totalorder %s68, %s84
      %p86 = scmp.eq.s32.totalorder %s34, 0
      %p87 = por %p85, %p86
      %s88 = ssub.s32 %s28, %s35
      %p89 = scmp.eq.s32.totalorder %s88, 0
      %s91 = sadd.s32 %s90, 1
      %s92 = scalar_select %p89, %s90, %s91
      %p95 = pneg %p89
      %p96 = scmp.eq.s32.totalorder %s28, 1
      %p97 = por %p95, %p96
      %p98 = scmp.ne.s32.totalorder %s90, %s93
      %p99 = scmp.eq.s32.totalorder %s28, 0
      %p100 = por %p98, %p99
      %p101 = scmp.ne.s32.totalorder %s90, %s93
      %p102 = scmp.eq.s32.totalorder %s33, 1
      %p103 = por %p101, %p102
      %p104 = scmp.ne.s32.totalorder %s93, %s94
      %p105 = scmp.eq.s32.totalorder %s33, 0
      %p106 = por %p104, %p105
      %p107 = scmp.ne.s32.totalorder %s93, %s94
      %p108 = scmp.eq.s32.totalorder %s34, 1
      %p109 = por %p107, %p108
      %p111 = scmp.ne.s32.totalorder %s94, %s110
      %p112 = scmp.eq.s32.totalorder %s34, 0
      %p113 = por %p111, %p112
      %s114 = ssub.s32 %s28, %s35
      %p115 = scmp.eq.s32.totalorder %s114, 0
      %s117 = sadd.s32 %s116, 1
      %s118 = scalar_select %p115, %s116, %s117
      %p121 = pneg %p115
      %p122 = scmp.eq.s32.totalorder %s28, 1
      %p123 = por %p121, %p122
      %p124 = scmp.ne.s32.totalorder %s116, %s119
      %p125 = scmp.eq.s32.totalorder %s28, 0
      %p126 = por %p124, %p125
      %p127 = scmp.ne.s32.totalorder %s116, %s119
      %p128 = scmp.eq.s32.totalorder %s33, 1
      %p129 = por %p127, %p128
      %p130 = scmp.ne.s32.totalorder %s119, %s120
      %p131 = scmp.eq.s32.totalorder %s33, 0
      %p132 = por %p130, %p131
      %p133 = scmp.ne.s32.totalorder %s119, %s120
      %p134 = scmp.eq.s32.totalorder %s34, 1
      %p135 = por %p133, %p134
      %p137 = scmp.ne.s32.totalorder %s120, %s136
      %p138 = scmp.eq.s32.totalorder %s34, 0
      %p139 = por %p137, %p138
      %s140 = ssub.s32 %s28, %s35
      %p141 = scmp.eq.s32.totalorder %s140, 0
      %s143 = sadd.s32 %s142, 1
      %s144 = scalar_select %p141, %s142, %s143
      %p147 = pneg %p141
      %p148 = scmp.eq.s32.totalorder %s28, 1
      %p149 = por %p147, %p148
      %p150 = scmp.ne.s32.totalorder %s142, %s145
      %p151 = scmp.eq.s32.totalorder %s28, 0
      %p152 = por %p150, %p151
      %p153 = scmp.ne.s32.totalorder %s142, %s145
      %p154 = scmp.eq.s32.totalorder %s33, 1
      %p155 = por %p153, %p154
      %p156 = scmp.ne.s32.totalorder %s145, %s146
      %p157 = scmp.eq.s32.totalorder %s33, 0
      %p158 = por %p156, %p157
      %p159 = scmp.ne.s32.totalorder %s145, %s146
      %p160 = scmp.eq.s32.totalorder %s34, 1
      %p161 = por %p159, %p160
      %p163 = scmp.ne.s32.totalorder %s146, %s162
      %p164 = scmp.eq.s32.totalorder %s34, 0
      %p165 = por %p163, %p164
      %s166 = ssub.s32 %s28, %s35
      %p167 = scmp.eq.s32.totalorder %s166, 0
      %s169 = sadd.s32 %s168, 1
      %s170 = scalar_select %p167, %s168, %s169
      %p173 = pneg %p167
      %p174 = scmp.eq.s32.totalorder %s28, 1
      %p175 = por %p173, %p174
      %p176 = scmp.ne.s32.totalorder %s168, %s171
      %p177 = scmp.eq.s32.totalorder %s28, 0
      %p178 = por %p176, %p177
      %p179 = scmp.ne.s32.totalorder %s168, %s171
      %p180 = scmp.eq.s32.totalorder %s33, 1
      %p181 = por %p179, %p180
      %p182 = scmp.ne.s32.totalorder %s171, %s172
      %p183 = scmp.eq.s32.totalorder %s33, 0
      %p184 = por %p182, %p183
      %p185 = scmp.ne.s32.totalorder %s171, %s172
      %p186 = scmp.eq.s32.totalorder %s34, 1
      %p187 = por %p185, %p186
      %p189 = scmp.ne.s32.totalorder %s172, %s188
      %p190 = scmp.eq.s32.totalorder %s34, 0
      %p191 = por %p189, %p190
      %s192 = ssub.s32 %s28, %s35
      %p193 = scmp.eq.s32.totalorder %s192, 0
      %s195 = sadd.s32 %s194, 1
      %s196 = scalar_select %p193, %s194, %s195
      %p199 = pneg %p193
      %p200 = scmp.eq.s32.totalorder %s28, 1
      %p201 = por %p199, %p200
      %p202 = scmp.ne.s32.totalorder %s194, %s197
      %p203 = scmp.eq.s32.totalorder %s28, 0
      %p204 = por %p202, %p203
      %p205 = scmp.ne.s32.totalorder %s194, %s197
      %p206 = scmp.eq.s32.totalorder %s33, 1
      %p207 = por %p205, %p206
      %p208 = scmp.ne.s32.totalorder %s197, %s198
      %p209 = scmp.eq.s32.totalorder %s33, 0
      %p210 = por %p208, %p209
      %p211 = scmp.ne.s32.totalorder %s197, %s198
      %p212 = scmp.eq.s32.totalorder %s34, 1
      %p213 = por %p211, %p212
      %p215 = scmp.ne.s32.totalorder %s198, %s214
      %p216 = scmp.eq.s32.totalorder %s34, 0
      %p217 = por %p215, %p216
      %p218 = scmp.le.s32.totalorder 1, %s28
      %p219 = scmp.lt.s32.totalorder %s28, 3
      %p220 = pnand %p218, %p219
      %p221 = pneg %p220
      // Predicated region
      $region9: #{tpu_custom_call.1} parent=5 // pred_check
        _
      $region10: #{tpu_custom_call.1} parent=5 // pred_check_branch
        %223 = sbr.rel (%p220) target = $region12
      $region11: #{tpu_custom_call.1} parent=5 // pred_region
        %s224 = ssub.s32 %s28, 1
      $region12: #{tpu_custom_call.1} parent=5 // pred_fallthru
        _
      %p225 = scmp.lt.s32.totalorder %s28, 2
      // Predicated region
      $region13: #{tpu_custom_call.1} parent=5 // pred_check
        %p226 = pneg %p225
      $region14: #{tpu_custom_call.1} parent=5 // pred_check_branch
        %228 = sbr.rel (%p226) target = $region16
      $region15: #{tpu_custom_call.1} parent=5 // pred_region
        // Predicated region
        $region17: #{tpu_custom_call.1} parent=15 // pred_check
          %p229 = pneg %p48
        $region18: #{tpu_custom_call.1} parent=15 // pred_check_branch
          %231 = sbr.rel (%p229) target = $region20
        $region19: #{tpu_custom_call.1} parent=15 // pred_region
          %s232 = sand.u32 %s38, 1
          %s233 = scalar_lea.sflag [#allocation3], %s232
          %s234 = sand.u32 %s38, 1
          %s235 = smul.addr %s234, 64
          %s236 = scalar_lea.vmem [#allocation2], %s235
          %238 = vsyncadd %s233, 0
          %s239 = smul.addr %s28, 8
          %s240 = scalar_lea.hbm %s0, %s239
          %s241 = sshll.u32 %s240, 4
          %s242 = int_to_ptr.hbm [resolvable:$true] %s241
          %s243 = sshll.u32 %s236, 4
          %s244 = int_to_ptr.vmem [resolvable:$true] %s243
          %249 = dma.hbm_to_vmem [thread:$0]  %s242, 1024, %s244, %s233, 256, 128, 8
        $region20: #{tpu_custom_call.1} parent=15 // pred_fallthru
          _
        // Predicated region
        $region21: #{tpu_custom_call.1} parent=15 // pred_check
          %p250 = pneg %p74
        $region22: #{tpu_custom_call.1} parent=15 // pred_check_branch
          %252 = sbr.rel (%p250) target = $region24
        $region23: #{tpu_custom_call.1} parent=15 // pred_region
          %s253 = sand.u32 %s28, 1
          %s254 = scalar_lea.sflag [#allocation6], %s253
          %s255 = sand.u32 %s64, 1
          %s256 = smul.addr %s255, 1024
          %s257 = scalar_lea.vmem [#allocation5], %s256
          %s258 = smul.u32 8, %s28
          %260 = vsyncadd %s254, 0
          %s261 = smul.addr %s258, 32
          %s262 = smul.addr %s261, 4
          %s263 = scalar_lea.hbm %s1, %s262
          %s264 = sshll.u32 %s263, 4
          %s265 = int_to_ptr.hbm [resolvable:$true] %s264
          %s266 = sshll.u32 %s257, 4
          %s267 = int_to_ptr.vmem [resolvable:$true] %s266
          %272 = dma.hbm_to_vmem [thread:$0]  %s265, 16384, %s267, %s254, 64, 64, 4
        $region24: #{tpu_custom_call.1} parent=15 // pred_fallthru
          _
        // Predicated region
        $region25: #{tpu_custom_call.1} parent=15 // pred_check
          %p273 = pneg %p100
        $region26: #{tpu_custom_call.1} parent=15 // pred_check_branch
          %275 = sbr.rel (%p273) target = $region28
        $region27: #{tpu_custom_call.1} parent=15 // pred_region
          %s276 = sand.u32 %s28, 1
          %s277 = scalar_lea.sflag [#allocation6], %s276
          %s278 = sand.u32 %s90, 1
          %s279 = smul.addr %s278, 16
          %s280 = scalar_lea.vmem [#allocation7], %s279
          %s281 = smul.u32 8, %s28
          %283 = vsyncadd %s277, 0
          %s284 = smul.addr %s281, 2
          %s285 = scalar_lea.hbm %s2, %s284
          %s286 = sshll.u32 %s285, 4
          %s287 = int_to_ptr.hbm [resolvable:$true] %s286
          %s288 = sshll.u32 %s280, 4
          %s289 = int_to_ptr.vmem [resolvable:$true] %s288
          %294 = dma.hbm_to_vmem [thread:$0]  %s287, 256, %s289, %s277, 32, 32, 2
        $region28: #{tpu_custom_call.1} parent=15 // pred_fallthru
          _
        // Predicated region
        $region29: #{tpu_custom_call.1} parent=15 // pred_check
          %p295 = pneg %p126
        $region30: #{tpu_custom_call.1} parent=15 // pred_check_branch
          %297 = sbr.rel (%p295) target = $region32
        $region31: #{tpu_custom_call.1} parent=15 // pred_region
          %s298 = sand.u32 %s116, 1
          %s299 = scalar_lea.sflag [#allocation9], %s298
          %s300 = sand.u32 %s116, 1
          %s301 = smul.addr %s300, 8
          %s302 = scalar_lea.vmem [#allocation8], %s301
          %s303 = smul.u32 8, %s28
          %305 = vsyncadd %s299, 0
          %s306 = scalar_lea.hbm %s3, %s303
          %s307 = sshll.u32 %s306, 4
          %s308 = int_to_ptr.hbm [resolvable:$true] %s307
          %s309 = sshll.u32 %s302, 4
          %s310 = int_to_ptr.vmem [resolvable:$true] %s309
          %315 = dma.hbm_to_vmem [thread:$0]  %s308, 128, %s310, %s299, 16, 16, 1
        $region32: #{tpu_custom_call.1} parent=15 // pred_fallthru
          _
      $region16: #{tpu_custom_call.1} parent=5 // pred_fallthru
        _
      %p316 = scmp.le.s32.totalorder 1, %s28
      %p317 = scmp.lt.s32.totalorder %s28, 3
      %p318 = pnand %p316, %p317
      %p319 = pneg %p318
      // Predicated region
      $region33: #{tpu_custom_call.1} parent=5 // pred_check
        _
      $region34: #{tpu_custom_call.1} parent=5 // pred_check_branch
        %321 = sbr.rel (%p318) target = $region36
      $region35: #{tpu_custom_call.1} parent=5 // pred_region
        %s322 = ssub.s32 %s28, 1
        %s323 = sand.u32 %s41, 1
        %s324 = scalar_lea.sflag [#allocation3], %s323
        %s325 = sand.u32 %s41, 1
        %s326 = smul.addr %s325, 64
        %s327 = scalar_lea.vmem [#allocation2], %s326
        // Predicated region
        $region37: #{tpu_custom_call.1} parent=35 // pred_check
          %p328 = pneg %p54
        $region38: #{tpu_custom_call.1} parent=35 // pred_check_branch
          %330 = sbr.rel (%p328) target = $region40
        $region39: #{tpu_custom_call.1} parent=35 // pred_region
          %332 = dma.done %s324, 1024
        $region40: #{tpu_custom_call.1} parent=35 // pred_fallthru
          _
        %s333 = sand.u32 %s33, 1
        %s334 = scalar_lea.sflag [#allocation6], %s333
        %s335 = sand.u32 %s67, 1
        %s336 = smul.addr %s335, 1024
        %s337 = scalar_lea.vmem [#allocation5], %s336
        // Predicated region
        $region41: #{tpu_custom_call.1} parent=35 // pred_check
          %p338 = pneg %p80
        $region42: #{tpu_custom_call.1} parent=35 // pred_check_branch
          %340 = sbr.rel (%p338) target = $region44
        $region43: #{tpu_custom_call.1} parent=35 // pred_region
          %342 = dma.done %s334, 16384
        $region44: #{tpu_custom_call.1} parent=35 // pred_fallthru
          _
        %s343 = sand.u32 %s33, 1
        %s344 = scalar_lea.sflag [#allocation6], %s343
        %s345 = sand.u32 %s93, 1
        %s346 = smul.addr %s345, 16
        %s347 = scalar_lea.vmem [#allocation7], %s346
        // Predicated region
        $region45: #{tpu_custom_call.1} parent=35 // pred_check
          %p348 = pneg %p106
        $region46: #{tpu_custom_call.1} parent=35 // pred_check_branch
          %350 = sbr.rel (%p348) target = $region48
        $region47: #{tpu_custom_call.1} parent=35 // pred_region
          %352 = dma.done %s344, 256
        $region48: #{tpu_custom_call.1} parent=35 // pred_fallthru
          _
        %s353 = sand.u32 %s119, 1
        %s354 = scalar_lea.sflag [#allocation9], %s353
        %s355 = sand.u32 %s119, 1
        %s356 = smul.addr %s355, 8
        %s357 = scalar_lea.vmem [#allocation8], %s356
        // Predicated region
        $region49: #{tpu_custom_call.1} parent=35 // pred_check
          %p358 = pneg %p132
        $region50: #{tpu_custom_call.1} parent=35 // pred_check_branch
          %360 = sbr.rel (%p358) target = $region52
        $region51: #{tpu_custom_call.1} parent=35 // pred_region
          %362 = dma.done %s354, 128
        $region52: #{tpu_custom_call.1} parent=35 // pred_fallthru
          _
        %s363 = sand.u32 %s41, 1
        %s364 = scalar_lea.sflag [#allocation3], %s363
        %s365 = sand.u32 %s41, 1
        %s366 = smul.addr %s365, 64
        %s367 = scalar_lea.vmem [#allocation2], %s366
        %p368 = pneg %p54
        %p369 = pneg %p51
        %s370 = sand.u32 %s33, 1
        %s371 = scalar_lea.sflag [#allocation6], %s370
        %s372 = sand.u32 %s67, 1
        %s373 = smul.addr %s372, 1024
        %s374 = scalar_lea.vmem [#allocation5], %s373
        %p375 = pneg %p80
        %p376 = pneg %p77
        %s377 = sand.u32 %s33, 1
        %s378 = scalar_lea.sflag [#allocation6], %s377
        %s379 = sand.u32 %s93, 1
        %s380 = smul.addr %s379, 16
        %s381 = scalar_lea.vmem [#allocation7], %s380
        %p382 = pneg %p106
        %p383 = pneg %p103
        %s384 = sand.u32 %s119, 1
        %s385 = scalar_lea.sflag [#allocation9], %s384
        %s386 = sand.u32 %s119, 1
        %s387 = smul.addr %s386, 8
        %s388 = scalar_lea.vmem [#allocation8], %s387
        %p389 = pneg %p132
        %p390 = pneg %p129
        %p391 = pneg %p158
        %p392 = pneg %p155
        %s393 = sand.u32 %s145, 1
        %s394 = scalar_lea.sflag [#allocation4], %s393
        %s395 = sand.u32 %s145, 1
        %s396 = smul.addr %s395, 64
        %s397 = scalar_lea.vmem [#allocation10], %s396
        %p398 = pneg %p184
        %p399 = pneg %p181
        %s400 = sand.u32 %s33, 1
        %s401 = scalar_lea.sflag [#allocation12], %s400
        %s402 = sand.u32 %s171, 1
        %s403 = smul.addr %s402, 128
        %s404 = scalar_lea.vmem [#allocation11], %s403
        %p405 = pneg %p210
        %p406 = pneg %p207
        %s407 = sand.u32 %s33, 1
        %s408 = scalar_lea.sflag [#allocation12], %s407
        %s409 = sand.u32 %s197, 1
        %s410 = smul.addr %s409, 128
        %s411 = scalar_lea.vmem [#allocation13], %s410
        %s412 = smul.u32 8, %s33
        %s413 = smul.u32 8, %s33
        %s414 = smul.u32 8, %s33
        %v415 = vld [vmem:[%s337] sm:$0xf]
        %v416 = vld [vmem:[%s337 + $0x4] sm:$0xf]
        %v417 = vld [vmem:[%s337 + $0x8] sm:$0xf]
        %v418 = vld [vmem:[%s337 + $0xc] sm:$0xf]
        %v419 = vld [vmem:[%s337 + $0x10] sm:$0xf]
        %v420 = vld [vmem:[%s337 + $0x14] sm:$0xf]
        %v421 = vld [vmem:[%s337 + $0x18] sm:$0xf]
        %v422 = vld [vmem:[%s337 + $0x1c] sm:$0xf]
        %v423 = vld [vmem:[%s337 + $0x20] sm:$0xf]
        %v424 = vld [vmem:[%s337 + $0x24] sm:$0xf]
        %v425 = vld [vmem:[%s337 + $0x28] sm:$0xf]
        %v426 = vld [vmem:[%s337 + $0x2c] sm:$0xf]
        %v427 = vld [vmem:[%s337 + $0x30] sm:$0xf]
        %v428 = vld [vmem:[%s337 + $0x34] sm:$0xf]
        %v429 = vld [vmem:[%s337 + $0x38] sm:$0xf]
        %v430 = vld [vmem:[%s337 + $0x3c] sm:$0xf]
        %v431 = vld [vmem:[%s337 + $0x40] sm:$0xf]
        %v432 = vld [vmem:[%s337 + $0x44] sm:$0xf]
        %v433 = vld [vmem:[%s337 + $0x48] sm:$0xf]
        %v434 = vld [vmem:[%s337 + $0x4c] sm:$0xf]
        %v435 = vld [vmem:[%s337 + $0x50] sm:$0xf]
        %v436 = vld [vmem:[%s337 + $0x54] sm:$0xf]
        %v437 = vld [vmem:[%s337 + $0x58] sm:$0xf]
        %v438 = vld [vmem:[%s337 + $0x5c] sm:$0xf]
        %v439 = vld [vmem:[%s337 + $0x60] sm:$0xf]
        %v440 = vld [vmem:[%s337 + $0x64] sm:$0xf]
        %v441 = vld [vmem:[%s337 + $0x68] sm:$0xf]
        %v442 = vld [vmem:[%s337 + $0x6c] sm:$0xf]
        %v443 = vld [vmem:[%s337 + $0x70] sm:$0xf]
        %v444 = vld [vmem:[%s337 + $0x74] sm:$0xf]
        %v445 = vld [vmem:[%s337 + $0x78] sm:$0xf]
        %v446 = vld [vmem:[%s337 + $0x7c] sm:$0xf]
        %v447 = vld [vmem:[%s357] sm:$0x1]
        %v448 = vld [vmem:[%s347] sm:$0x3]
        %v449 = vld [vmem:[%s327] sm:$0x1]
        %v450 = vld [vmem:[%s327 + $0x8] sm:$0x1]
        %v451 = vld [vmem:[%s327 + $0x10] sm:$0x1]
        %v452 = vld [vmem:[%s327 + $0x18] sm:$0x1]
        %v453 = vld [vmem:[%s327 + $0x20] sm:$0x1]
        %v454 = vld [vmem:[%s327 + $0x28] sm:$0x1]
        %v455 = vld [vmem:[%s327 + $0x30] sm:$0x1]
        %v456 = vld [vmem:[%s327 + $0x38] sm:$0x1]
        %v458 = vperm.slane %v447, 0
        %v460 = vsub.f32 %v449, %v458
        %v461 = vsub.f32 %v450, %v458
        %v462 = vsub.f32 %v451, %v458
        %v463 = vsub.f32 %v452, %v458
        %v464 = vsub.f32 %v453, %v458
        %v465 = vsub.f32 %v454, %v458
        %v466 = vsub.f32 %v455, %v458
        %v467 = vsub.f32 %v456, %v458
        %v468 = vpack.c.bf16 %v460, %v460
        %v469 = vpack.c.bf16 %v461, %v461
        %v470 = vpack.c.bf16 %v462, %v462
        %v471 = vpack.c.bf16 %v463, %v463
        %v472 = vpack.c.bf16 %v464, %v464
        %v473 = vpack.c.bf16 %v465, %v465
        %v474 = vpack.c.bf16 %v466, %v466
        %v475 = vpack.c.bf16 %v467, %v467
        %v477 = vperm.slane %v448, 0
        %v478 = vperm.slane %v448, 1
        %v489 = vunpack.c.l.b16 %v468
        %v490 = vunpack.c.l.b16 %v469
        %v491 = vunpack.c.l.b16 %v470
        %v492 = vunpack.c.l.b16 %v471
        %v493 = vunpack.c.l.b16 %v472
        %v494 = vunpack.c.l.b16 %v473
        %v495 = vunpack.c.l.b16 %v474
        %v496 = vunpack.c.l.b16 %v475
        %v497 = vrot.slane %v490, 7
        %vm498 = vcmask 1041409
        %v499 = vsel %vm498, %v497, %v489
        %v500 = vrot.slane %v491, 6
        %vm501 = vcmask 1042434
        %v502 = vsel %vm501, %v500, %v499
        %v503 = vrot.slane %v492, 5
        %vm504 = vcmask 1043459
        %v505 = vsel %vm504, %v503, %v502
        %v506 = vrot.slane %v493, 4
        %vm507 = vcmask 1044484
        %v508 = vsel %vm507, %v506, %v505
        %v509 = vrot.slane %v494, 3
        %vm510 = vcmask 1045509
        %v511 = vsel %vm510, %v509, %v508
        %v512 = vrot.slane %v495, 2
        %vm513 = vcmask 1046534
        %v514 = vsel %vm513, %v512, %v511
        %v515 = vrot.slane %v496, 1
        %vm516 = vcmask 1047559
        %v517 = vsel %vm516, %v515, %v514
        %v518 = vpack.c.b16 %v517, %v517
        %v552 = vunpack.c.l.b16 %v415
        %v553 = vunpack.c.l.b16 %v416
        %v554 = vunpack.c.l.b16 %v417
        %v555 = vunpack.c.l.b16 %v418
        %v556 = vunpack.c.l.b16 %v419
        %v557 = vunpack.c.l.b16 %v420
        %v558 = vunpack.c.l.b16 %v421
        %v559 = vunpack.c.l.b16 %v422
        %v560 = vunpack.c.l.b16 %v423
        %v561 = vunpack.c.l.b16 %v424
        %v562 = vunpack.c.l.b16 %v425
        %v563 = vunpack.c.l.b16 %v426
        %v564 = vunpack.c.l.b16 %v427
        %v565 = vunpack.c.l.b16 %v428
        %v566 = vunpack.c.l.b16 %v429
        %v567 = vunpack.c.l.b16 %v430
        %v568 = vunpack.c.l.b16 %v431
        %v569 = vunpack.c.l.b16 %v432
        %v570 = vunpack.c.l.b16 %v433
        %v571 = vunpack.c.l.b16 %v434
        %v572 = vunpack.c.l.b16 %v435
        %v573 = vunpack.c.l.b16 %v436
        %v574 = vunpack.c.l.b16 %v437
        %v575 = vunpack.c.l.b16 %v438
        %v576 = vunpack.c.l.b16 %v439
        %v577 = vunpack.c.l.b16 %v440
        %v578 = vunpack.c.l.b16 %v441
        %v579 = vunpack.c.l.b16 %v442
        %v580 = vunpack.c.l.b16 %v443
        %v581 = vunpack.c.l.b16 %v444
        %v582 = vunpack.c.l.b16 %v445
        %v583 = vunpack.c.l.b16 %v446
        %v584 = vpack.c.b16 %v553, %v552
        %v585 = vpack.c.b16 %v555, %v554
        %v586 = vpack.c.b16 %v557, %v556
        %v587 = vpack.c.b16 %v559, %v558
        %v588 = vpack.c.b16 %v561, %v560
        %v589 = vpack.c.b16 %v563, %v562
        %v590 = vpack.c.b16 %v565, %v564
        %v591 = vpack.c.b16 %v567, %v566
        %v592 = vpack.c.b16 %v569, %v568
        %v593 = vpack.c.b16 %v571, %v570
        %v594 = vpack.c.b16 %v573, %v572
        %v595 = vpack.c.b16 %v575, %v574
        %v596 = vpack.c.b16 %v577, %v576
        %v597 = vpack.c.b16 %v579, %v578
        %v598 = vpack.c.b16 %v581, %v580
        %v599 = vpack.c.b16 %v583, %v582
        %616 = vmatpush.bf16.xpose.msra.mxu0 %v591
        %617 = vmatpush.bf16.xpose.msra.mxu0 %v590
        %618 = vmatpush.bf16.xpose.msra.mxu0 %v589
        %619 = vmatpush.bf16.xpose.msra.mxu0 %v588
        %620 = vmatpush.bf16.xpose.msra.mxu0 %v587
        %621 = vmatpush.bf16.xpose.msra.mxu0 %v586
        %622 = vmatpush.bf16.xpose.msra.mxu0 %v585
        %623 = vmatpush.bf16.xpose.msra.mxu0 %v584
        %624 = vmatmul.bf16.gmra.mxu0 %v518
        %v625 = vpop.f32.mrf.mxu0
        %v626 = vadd.f32 %v477, %v625
        %v627 = vpop.f32.mrf.mxu0
        %628 = vdwg.mxu0
        %629 = vmatpush.bf16.xpose.msra.mxu0 %v599
        %630 = vmatpush.bf16.xpose.msra.mxu0 %v598
        %631 = vmatpush.bf16.xpose.msra.mxu0 %v597
        %632 = vmatpush.bf16.xpose.msra.mxu0 %v596
        %633 = vmatpush.bf16.xpose.msra.mxu0 %v595
        %634 = vmatpush.bf16.xpose.msra.mxu0 %v594
        %635 = vmatpush.bf16.xpose.msra.mxu0 %v593
        %636 = vmatpush.bf16.xpose.msra.mxu0 %v592
        %637 = vmatmul.bf16.gmra.mxu0 %v518
        %v638 = vpop.f32.mrf.mxu0
        %v639 = vadd.f32 %v478, %v638
        %v640 = vpop.f32.mrf.mxu0
        %641 = vdwg.mxu0
        %v642 = vmax.f32 %v626, 0.0
        %v643 = vmax.f32 %v639, 0.0
        %v644 = vpack.c.bf16 %v642, %v642
        %v645 = vpack.c.bf16 %v643, %v643
        %646 = vmatpush.bf16.msra.mxu0 %v591
        %647 = vmatpush.bf16.msra.mxu0 %v590
        %648 = vmatpush.bf16.msra.mxu0 %v589
        %649 = vmatpush.bf16.msra.mxu0 %v588
        %650 = vmatpush.bf16.msra.mxu0 %v587
        %651 = vmatpush.bf16.msra.mxu0 %v586
        %652 = vmatpush.bf16.msra.mxu0 %v585
        %653 = vmatpush.bf16.msra.mxu0 %v584
        %654 = vmatmul.bf16.gmra.mxu0 %v644
        %v655 = vpop.f32.mrf.mxu0
        %v656 = vadd.f32 %v458, %v655
        %v657 = vpop.f32.mrf.mxu0
        %658 = vdwg.mxu0
        %659 = vmatpush.bf16.msra.mxu0 %v599
        %660 = vmatpush.bf16.msra.mxu0 %v598
        %661 = vmatpush.bf16.msra.mxu0 %v597
        %662 = vmatpush.bf16.msra.mxu0 %v596
        %663 = vmatpush.bf16.msra.mxu0 %v595
        %664 = vmatpush.bf16.msra.mxu0 %v594
        %665 = vmatpush.bf16.msra.mxu0 %v593
        %666 = vmatpush.bf16.msra.mxu0 %v592
        %667 = vmatmul.bf16.gmra.mxu0 %v645
        %v668 = vpop.f32.mrf.mxu0
        %v669 = vadd.f32 %v656, %v668
        %v670 = vpop.f32.mrf.mxu0
        %671 = vdwg.mxu0
        %v674 = vrot.slane %v639, 7
        %vm675 = vcmask 1040384
        %v676 = vsel %vm675, %v626, %v674
        %v677 = vsel %vm498, %v626, %v674
        %v678 = vrot.slane %v677, 1
        %v679 = vsel %vm501, %v626, %v674
        %v680 = vrot.slane %v679, 2
        %v681 = vsel %vm504, %v626, %v674
        %v682 = vrot.slane %v681, 3
        %v683 = vsel %vm507, %v626, %v674
        %v684 = vrot.slane %v683, 4
        %v685 = vsel %vm510, %v626, %v674
        %v686 = vrot.slane %v685, 5
        %v687 = vsel %vm513, %v626, %v674
        %v688 = vrot.slane %v687, 6
        %vm689 = vcmask 1046528
        %v690 = vsel %vm689, %v674, %v626
        %v691 = vrot.slane %v690, 7
        %v700 = vlaneseq
        %vm701 = vcmp.ge.s32.totalorder %v700, 0
        %vm702 = vcmp.lt.s32.totalorder %v700, 256
        %vm703 = vmand %vm701, %vm702
        %704 = vst.msk [vmem:[%s411] ss:$8 sm:$0x3] %vm703, %v676
        %705 = vst.msk [vmem:[%s411] ss:$8 sm:$0x0] %vm703, %v676
        %s706 = scalar_lea.vmem %s411, 16 [#allocation13]
        %707 = vst.msk [vmem:[%s706] ss:$8 sm:$0x3] %vm703, %v678
        %708 = vst.msk [vmem:[%s706] ss:$8 sm:$0x0] %vm703, %v678
        %s709 = scalar_lea.vmem %s411, 32 [#allocation13]
        %710 = vst.msk [vmem:[%s709] ss:$8 sm:$0x3] %vm703, %v680
        %711 = vst.msk [vmem:[%s709] ss:$8 sm:$0x0] %vm703, %v680
        %s712 = scalar_lea.vmem %s411, 48 [#allocation13]
        %713 = vst.msk [vmem:[%s712] ss:$8 sm:$0x3] %vm703, %v682
        %714 = vst.msk [vmem:[%s712] ss:$8 sm:$0x0] %vm703, %v682
        %s715 = scalar_lea.vmem %s411, 64 [#allocation13]
        %716 = vst.msk [vmem:[%s715] ss:$8 sm:$0x3] %vm703, %v684
        %717 = vst.msk [vmem:[%s715] ss:$8 sm:$0x0] %vm703, %v684
        %s718 = scalar_lea.vmem %s411, 80 [#allocation13]
        %719 = vst.msk [vmem:[%s718] ss:$8 sm:$0x3] %vm703, %v686
        %720 = vst.msk [vmem:[%s718] ss:$8 sm:$0x0] %vm703, %v686
        %s721 = scalar_lea.vmem %s411, 96 [#allocation13]
        %722 = vst.msk [vmem:[%s721] ss:$8 sm:$0x3] %vm703, %v688
        %723 = vst.msk [vmem:[%s721] ss:$8 sm:$0x0] %vm703, %v688
        %s724 = scalar_lea.vmem %s411, 112 [#allocation13]
        %725 = vst.msk [vmem:[%s724] ss:$8 sm:$0x3] %vm703, %v691
        %726 = vst.msk [vmem:[%s724] ss:$8 sm:$0x0] %vm703, %v691
        %v729 = vrot.slane %v643, 7
        %v730 = vsel %vm675, %v642, %v729
        %v731 = vsel %vm498, %v642, %v729
        %v732 = vrot.slane %v731, 1
        %v733 = vsel %vm501, %v642, %v729
        %v734 = vrot.slane %v733, 2
        %v735 = vsel %vm504, %v642, %v729
        %v736 = vrot.slane %v735, 3
        %v737 = vsel %vm507, %v642, %v729
        %v738 = vrot.slane %v737, 4
        %v739 = vsel %vm510, %v642, %v729
        %v740 = vrot.slane %v739, 5
        %v741 = vsel %vm513, %v642, %v729
        %v742 = vrot.slane %v741, 6
        %v743 = vsel %vm689, %v729, %v642
        %v744 = vrot.slane %v743, 7
        %753 = vst.msk [vmem:[%s404] ss:$8 sm:$0x3] %vm703, %v730
        %754 = vst.msk [vmem:[%s404] ss:$8 sm:$0x0] %vm703, %v730
        %s755 = scalar_lea.vmem %s404, 16 [#allocation11]
        %756 = vst.msk [vmem:[%s755] ss:$8 sm:$0x3] %vm703, %v732
        %757 = vst.msk [vmem:[%s755] ss:$8 sm:$0x0] %vm703, %v732
        %s758 = scalar_lea.vmem %s404, 32 [#allocation11]
        %759 = vst.msk [vmem:[%s758] ss:$8 sm:$0x3] %vm703, %v734
        %760 = vst.msk [vmem:[%s758] ss:$8 sm:$0x0] %vm703, %v734
        %s761 = scalar_lea.vmem %s404, 48 [#allocation11]
        %762 = vst.msk [vmem:[%s761] ss:$8 sm:$0x3] %vm703, %v736
        %763 = vst.msk [vmem:[%s761] ss:$8 sm:$0x0] %vm703, %v736
        %s764 = scalar_lea.vmem %s404, 64 [#allocation11]
        %765 = vst.msk [vmem:[%s764] ss:$8 sm:$0x3] %vm703, %v738
        %766 = vst.msk [vmem:[%s764] ss:$8 sm:$0x0] %vm703, %v738
        %s767 = scalar_lea.vmem %s404, 80 [#allocation11]
        %768 = vst.msk [vmem:[%s767] ss:$8 sm:$0x3] %vm703, %v740
        %769 = vst.msk [vmem:[%s767] ss:$8 sm:$0x0] %vm703, %v740
        %s770 = scalar_lea.vmem %s404, 96 [#allocation11]
        %771 = vst.msk [vmem:[%s770] ss:$8 sm:$0x3] %vm703, %v742
        %772 = vst.msk [vmem:[%s770] ss:$8 sm:$0x0] %vm703, %v742
        %s773 = scalar_lea.vmem %s404, 112 [#allocation11]
        %774 = vst.msk [vmem:[%s773] ss:$8 sm:$0x3] %vm703, %v744
        %775 = vst.msk [vmem:[%s773] ss:$8 sm:$0x0] %vm703, %v744
        %v777 = vrot.slane %v669, 1
        %v778 = vrot.slane %v669, 2
        %v779 = vrot.slane %v669, 3
        %v780 = vrot.slane %v669, 4
        %v781 = vrot.slane %v669, 5
        %v782 = vrot.slane %v669, 6
        %v783 = vrot.slane %v669, 7
        %791 = vst [vmem:[%s397] sm:$0x1] %v669
        %792 = vst [vmem:[%s397 + $0x8] sm:$0x1] %v777
        %793 = vst [vmem:[%s397 + $0x10] sm:$0x1] %v778
        %794 = vst [vmem:[%s397 + $0x18] sm:$0x1] %v779
        %795 = vst [vmem:[%s397 + $0x20] sm:$0x1] %v780
        %796 = vst [vmem:[%s397 + $0x28] sm:$0x1] %v781
        %797 = vst [vmem:[%s397 + $0x30] sm:$0x1] %v782
        %798 = vst [vmem:[%s397 + $0x38] sm:$0x1] %v783
        %s799 = scalar_lea.vmem %s337, 128 [#allocation5]
        %v800 = vld [vmem:[%s799] sm:$0xf]
        %v801 = vld [vmem:[%s799 + $0x4] sm:$0xf]
        %v802 = vld [vmem:[%s799 + $0x8] sm:$0xf]
        %v803 = vld [vmem:[%s799 + $0xc] sm:$0xf]
        %v804 = vld [vmem:[%s799 + $0x10] sm:$0xf]
        %v805 = vld [vmem:[%s799 + $0x14] sm:$0xf]
        %v806 = vld [vmem:[%s799 + $0x18] sm:$0xf]
        %v807 = vld [vmem:[%s799 + $0x1c] sm:$0xf]
        %v808 = vld [vmem:[%s799 + $0x20] sm:$0xf]
        %v809 = vld [vmem:[%s799 + $0x24] sm:$0xf]
        %v810 = vld [vmem:[%s799 + $0x28] sm:$0xf]
        %v811 = vld [vmem:[%s799 + $0x2c] sm:$0xf]
        %v812 = vld [vmem:[%s799 + $0x30] sm:$0xf]
        %v813 = vld [vmem:[%s799 + $0x34] sm:$0xf]
        %v814 = vld [vmem:[%s799 + $0x38] sm:$0xf]
        %v815 = vld [vmem:[%s799 + $0x3c] sm:$0xf]
        %v816 = vld [vmem:[%s799 + $0x40] sm:$0xf]
        %v817 = vld [vmem:[%s799 + $0x44] sm:$0xf]
        %v818 = vld [vmem:[%s799 + $0x48] sm:$0xf]
        %v819 = vld [vmem:[%s799 + $0x4c] sm:$0xf]
        %v820 = vld [vmem:[%s799 + $0x50] sm:$0xf]
        %v821 = vld [vmem:[%s799 + $0x54] sm:$0xf]
        %v822 = vld [vmem:[%s799 + $0x58] sm:$0xf]
        %v823 = vld [vmem:[%s799 + $0x5c] sm:$0xf]
        %v824 = vld [vmem:[%s799 + $0x60] sm:$0xf]
        %v825 = vld [vmem:[%s799 + $0x64] sm:$0xf]
        %v826 = vld [vmem:[%s799 + $0x68] sm:$0xf]
        %v827 = vld [vmem:[%s799 + $0x6c] sm:$0xf]
        %v828 = vld [vmem:[%s799 + $0x70] sm:$0xf]
        %v829 = vld [vmem:[%s799 + $0x74] sm:$0xf]
        %v830 = vld [vmem:[%s799 + $0x78] sm:$0xf]
        %v831 = vld [vmem:[%s799 + $0x7c] sm:$0xf]
        %s832 = scalar_lea.vmem %s357, 1 [#allocation8]
        %v833 = vld [vmem:[%s832] sm:$0x1]
        %s834 = scalar_lea.vmem %s347, 2 [#allocation7]
        %v835 = vld [vmem:[%s834] sm:$0x3]
        %v836 = vld [vmem:[%s327 + $0x1] sm:$0x1]
        %v837 = vld [vmem:[%s327 + $0x9] sm:$0x1]
        %v838 = vld [vmem:[%s327 + $0x11] sm:$0x1]
        %v839 = vld [vmem:[%s327 + $0x19] sm:$0x1]
        %v840 = vld [vmem:[%s327 + $0x21] sm:$0x1]
        %v841 = vld [vmem:[%s327 + $0x29] sm:$0x1]
        %v842 = vld [vmem:[%s327 + $0x31] sm:$0x1]
        %v843 = vld [vmem:[%s327 + $0x39] sm:$0x1]
        %v845 = vperm.slane %v833, 0
        %v847 = vsub.f32 %v836, %v845
        %v848 = vsub.f32 %v837, %v845
        %v849 = vsub.f32 %v838, %v845
        %v850 = vsub.f32 %v839, %v845
        %v851 = vsub.f32 %v840, %v845
        %v852 = vsub.f32 %v841, %v845
        %v853 = vsub.f32 %v842, %v845
        %v854 = vsub.f32 %v843, %v845
        %v855 = vpack.c.bf16 %v847, %v847
        %v856 = vpack.c.bf16 %v848, %v848
        %v857 = vpack.c.bf16 %v849, %v849
        %v858 = vpack.c.bf16 %v850, %v850
        %v859 = vpack.c.bf16 %v851, %v851
        %v860 = vpack.c.bf16 %v852, %v852
        %v861 = vpack.c.bf16 %v853, %v853
        %v862 = vpack.c.bf16 %v854, %v854
        %v864 = vperm.slane %v835, 0
        %v865 = vperm.slane %v835, 1
        %v876 = vunpack.c.l.b16 %v855
        %v877 = vunpack.c.l.b16 %v856
        %v878 = vunpack.c.l.b16 %v857
        %v879 = vunpack.c.l.b16 %v858
        %v880 = vunpack.c.l.b16 %v859
        %v881 = vunpack.c.l.b16 %v860
        %v882 = vunpack.c.l.b16 %v861
        %v883 = vunpack.c.l.b16 %v862
        %v884 = vrot.slane %v877, 7
        %v885 = vsel %vm498, %v884, %v876
        %v886 = vrot.slane %v878, 6
        %v887 = vsel %vm501, %v886, %v885
        %v888 = vrot.slane %v879, 5
        %v889 = vsel %vm504, %v888, %v887
        %v890 = vrot.slane %v880, 4
        %v891 = vsel %vm507, %v890, %v889
        %v892 = vrot.slane %v881, 3
        %v893 = vsel %vm510, %v892, %v891
        %v894 = vrot.slane %v882, 2
        %v895 = vsel %vm513, %v894, %v893
        %v896 = vrot.slane %v883, 1
        %v897 = vsel %vm516, %v896, %v895
        %v898 = vpack.c.b16 %v897, %v897
        %v932 = vunpack.c.l.b16 %v800
        %v933 = vunpack.c.l.b16 %v801
        %v934 = vunpack.c.l.b16 %v802
        %v935 = vunpack.c.l.b16 %v803
        %v936 = vunpack.c.l.b16 %v804
        %v937 = vunpack.c.l.b16 %v805
        %v938 = vunpack.c.l.b16 %v806
        %v939 = vunpack.c.l.b16 %v807
        %v940 = vunpack.c.l.b16 %v808
        %v941 = vunpack.c.l.b16 %v809
        %v942 = vunpack.c.l.b16 %v810
        %v943 = vunpack.c.l.b16 %v811
        %v944 = vunpack.c.l.b16 %v812
        %v945 = vunpack.c.l.b16 %v813
        %v946 = vunpack.c.l.b16 %v814
        %v947 = vunpack.c.l.b16 %v815
        %v948 = vunpack.c.l.b16 %v816
        %v949 = vunpack.c.l.b16 %v817
        %v950 = vunpack.c.l.b16 %v818
        %v951 = vunpack.c.l.b16 %v819
        %v952 = vunpack.c.l.b16 %v820
        %v953 = vunpack.c.l.b16 %v821
        %v954 = vunpack.c.l.b16 %v822
        %v955 = vunpack.c.l.b16 %v823
        %v956 = vunpack.c.l.b16 %v824
        %v957 = vunpack.c.l.b16 %v825
        %v958 = vunpack.c.l.b16 %v826
        %v959 = vunpack.c.l.b16 %v827
        %v960 = vunpack.c.l.b16 %v828
        %v961 = vunpack.c.l.b16 %v829
        %v962 = vunpack.c.l.b16 %v830
        %v963 = vunpack.c.l.b16 %v831
        %v964 = vpack.c.b16 %v933, %v932
        %v965 = vpack.c.b16 %v935, %v934
        %v966 = vpack.c.b16 %v937, %v936
        %v967 = vpack.c.b16 %v939, %v938
        %v968 = vpack.c.b16 %v941, %v940
        %v969 = vpack.c.b16 %v943, %v942
        %v970 = vpack.c.b16 %v945, %v944
        %v971 = vpack.c.b16 %v947, %v946
        %v972 = vpack.c.b16 %v949, %v948
        %v973 = vpack.c.b16 %v951, %v950
        %v974 = vpack.c.b16 %v953, %v952
        %v975 = vpack.c.b16 %v955, %v954
        %v976 = vpack.c.b16 %v957, %v956
        %v977 = vpack.c.b16 %v959, %v958
        %v978 = vpack.c.b16 %v961, %v960
        %v979 = vpack.c.b16 %v963, %v962
        %996 = vmatpush.bf16.xpose.msra.mxu0 %v971
        %997 = vmatpush.bf16.xpose.msra.mxu0 %v970
        %998 = vmatpush.bf16.xpose.msra.mxu0 %v969
        %999 = vmatpush.bf16.xpose.msra.mxu0 %v968
        %1000 = vmatpush.bf16.xpose.msra.mxu0 %v967
        %1001 = vmatpush.bf16.xpose.msra.mxu0 %v966
        %1002 = vmatpush.bf16.xpose.msra.mxu0 %v965
        %1003 = vmatpush.bf16.xpose.msra.mxu0 %v964
        %1004 = vmatmul.bf16.gmra.mxu0 %v898
        %v1005 = vpop.f32.mrf.mxu0
        %v1006 = vadd.f32 %v864, %v1005
        %v1007 = vpop.f32.mrf.mxu0
        %1008 = vdwg.mxu0
        %1009 = vmatpush.bf16.xpose.msra.mxu0 %v979
        %1010 = vmatpush.bf16.xpose.msra.mxu0 %v978
        %1011 = vmatpush.bf16.xpose.msra.mxu0 %v977
        %1012 = vmatpush.bf16.xpose.msra.mxu0 %v976
        %1013 = vmatpush.bf16.xpose.msra.mxu0 %v975
        %1014 = vmatpush.bf16.xpose.msra.mxu0 %v974
        %1015 = vmatpush.bf16.xpose.msra.mxu0 %v973
        %1016 = vmatpush.bf16.xpose.msra.mxu0 %v972
        %1017 = vmatmul.bf16.gmra.mxu0 %v898
        %v1018 = vpop.f32.mrf.mxu0
        %v1019 = vadd.f32 %v865, %v1018
        %v1020 = vpop.f32.mrf.mxu0
        %1021 = vdwg.mxu0
        %v1022 = vmax.f32 %v1006, 0.0
        %v1023 = vmax.f32 %v1019, 0.0
        %v1024 = vpack.c.bf16 %v1022, %v1022
        %v1025 = vpack.c.bf16 %v1023, %v1023
        %1026 = vmatpush.bf16.msra.mxu0 %v971
        %1027 = vmatpush.bf16.msra.mxu0 %v970
        %1028 = vmatpush.bf16.msra.mxu0 %v969
        %1029 = vmatpush.bf16.msra.mxu0 %v968
        %1030 = vmatpush.bf16.msra.mxu0 %v967
        %1031 = vmatpush.bf16.msra.mxu0 %v966
        %1032 = vmatpush.bf16.msra.mxu0 %v965
        %1033 = vmatpush.bf16.msra.mxu0 %v964
        %1034 = vmatmul.bf16.gmra.mxu0 %v1024
        %v1035 = vpop.f32.mrf.mxu0
        %v1036 = vadd.f32 %v845, %v1035
        %v1037 = vpop.f32.mrf.mxu0
        %1038 = vdwg.mxu0
        %1039 = vmatpush.bf16.msra.mxu0 %v979
        %1040 = vmatpush.bf16.msra.mxu0 %v978
        %1041 = vmatpush.bf16.msra.mxu0 %v977
        %1042 = vmatpush.bf16.msra.mxu0 %v976
        %1043 = vmatpush.bf16.msra.mxu0 %v975
        %1044 = vmatpush.bf16.msra.mxu0 %v974
        %1045 = vmatpush.bf16.msra.mxu0 %v973
        %1046 = vmatpush.bf16.msra.mxu0 %v972
        %1047 = vmatmul.bf16.gmra.mxu0 %v1025
        %v1048 = vpop.f32.mrf.mxu0
        %v1049 = vadd.f32 %v1036, %v1048
        %v1050 = vpop.f32.mrf.mxu0
        %1051 = vdwg.mxu0
        %v1054 = vrot.slane %v1019, 7
        %v1055 = vsel %vm675, %v1006, %v1054
        %v1056 = vsel %vm498, %v1006, %v1054
        %v1057 = vrot.slane %v1056, 1
        %v1058 = vsel %vm501, %v1006, %v1054
        %v1059 = vrot.slane %v1058, 2
        %v1060 = vsel %vm504, %v1006, %v1054
        %v1061 = vrot.slane %v1060, 3
        %v1062 = vsel %vm507, %v1006, %v1054
        %v1063 = vrot.slane %v1062, 4
        %v1064 = vsel %vm510, %v1006, %v1054
        %v1065 = vrot.slane %v1064, 5
        %v1066 = vsel %vm513, %v1006, %v1054
        %v1067 = vrot.slane %v1066, 6
        %v1068 = vsel %vm689, %v1054, %v1006
        %v1069 = vrot.slane %v1068, 7
        %s1078 = scalar_lea.vmem %s411, 1 [#allocation13]
        %1079 = vst.msk [vmem:[%s1078] ss:$8 sm:$0x3] %vm703, %v1055
        %1080 = vst.msk [vmem:[%s1078] ss:$8 sm:$0x0] %vm703, %v1055
        %s1081 = scalar_lea.vmem %s411, 17 [#allocation13]
        %1082 = vst.msk [vmem:[%s1081] ss:$8 sm:$0x3] %vm703, %v1057
        %1083 = vst.msk [vmem:[%s1081] ss:$8 sm:$0x0] %vm703, %v1057
        %s1084 = scalar_lea.vmem %s411, 33 [#allocation13]
        %1085 = vst.msk [vmem:[%s1084] ss:$8 sm:$0x3] %vm703, %v1059
        %1086 = vst.msk [vmem:[%s1084] ss:$8 sm:$0x0] %vm703, %v1059
        %s1087 = scalar_lea.vmem %s411, 49 [#allocation13]
        %1088 = vst.msk [vmem:[%s1087] ss:$8 sm:$0x3] %vm703, %v1061
        %1089 = vst.msk [vmem:[%s1087] ss:$8 sm:$0x0] %vm703, %v1061
        %s1090 = scalar_lea.vmem %s411, 65 [#allocation13]
        %1091 = vst.msk [vmem:[%s1090] ss:$8 sm:$0x3] %vm703, %v1063
        %1092 = vst.msk [vmem:[%s1090] ss:$8 sm:$0x0] %vm703, %v1063
        %s1093 = scalar_lea.vmem %s411, 81 [#allocation13]
        %1094 = vst.msk [vmem:[%s1093] ss:$8 sm:$0x3] %vm703, %v1065
        %1095 = vst.msk [vmem:[%s1093] ss:$8 sm:$0x0] %vm703, %v1065
        %s1096 = scalar_lea.vmem %s411, 97 [#allocation13]
        %1097 = vst.msk [vmem:[%s1096] ss:$8 sm:$0x3] %vm703, %v1067
        %1098 = vst.msk [vmem:[%s1096] ss:$8 sm:$0x0] %vm703, %v1067
        %s1099 = scalar_lea.vmem %s411, 113 [#allocation13]
        %1100 = vst.msk [vmem:[%s1099] ss:$8 sm:$0x3] %vm703, %v1069
        %1101 = vst.msk [vmem:[%s1099] ss:$8 sm:$0x0] %vm703, %v1069
        %v1104 = vrot.slane %v1023, 7
        %v1105 = vsel %vm675, %v1022, %v1104
        %v1106 = vsel %vm498, %v1022, %v1104
        %v1107 = vrot.slane %v1106, 1
        %v1108 = vsel %vm501, %v1022, %v1104
        %v1109 = vrot.slane %v1108, 2
        %v1110 = vsel %vm504, %v1022, %v1104
        %v1111 = vrot.slane %v1110, 3
        %v1112 = vsel %vm507, %v1022, %v1104
        %v1113 = vrot.slane %v1112, 4
        %v1114 = vsel %vm510, %v1022, %v1104
        %v1115 = vrot.slane %v1114, 5
        %v1116 = vsel %vm513, %v1022, %v1104
        %v1117 = vrot.slane %v1116, 6
        %v1118 = vsel %vm689, %v1104, %v1022
        %v1119 = vrot.slane %v1118, 7
        %s1128 = scalar_lea.vmem %s404, 1 [#allocation11]
        %1129 = vst.msk [vmem:[%s1128] ss:$8 sm:$0x3] %vm703, %v1105
        %1130 = vst.msk [vmem:[%s1128] ss:$8 sm:$0x0] %vm703, %v1105
        %s1131 = scalar_lea.vmem %s404, 17 [#allocation11]
        %1132 = vst.msk [vmem:[%s1131] ss:$8 sm:$0x3] %vm703, %v1107
        %1133 = vst.msk [vmem:[%s1131] ss:$8 sm:$0x0] %vm703, %v1107
        %s1134 = scalar_lea.vmem %s404, 33 [#allocation11]
        %1135 = vst.msk [vmem:[%s1134] ss:$8 sm:$0x3] %vm703, %v1109
        %1136 = vst.msk [vmem:[%s1134] ss:$8 sm:$0x0] %vm703, %v1109
        %s1137 = scalar_lea.vmem %s404, 49 [#allocation11]
        %1138 = vst.msk [vmem:[%s1137] ss:$8 sm:$0x3] %vm703, %v1111
        %1139 = vst.msk [vmem:[%s1137] ss:$8 sm:$0x0] %vm703, %v1111
        %s1140 = scalar_lea.vmem %s404, 65 [#allocation11]
        %1141 = vst.msk [vmem:[%s1140] ss:$8 sm:$0x3] %vm703, %v1113
        %1142 = vst.msk [vmem:[%s1140] ss:$8 sm:$0x0] %vm703, %v1113
        %s1143 = scalar_lea.vmem %s404, 81 [#allocation11]
        %1144 = vst.msk [vmem:[%s1143] ss:$8 sm:$0x3] %vm703, %v1115
        %1145 = vst.msk [vmem:[%s1143] ss:$8 sm:$0x0] %vm703, %v1115
        %s1146 = scalar_lea.vmem %s404, 97 [#allocation11]
        %1147 = vst.msk [vmem:[%s1146] ss:$8 sm:$0x3] %vm703, %v1117
        %1148 = vst.msk [vmem:[%s1146] ss:$8 sm:$0x0] %vm703, %v1117
        %s1149 = scalar_lea.vmem %s404, 113 [#allocation11]
        %1150 = vst.msk [vmem:[%s1149] ss:$8 sm:$0x3] %vm703, %v1119
        %1151 = vst.msk [vmem:[%s1149] ss:$8 sm:$0x0] %vm703, %v1119
        %v1153 = vrot.slane %v1049, 1
        %v1154 = vrot.slane %v1049, 2
        %v1155 = vrot.slane %v1049, 3
        %v1156 = vrot.slane %v1049, 4
        %v1157 = vrot.slane %v1049, 5
        %v1158 = vrot.slane %v1049, 6
        %v1159 = vrot.slane %v1049, 7
        %1167 = vst [vmem:[%s397 + $0x1] sm:$0x1] %v1049
        %1168 = vst [vmem:[%s397 + $0x9] sm:$0x1] %v1153
        %1169 = vst [vmem:[%s397 + $0x11] sm:$0x1] %v1154
        %1170 = vst [vmem:[%s397 + $0x19] sm:$0x1] %v1155
        %1171 = vst [vmem:[%s397 + $0x21] sm:$0x1] %v1156
        %1172 = vst [vmem:[%s397 + $0x29] sm:$0x1] %v1157
        %1173 = vst [vmem:[%s397 + $0x31] sm:$0x1] %v1158
        %1174 = vst [vmem:[%s397 + $0x39] sm:$0x1] %v1159
        %s1175 = scalar_lea.vmem %s337, 256 [#allocation5]
        %v1176 = vld [vmem:[%s1175] sm:$0xf]
        %v1177 = vld [vmem:[%s1175 + $0x4] sm:$0xf]
        %v1178 = vld [vmem:[%s1175 + $0x8] sm:$0xf]
        %v1179 = vld [vmem:[%s1175 + $0xc] sm:$0xf]
        %v1180 = vld [vmem:[%s1175 + $0x10] sm:$0xf]
        %v1181 = vld [vmem:[%s1175 + $0x14] sm:$0xf]
        %v1182 = vld [vmem:[%s1175 + $0x18] sm:$0xf]
        %v1183 = vld [vmem:[%s1175 + $0x1c] sm:$0xf]
        %v1184 = vld [vmem:[%s1175 + $0x20] sm:$0xf]
        %v1185 = vld [vmem:[%s1175 + $0x24] sm:$0xf]
        %v1186 = vld [vmem:[%s1175 + $0x28] sm:$0xf]
        %v1187 = vld [vmem:[%s1175 + $0x2c] sm:$0xf]
        %v1188 = vld [vmem:[%s1175 + $0x30] sm:$0xf]
        %v1189 = vld [vmem:[%s1175 + $0x34] sm:$0xf]
        %v1190 = vld [vmem:[%s1175 + $0x38] sm:$0xf]
        %v1191 = vld [vmem:[%s1175 + $0x3c] sm:$0xf]
        %v1192 = vld [vmem:[%s1175 + $0x40] sm:$0xf]
        %v1193 = vld [vmem:[%s1175 + $0x44] sm:$0xf]
        %v1194 = vld [vmem:[%s1175 + $0x48] sm:$0xf]
        %v1195 = vld [vmem:[%s1175 + $0x4c] sm:$0xf]
        %v1196 = vld [vmem:[%s1175 + $0x50] sm:$0xf]
        %v1197 = vld [vmem:[%s1175 + $0x54] sm:$0xf]
        %v1198 = vld [vmem:[%s1175 + $0x58] sm:$0xf]
        %v1199 = vld [vmem:[%s1175 + $0x5c] sm:$0xf]
        %v1200 = vld [vmem:[%s1175 + $0x60] sm:$0xf]
        %v1201 = vld [vmem:[%s1175 + $0x64] sm:$0xf]
        %v1202 = vld [vmem:[%s1175 + $0x68] sm:$0xf]
        %v1203 = vld [vmem:[%s1175 + $0x6c] sm:$0xf]
        %v1204 = vld [vmem:[%s1175 + $0x70] sm:$0xf]
        %v1205 = vld [vmem:[%s1175 + $0x74] sm:$0xf]
        %v1206 = vld [vmem:[%s1175 + $0x78] sm:$0xf]
        %v1207 = vld [vmem:[%s1175 + $0x7c] sm:$0xf]
        %s1208 = scalar_lea.vmem %s357, 2 [#allocation8]
        %v1209 = vld [vmem:[%s1208] sm:$0x1]
        %s1210 = scalar_lea.vmem %s347, 4 [#allocation7]
        %v1211 = vld [vmem:[%s1210] sm:$0x3]
        %v1212 = vld [vmem:[%s327 + $0x2] sm:$0x1]
        %v1213 = vld [vmem:[%s327 + $0xa] sm:$0x1]
        %v1214 = vld [vmem:[%s327 + $0x12] sm:$0x1]
        %v1215 = vld [vmem:[%s327 + $0x1a] sm:$0x1]
        %v1216 = vld [vmem:[%s327 + $0x22] sm:$0x1]
        %v1217 = vld [vmem:[%s327 + $0x2a] sm:$0x1]
        %v1218 = vld [vmem:[%s327 + $0x32] sm:$0x1]
        %v1219 = vld [vmem:[%s327 + $0x3a] sm:$0x1]
        %v1221 = vperm.slane %v1209, 0
        %v1223 = vsub.f32 %v1212, %v1221
        %v1224 = vsub.f32 %v1213, %v1221
        %v1225 = vsub.f32 %v1214, %v1221
        %v1226 = vsub.f32 %v1215, %v1221
        %v1227 = vsub.f32 %v1216, %v1221
        %v1228 = vsub.f32 %v1217, %v1221
        %v1229 = vsub.f32 %v1218, %v1221
        %v1230 = vsub.f32 %v1219, %v1221
        %v1231 = vpack.c.bf16 %v1223, %v1223
        %v1232 = vpack.c.bf16 %v1224, %v1224
        %v1233 = vpack.c.bf16 %v1225, %v1225
        %v1234 = vpack.c.bf16 %v1226, %v1226
        %v1235 = vpack.c.bf16 %v1227, %v1227
        %v1236 = vpack.c.bf16 %v1228, %v1228
        %v1237 = vpack.c.bf16 %v1229, %v1229
        %v1238 = vpack.c.bf16 %v1230, %v1230
        %v1240 = vperm.slane %v1211, 0
        %v1241 = vperm.slane %v1211, 1
        %v1252 = vunpack.c.l.b16 %v1231
        %v1253 = vunpack.c.l.b16 %v1232
        %v1254 = vunpack.c.l.b16 %v1233
        %v1255 = vunpack.c.l.b16 %v1234
        %v1256 = vunpack.c.l.b16 %v1235
        %v1257 = vunpack.c.l.b16 %v1236
        %v1258 = vunpack.c.l.b16 %v1237
        %v1259 = vunpack.c.l.b16 %v1238
        %v1260 = vrot.slane %v1253, 7
        %v1261 = vsel %vm498, %v1260, %v1252
        %v1262 = vrot.slane %v1254, 6
        %v1263 = vsel %vm501, %v1262, %v1261
        %v1264 = vrot.slane %v1255, 5
        %v1265 = vsel %vm504, %v1264, %v1263
        %v1266 = vrot.slane %v1256, 4
        %v1267 = vsel %vm507, %v1266, %v1265
        %v1268 = vrot.slane %v1257, 3
        %v1269 = vsel %vm510, %v1268, %v1267
        %v1270 = vrot.slane %v1258, 2
        %v1271 = vsel %vm513, %v1270, %v1269
        %v1272 = vrot.slane %v1259, 1
        %v1273 = vsel %vm516, %v1272, %v1271
        %v1274 = vpack.c.b16 %v1273, %v1273
        %v1308 = vunpack.c.l.b16 %v1176
        %v1309 = vunpack.c.l.b16 %v1177
        %v1310 = vunpack.c.l.b16 %v1178
        %v1311 = vunpack.c.l.b16 %v1179
        %v1312 = vunpack.c.l.b16 %v1180
        %v1313 = vunpack.c.l.b16 %v1181
        %v1314 = vunpack.c.l.b16 %v1182
        %v1315 = vunpack.c.l.b16 %v1183
        %v1316 = vunpack.c.l.b16 %v1184
        %v1317 = vunpack.c.l.b16 %v1185
        %v1318 = vunpack.c.l.b16 %v1186
        %v1319 = vunpack.c.l.b16 %v1187
        %v1320 = vunpack.c.l.b16 %v1188
        %v1321 = vunpack.c.l.b16 %v1189
        %v1322 = vunpack.c.l.b16 %v1190
        %v1323 = vunpack.c.l.b16 %v1191
        %v1324 = vunpack.c.l.b16 %v1192
        %v1325 = vunpack.c.l.b16 %v1193
        %v1326 = vunpack.c.l.b16 %v1194
        %v1327 = vunpack.c.l.b16 %v1195
        %v1328 = vunpack.c.l.b16 %v1196
        %v1329 = vunpack.c.l.b16 %v1197
        %v1330 = vunpack.c.l.b16 %v1198
        %v1331 = vunpack.c.l.b16 %v1199
        %v1332 = vunpack.c.l.b16 %v1200
        %v1333 = vunpack.c.l.b16 %v1201
        %v1334 = vunpack.c.l.b16 %v1202
        %v1335 = vunpack.c.l.b16 %v1203
        %v1336 = vunpack.c.l.b16 %v1204
        %v1337 = vunpack.c.l.b16 %v1205
        %v1338 = vunpack.c.l.b16 %v1206
        %v1339 = vunpack.c.l.b16 %v1207
        %v1340 = vpack.c.b16 %v1309, %v1308
        %v1341 = vpack.c.b16 %v1311, %v1310
        %v1342 = vpack.c.b16 %v1313, %v1312
        %v1343 = vpack.c.b16 %v1315, %v1314
        %v1344 = vpack.c.b16 %v1317, %v1316
        %v1345 = vpack.c.b16 %v1319, %v1318
        %v1346 = vpack.c.b16 %v1321, %v1320
        %v1347 = vpack.c.b16 %v1323, %v1322
        %v1348 = vpack.c.b16 %v1325, %v1324
        %v1349 = vpack.c.b16 %v1327, %v1326
        %v1350 = vpack.c.b16 %v1329, %v1328
        %v1351 = vpack.c.b16 %v1331, %v1330
        %v1352 = vpack.c.b16 %v1333, %v1332
        %v1353 = vpack.c.b16 %v1335, %v1334
        %v1354 = vpack.c.b16 %v1337, %v1336
        %v1355 = vpack.c.b16 %v1339, %v1338
        %1372 = vmatpush.bf16.xpose.msra.mxu0 %v1347
        %1373 = vmatpush.bf16.xpose.msra.mxu0 %v1346
        %1374 = vmatpush.bf16.xpose.msra.mxu0 %v1345
        %1375 = vmatpush.bf16.xpose.msra.mxu0 %v1344
        %1376 = vmatpush.bf16.xpose.msra.mxu0 %v1343
        %1377 = vmatpush.bf16.xpose.msra.mxu0 %v1342
        %1378 = vmatpush.bf16.xpose.msra.mxu0 %v1341
        %1379 = vmatpush.bf16.xpose.msra.mxu0 %v1340
        %1380 = vmatmul.bf16.gmra.mxu0 %v1274
        %v1381 = vpop.f32.mrf.mxu0
        %v1382 = vadd.f32 %v1240, %v1381
        %v1383 = vpop.f32.mrf.mxu0
        %1384 = vdwg.mxu0
        %1385 = vmatpush.bf16.xpose.msra.mxu0 %v1355
        %1386 = vmatpush.bf16.xpose.msra.mxu0 %v1354
        %1387 = vmatpush.bf16.xpose.msra.mxu0 %v1353
        %1388 = vmatpush.bf16.xpose.msra.mxu0 %v1352
        %1389 = vmatpush.bf16.xpose.msra.mxu0 %v1351
        %1390 = vmatpush.bf16.xpose.msra.mxu0 %v1350
        %1391 = vmatpush.bf16.xpose.msra.mxu0 %v1349
        %1392 = vmatpush.bf16.xpose.msra.mxu0 %v1348
        %1393 = vmatmul.bf16.gmra.mxu0 %v1274
        %v1394 = vpop.f32.mrf.mxu0
        %v1395 = vadd.f32 %v1241, %v1394
        %v1396 = vpop.f32.mrf.mxu0
        %1397 = vdwg.mxu0
        %v1398 = vmax.f32 %v1382, 0.0
        %v1399 = vmax.f32 %v1395, 0.0
        %v1400 = vpack.c.bf16 %v1398, %v1398
        %v1401 = vpack.c.bf16 %v1399, %v1399
        %1402 = vmatpush.bf16.msra.mxu0 %v1347
        %1403 = vmatpush.bf16.msra.mxu0 %v1346
        %1404 = vmatpush.bf16.msra.mxu0 %v1345
        %1405 = vmatpush.bf16.msra.mxu0 %v1344
        %1406 = vmatpush.bf16.msra.mxu0 %v1343
        %1407 = vmatpush.bf16.msra.mxu0 %v1342
        %1408 = vmatpush.bf16.msra.mxu0 %v1341
        %1409 = vmatpush.bf16.msra.mxu0 %v1340
        %1410 = vmatmul.bf16.gmra.mxu0 %v1400
        %v1411 = vpop.f32.mrf.mxu0
        %v1412 = vadd.f32 %v1221, %v1411
        %v1413 = vpop.f32.mrf.mxu0
        %1414 = vdwg.mxu0
        %1415 = vmatpush.bf16.msra.mxu0 %v1355
        %1416 = vmatpush.bf16.msra.mxu0 %v1354
        %1417 = vmatpush.bf16.msra.mxu0 %v1353
        %1418 = vmatpush.bf16.msra.mxu0 %v1352
        %1419 = vmatpush.bf16.msra.mxu0 %v1351
        %1420 = vmatpush.bf16.msra.mxu0 %v1350
        %1421 = vmatpush.bf16.msra.mxu0 %v1349
        %1422 = vmatpush.bf16.msra.mxu0 %v1348
        %1423 = vmatmul.bf16.gmra.mxu0 %v1401
        %v1424 = vpop.f32.mrf.mxu0
        %v1425 = vadd.f32 %v1412, %v1424
        %v1426 = vpop.f32.mrf.mxu0
        %1427 = vdwg.mxu0
        %v1430 = vrot.slane %v1395, 7
        %v1431 = vsel %vm675, %v1382, %v1430
        %v1432 = vsel %vm498, %v1382, %v1430
        %v1433 = vrot.slane %v1432, 1
        %v1434 = vsel %vm501, %v1382, %v1430
        %v1435 = vrot.slane %v1434, 2
        %v1436 = vsel %vm504, %v1382, %v1430
        %v1437 = vrot.slane %v1436, 3
        %v1438 = vsel %vm507, %v1382, %v1430
        %v1439 = vrot.slane %v1438, 4
        %v1440 = vsel %vm510, %v1382, %v1430
        %v1441 = vrot.slane %v1440, 5
        %v1442 = vsel %vm513, %v1382, %v1430
        %v1443 = vrot.slane %v1442, 6
        %v1444 = vsel %vm689, %v1430, %v1382
        %v1445 = vrot.slane %v1444, 7
        %s1454 = scalar_lea.vmem %s411, 2 [#allocation13]
        %1455 = vst.msk [vmem:[%s1454] ss:$8 sm:$0x3] %vm703, %v1431
        %1456 = vst.msk [vmem:[%s1454] ss:$8 sm:$0x0] %vm703, %v1431
        %s1457 = scalar_lea.vmem %s411, 18 [#allocation13]
        %1458 = vst.msk [vmem:[%s1457] ss:$8 sm:$0x3] %vm703, %v1433
        %1459 = vst.msk [vmem:[%s1457] ss:$8 sm:$0x0] %vm703, %v1433
        %s1460 = scalar_lea.vmem %s411, 34 [#allocation13]
        %1461 = vst.msk [vmem:[%s1460] ss:$8 sm:$0x3] %vm703, %v1435
        %1462 = vst.msk [vmem:[%s1460] ss:$8 sm:$0x0] %vm703, %v1435
        %s1463 = scalar_lea.vmem %s411, 50 [#allocation13]
        %1464 = vst.msk [vmem:[%s1463] ss:$8 sm:$0x3] %vm703, %v1437
        %1465 = vst.msk [vmem:[%s1463] ss:$8 sm:$0x0] %vm703, %v1437
        %s1466 = scalar_lea.vmem %s411, 66 [#allocation13]
        %1467 = vst.msk [vmem:[%s1466] ss:$8 sm:$0x3] %vm703, %v1439
        %1468 = vst.msk [vmem:[%s1466] ss:$8 sm:$0x0] %vm703, %v1439
        %s1469 = scalar_lea.vmem %s411, 82 [#allocation13]
        %1470 = vst.msk [vmem:[%s1469] ss:$8 sm:$0x3] %vm703, %v1441
        %1471 = vst.msk [vmem:[%s1469] ss:$8 sm:$0x0] %vm703, %v1441
        %s1472 = scalar_lea.vmem %s411, 98 [#allocation13]
        %1473 = vst.msk [vmem:[%s1472] ss:$8 sm:$0x3] %vm703, %v1443
        %1474 = vst.msk [vmem:[%s1472] ss:$8 sm:$0x0] %vm703, %v1443
        %s1475 = scalar_lea.vmem %s411, 114 [#allocation13]
        %1476 = vst.msk [vmem:[%s1475] ss:$8 sm:$0x3] %vm703, %v1445
        %1477 = vst.msk [vmem:[%s1475] ss:$8 sm:$0x0] %vm703, %v1445
        %v1480 = vrot.slane %v1399, 7
        %v1481 = vsel %vm675, %v1398, %v1480
        %v1482 = vsel %vm498, %v1398, %v1480
        %v1483 = vrot.slane %v1482, 1
        %v1484 = vsel %vm501, %v1398, %v1480
        %v1485 = vrot.slane %v1484, 2
        %v1486 = vsel %vm504, %v1398, %v1480
        %v1487 = vrot.slane %v1486, 3
        %v1488 = vsel %vm507, %v1398, %v1480
        %v1489 = vrot.slane %v1488, 4
        %v1490 = vsel %vm510, %v1398, %v1480
        %v1491 = vrot.slane %v1490, 5
        %v1492 = vsel %vm513, %v1398, %v1480
        %v1493 = vrot.slane %v1492, 6
        %v1494 = vsel %vm689, %v1480, %v1398
        %v1495 = vrot.slane %v1494, 7
        %s1504 = scalar_lea.vmem %s404, 2 [#allocation11]
        %1505 = vst.msk [vmem:[%s1504] ss:$8 sm:$0x3] %vm703, %v1481
        %1506 = vst.msk [vmem:[%s1504] ss:$8 sm:$0x0] %vm703, %v1481
        %s1507 = scalar_lea.vmem %s404, 18 [#allocation11]
        %1508 = vst.msk [vmem:[%s1507] ss:$8 sm:$0x3] %vm703, %v1483
        %1509 = vst.msk [vmem:[%s1507] ss:$8 sm:$0x0] %vm703, %v1483
        %s1510 = scalar_lea.vmem %s404, 34 [#allocation11]
        %1511 = vst.msk [vmem:[%s1510] ss:$8 sm:$0x3] %vm703, %v1485
        %1512 = vst.msk [vmem:[%s1510] ss:$8 sm:$0x0] %vm703, %v1485
        %s1513 = scalar_lea.vmem %s404, 50 [#allocation11]
        %1514 = vst.msk [vmem:[%s1513] ss:$8 sm:$0x3] %vm703, %v1487
        %1515 = vst.msk [vmem:[%s1513] ss:$8 sm:$0x0] %vm703, %v1487
        %s1516 = scalar_lea.vmem %s404, 66 [#allocation11]
        %1517 = vst.msk [vmem:[%s1516] ss:$8 sm:$0x3] %vm703, %v1489
        %1518 = vst.msk [vmem:[%s1516] ss:$8 sm:$0x0] %vm703, %v1489
        %s1519 = scalar_lea.vmem %s404, 82 [#allocation11]
        %1520 = vst.msk [vmem:[%s1519] ss:$8 sm:$0x3] %vm703, %v1491
        %1521 = vst.msk [vmem:[%s1519] ss:$8 sm:$0x0] %vm703, %v1491
        %s1522 = scalar_lea.vmem %s404, 98 [#allocation11]
        %1523 = vst.msk [vmem:[%s1522] ss:$8 sm:$0x3] %vm703, %v1493
        %1524 = vst.msk [vmem:[%s1522] ss:$8 sm:$0x0] %vm703, %v1493
        %s1525 = scalar_lea.vmem %s404, 114 [#allocation11]
        %1526 = vst.msk [vmem:[%s1525] ss:$8 sm:$0x3] %vm703, %v1495
        %1527 = vst.msk [vmem:[%s1525] ss:$8 sm:$0x0] %vm703, %v1495
        %v1529 = vrot.slane %v1425, 1
        %v1530 = vrot.slane %v1425, 2
        %v1531 = vrot.slane %v1425, 3
        %v1532 = vrot.slane %v1425, 4
        %v1533 = vrot.slane %v1425, 5
        %v1534 = vrot.slane %v1425, 6
        %v1535 = vrot.slane %v1425, 7
        %1543 = vst [vmem:[%s397 + $0x2] sm:$0x1] %v1425
        %1544 = vst [vmem:[%s397 + $0xa] sm:$0x1] %v1529
        %1545 = vst [vmem:[%s397 + $0x12] sm:$0x1] %v1530
        %1546 = vst [vmem:[%s397 + $0x1a] sm:$0x1] %v1531
        %1547 = vst [vmem:[%s397 + $0x22] sm:$0x1] %v1532
        %1548 = vst [vmem:[%s397 + $0x2a] sm:$0x1] %v1533
        %1549 = vst [vmem:[%s397 + $0x32] sm:$0x1] %v1534
        %1550 = vst [vmem:[%s397 + $0x3a] sm:$0x1] %v1535
        %s1551 = scalar_lea.vmem %s337, 384 [#allocation5]
        %v1552 = vld [vmem:[%s1551] sm:$0xf]
        %v1553 = vld [vmem:[%s1551 + $0x4] sm:$0xf]
        %v1554 = vld [vmem:[%s1551 + $0x8] sm:$0xf]
        %v1555 = vld [vmem:[%s1551 + $0xc] sm:$0xf]
        %v1556 = vld [vmem:[%s1551 + $0x10] sm:$0xf]
        %v1557 = vld [vmem:[%s1551 + $0x14] sm:$0xf]
        %v1558 = vld [vmem:[%s1551 + $0x18] sm:$0xf]
        %v1559 = vld [vmem:[%s1551 + $0x1c] sm:$0xf]
        %v1560 = vld [vmem:[%s1551 + $0x20] sm:$0xf]
        %v1561 = vld [vmem:[%s1551 + $0x24] sm:$0xf]
        %v1562 = vld [vmem:[%s1551 + $0x28] sm:$0xf]
        %v1563 = vld [vmem:[%s1551 + $0x2c] sm:$0xf]
        %v1564 = vld [vmem:[%s1551 + $0x30] sm:$0xf]
        %v1565 = vld [vmem:[%s1551 + $0x34] sm:$0xf]
        %v1566 = vld [vmem:[%s1551 + $0x38] sm:$0xf]
        %v1567 = vld [vmem:[%s1551 + $0x3c] sm:$0xf]
        %v1568 = vld [vmem:[%s1551 + $0x40] sm:$0xf]
        %v1569 = vld [vmem:[%s1551 + $0x44] sm:$0xf]
        %v1570 = vld [vmem:[%s1551 + $0x48] sm:$0xf]
        %v1571 = vld [vmem:[%s1551 + $0x4c] sm:$0xf]
        %v1572 = vld [vmem:[%s1551 + $0x50] sm:$0xf]
        %v1573 = vld [vmem:[%s1551 + $0x54] sm:$0xf]
        %v1574 = vld [vmem:[%s1551 + $0x58] sm:$0xf]
        %v1575 = vld [vmem:[%s1551 + $0x5c] sm:$0xf]
        %v1576 = vld [vmem:[%s1551 + $0x60] sm:$0xf]
        %v1577 = vld [vmem:[%s1551 + $0x64] sm:$0xf]
        %v1578 = vld [vmem:[%s1551 + $0x68] sm:$0xf]
        %v1579 = vld [vmem:[%s1551 + $0x6c] sm:$0xf]
        %v1580 = vld [vmem:[%s1551 + $0x70] sm:$0xf]
        %v1581 = vld [vmem:[%s1551 + $0x74] sm:$0xf]
        %v1582 = vld [vmem:[%s1551 + $0x78] sm:$0xf]
        %v1583 = vld [vmem:[%s1551 + $0x7c] sm:$0xf]
        %s1584 = scalar_lea.vmem %s357, 3 [#allocation8]
        %v1585 = vld [vmem:[%s1584] sm:$0x1]
        %s1586 = scalar_lea.vmem %s347, 6 [#allocation7]
        %v1587 = vld [vmem:[%s1586] sm:$0x3]
        %v1588 = vld [vmem:[%s327 + $0x3] sm:$0x1]
        %v1589 = vld [vmem:[%s327 + $0xb] sm:$0x1]
        %v1590 = vld [vmem:[%s327 + $0x13] sm:$0x1]
        %v1591 = vld [vmem:[%s327 + $0x1b] sm:$0x1]
        %v1592 = vld [vmem:[%s327 + $0x23] sm:$0x1]
        %v1593 = vld [vmem:[%s327 + $0x2b] sm:$0x1]
        %v1594 = vld [vmem:[%s327 + $0x33] sm:$0x1]
        %v1595 = vld [vmem:[%s327 + $0x3b] sm:$0x1]
        %v1597 = vperm.slane %v1585, 0
        %v1599 = vsub.f32 %v1588, %v1597
        %v1600 = vsub.f32 %v1589, %v1597
        %v1601 = vsub.f32 %v1590, %v1597
        %v1602 = vsub.f32 %v1591, %v1597
        %v1603 = vsub.f32 %v1592, %v1597
        %v1604 = vsub.f32 %v1593, %v1597
        %v1605 = vsub.f32 %v1594, %v1597
        %v1606 = vsub.f32 %v1595, %v1597
        %v1607 = vpack.c.bf16 %v1599, %v1599
        %v1608 = vpack.c.bf16 %v1600, %v1600
        %v1609 = vpack.c.bf16 %v1601, %v1601
        %v1610 = vpack.c.bf16 %v1602, %v1602
        %v1611 = vpack.c.bf16 %v1603, %v1603
        %v1612 = vpack.c.bf16 %v1604, %v1604
        %v1613 = vpack.c.bf16 %v1605, %v1605
        %v1614 = vpack.c.bf16 %v1606, %v1606
        %v1616 = vperm.slane %v1587, 0
        %v1617 = vperm.slane %v1587, 1
        %v1628 = vunpack.c.l.b16 %v1607
        %v1629 = vunpack.c.l.b16 %v1608
        %v1630 = vunpack.c.l.b16 %v1609
        %v1631 = vunpack.c.l.b16 %v1610
        %v1632 = vunpack.c.l.b16 %v1611
        %v1633 = vunpack.c.l.b16 %v1612
        %v1634 = vunpack.c.l.b16 %v1613
        %v1635 = vunpack.c.l.b16 %v1614
        %v1636 = vrot.slane %v1629, 7
        %v1637 = vsel %vm498, %v1636, %v1628
        %v1638 = vrot.slane %v1630, 6
        %v1639 = vsel %vm501, %v1638, %v1637
        %v1640 = vrot.slane %v1631, 5
        %v1641 = vsel %vm504, %v1640, %v1639
        %v1642 = vrot.slane %v1632, 4
        %v1643 = vsel %vm507, %v1642, %v1641
        %v1644 = vrot.slane %v1633, 3
        %v1645 = vsel %vm510, %v1644, %v1643
        %v1646 = vrot.slane %v1634, 2
        %v1647 = vsel %vm513, %v1646, %v1645
        %v1648 = vrot.slane %v1635, 1
        %v1649 = vsel %vm516, %v1648, %v1647
        %v1650 = vpack.c.b16 %v1649, %v1649
        %v1684 = vunpack.c.l.b16 %v1552
        %v1685 = vunpack.c.l.b16 %v1553
        %v1686 = vunpack.c.l.b16 %v1554
        %v1687 = vunpack.c.l.b16 %v1555
        %v1688 = vunpack.c.l.b16 %v1556
        %v1689 = vunpack.c.l.b16 %v1557
        %v1690 = vunpack.c.l.b16 %v1558
        %v1691 = vunpack.c.l.b16 %v1559
        %v1692 = vunpack.c.l.b16 %v1560
        %v1693 = vunpack.c.l.b16 %v1561
        %v1694 = vunpack.c.l.b16 %v1562
        %v1695 = vunpack.c.l.b16 %v1563
        %v1696 = vunpack.c.l.b16 %v1564
        %v1697 = vunpack.c.l.b16 %v1565
        %v1698 = vunpack.c.l.b16 %v1566
        %v1699 = vunpack.c.l.b16 %v1567
        %v1700 = vunpack.c.l.b16 %v1568
        %v1701 = vunpack.c.l.b16 %v1569
        %v1702 = vunpack.c.l.b16 %v1570
        %v1703 = vunpack.c.l.b16 %v1571
        %v1704 = vunpack.c.l.b16 %v1572
        %v1705 = vunpack.c.l.b16 %v1573
        %v1706 = vunpack.c.l.b16 %v1574
        %v1707 = vunpack.c.l.b16 %v1575
        %v1708 = vunpack.c.l.b16 %v1576
        %v1709 = vunpack.c.l.b16 %v1577
        %v1710 = vunpack.c.l.b16 %v1578
        %v1711 = vunpack.c.l.b16 %v1579
        %v1712 = vunpack.c.l.b16 %v1580
        %v1713 = vunpack.c.l.b16 %v1581
        %v1714 = vunpack.c.l.b16 %v1582
        %v1715 = vunpack.c.l.b16 %v1583
        %v1716 = vpack.c.b16 %v1685, %v1684
        %v1717 = vpack.c.b16 %v1687, %v1686
        %v1718 = vpack.c.b16 %v1689, %v1688
        %v1719 = vpack.c.b16 %v1691, %v1690
        %v1720 = vpack.c.b16 %v1693, %v1692
        %v1721 = vpack.c.b16 %v1695, %v1694
        %v1722 = vpack.c.b16 %v1697, %v1696
        %v1723 = vpack.c.b16 %v1699, %v1698
        %v1724 = vpack.c.b16 %v1701, %v1700
        %v1725 = vpack.c.b16 %v1703, %v1702
        %v1726 = vpack.c.b16 %v1705, %v1704
        %v1727 = vpack.c.b16 %v1707, %v1706
        %v1728 = vpack.c.b16 %v1709, %v1708
        %v1729 = vpack.c.b16 %v1711, %v1710
        %v1730 = vpack.c.b16 %v1713, %v1712
        %v1731 = vpack.c.b16 %v1715, %v1714
        %1748 = vmatpush.bf16.xpose.msra.mxu0 %v1723
        %1749 = vmatpush.bf16.xpose.msra.mxu0 %v1722
        %1750 = vmatpush.bf16.xpose.msra.mxu0 %v1721
        %1751 = vmatpush.bf16.xpose.msra.mxu0 %v1720
        %1752 = vmatpush.bf16.xpose.msra.mxu0 %v1719
        %1753 = vmatpush.bf16.xpose.msra.mxu0 %v1718
        %1754 = vmatpush.bf16.xpose.msra.mxu0 %v1717
        %1755 = vmatpush.bf16.xpose.msra.mxu0 %v1716
        %1756 = vmatmul.bf16.gmra.mxu0 %v1650
        %v1757 = vpop.f32.mrf.mxu0
        %v1758 = vadd.f32 %v1616, %v1757
        %v1759 = vpop.f32.mrf.mxu0
        %1760 = vdwg.mxu0
        %1761 = vmatpush.bf16.xpose.msra.mxu0 %v1731
        %1762 = vmatpush.bf16.xpose.msra.mxu0 %v1730
        %1763 = vmatpush.bf16.xpose.msra.mxu0 %v1729
        %1764 = vmatpush.bf16.xpose.msra.mxu0 %v1728
        %1765 = vmatpush.bf16.xpose.msra.mxu0 %v1727
        %1766 = vmatpush.bf16.xpose.msra.mxu0 %v1726
        %1767 = vmatpush.bf16.xpose.msra.mxu0 %v1725
        %1768 = vmatpush.bf16.xpose.msra.mxu0 %v1724
        %1769 = vmatmul.bf16.gmra.mxu0 %v1650
        %v1770 = vpop.f32.mrf.mxu0
        %v1771 = vadd.f32 %v1617, %v1770
        %v1772 = vpop.f32.mrf.mxu0
        %1773 = vdwg.mxu0
        %v1774 = vmax.f32 %v1758, 0.0
        %v1775 = vmax.f32 %v1771, 0.0
        %v1776 = vpack.c.bf16 %v1774, %v1774
        %v1777 = vpack.c.bf16 %v1775, %v1775
        %1778 = vmatpush.bf16.msra.mxu0 %v1723
        %1779 = vmatpush.bf16.msra.mxu0 %v1722
        %1780 = vmatpush.bf16.msra.mxu0 %v1721
        %1781 = vmatpush.bf16.msra.mxu0 %v1720
        %1782 = vmatpush.bf16.msra.mxu0 %v1719
        %1783 = vmatpush.bf16.msra.mxu0 %v1718
        %1784 = vmatpush.bf16.msra.mxu0 %v1717
        %1785 = vmatpush.bf16.msra.mxu0 %v1716
        %1786 = vmatmul.bf16.gmra.mxu0 %v1776
        %v1787 = vpop.f32.mrf.mxu0
        %v1788 = vadd.f32 %v1597, %v1787
        %v1789 = vpop.f32.mrf.mxu0
        %1790 = vdwg.mxu0
        %1791 = vmatpush.bf16.msra.mxu0 %v1731
        %1792 = vmatpush.bf16.msra.mxu0 %v1730
        %1793 = vmatpush.bf16.msra.mxu0 %v1729
        %1794 = vmatpush.bf16.msra.mxu0 %v1728
        %1795 = vmatpush.bf16.msra.mxu0 %v1727
        %1796 = vmatpush.bf16.msra.mxu0 %v1726
        %1797 = vmatpush.bf16.msra.mxu0 %v1725
        %1798 = vmatpush.bf16.msra.mxu0 %v1724
        %1799 = vmatmul.bf16.gmra.mxu0 %v1777
        %v1800 = vpop.f32.mrf.mxu0
        %v1801 = vadd.f32 %v1788, %v1800
        %v1802 = vpop.f32.mrf.mxu0
        %1803 = vdwg.mxu0
        %v1806 = vrot.slane %v1771, 7
        %v1807 = vsel %vm675, %v1758, %v1806
        %v1808 = vsel %vm498, %v1758, %v1806
        %v1809 = vrot.slane %v1808, 1
        %v1810 = vsel %vm501, %v1758, %v1806
        %v1811 = vrot.slane %v1810, 2
        %v1812 = vsel %vm504, %v1758, %v1806
        %v1813 = vrot.slane %v1812, 3
        %v1814 = vsel %vm507, %v1758, %v1806
        %v1815 = vrot.slane %v1814, 4
        %v1816 = vsel %vm510, %v1758, %v1806
        %v1817 = vrot.slane %v1816, 5
        %v1818 = vsel %vm513, %v1758, %v1806
        %v1819 = vrot.slane %v1818, 6
        %v1820 = vsel %vm689, %v1806, %v1758
        %v1821 = vrot.slane %v1820, 7
        %s1830 = scalar_lea.vmem %s411, 3 [#allocation13]
        %1831 = vst.msk [vmem:[%s1830] ss:$8 sm:$0x3] %vm703, %v1807
        %1832 = vst.msk [vmem:[%s1830] ss:$8 sm:$0x0] %vm703, %v1807
        %s1833 = scalar_lea.vmem %s411, 19 [#allocation13]
        %1834 = vst.msk [vmem:[%s1833] ss:$8 sm:$0x3] %vm703, %v1809
        %1835 = vst.msk [vmem:[%s1833] ss:$8 sm:$0x0] %vm703, %v1809
        %s1836 = scalar_lea.vmem %s411, 35 [#allocation13]
        %1837 = vst.msk [vmem:[%s1836] ss:$8 sm:$0x3] %vm703, %v1811
        %1838 = vst.msk [vmem:[%s1836] ss:$8 sm:$0x0] %vm703, %v1811
        %s1839 = scalar_lea.vmem %s411, 51 [#allocation13]
        %1840 = vst.msk [vmem:[%s1839] ss:$8 sm:$0x3] %vm703, %v1813
        %1841 = vst.msk [vmem:[%s1839] ss:$8 sm:$0x0] %vm703, %v1813
        %s1842 = scalar_lea.vmem %s411, 67 [#allocation13]
        %1843 = vst.msk [vmem:[%s1842] ss:$8 sm:$0x3] %vm703, %v1815
        %1844 = vst.msk [vmem:[%s1842] ss:$8 sm:$0x0] %vm703, %v1815
        %s1845 = scalar_lea.vmem %s411, 83 [#allocation13]
        %1846 = vst.msk [vmem:[%s1845] ss:$8 sm:$0x3] %vm703, %v1817
        %1847 = vst.msk [vmem:[%s1845] ss:$8 sm:$0x0] %vm703, %v1817
        %s1848 = scalar_lea.vmem %s411, 99 [#allocation13]
        %1849 = vst.msk [vmem:[%s1848] ss:$8 sm:$0x3] %vm703, %v1819
        %1850 = vst.msk [vmem:[%s1848] ss:$8 sm:$0x0] %vm703, %v1819
        %s1851 = scalar_lea.vmem %s411, 115 [#allocation13]
        %1852 = vst.msk [vmem:[%s1851] ss:$8 sm:$0x3] %vm703, %v1821
        %1853 = vst.msk [vmem:[%s1851] ss:$8 sm:$0x0] %vm703, %v1821
        %v1856 = vrot.slane %v1775, 7
        %v1857 = vsel %vm675, %v1774, %v1856
        %v1858 = vsel %vm498, %v1774, %v1856
        %v1859 = vrot.slane %v1858, 1
        %v1860 = vsel %vm501, %v1774, %v1856
        %v1861 = vrot.slane %v1860, 2
        %v1862 = vsel %vm504, %v1774, %v1856
        %v1863 = vrot.slane %v1862, 3
        %v1864 = vsel %vm507, %v1774, %v1856
        %v1865 = vrot.slane %v1864, 4
        %v1866 = vsel %vm510, %v1774, %v1856
        %v1867 = vrot.slane %v1866, 5
        %v1868 = vsel %vm513, %v1774, %v1856
        %v1869 = vrot.slane %v1868, 6
        %v1870 = vsel %vm689, %v1856, %v1774
        %v1871 = vrot.slane %v1870, 7
        %s1880 = scalar_lea.vmem %s404, 3 [#allocation11]
        %1881 = vst.msk [vmem:[%s1880] ss:$8 sm:$0x3] %vm703, %v1857
        %1882 = vst.msk [vmem:[%s1880] ss:$8 sm:$0x0] %vm703, %v1857
        %s1883 = scalar_lea.vmem %s404, 19 [#allocation11]
        %1884 = vst.msk [vmem:[%s1883] ss:$8 sm:$0x3] %vm703, %v1859
        %1885 = vst.msk [vmem:[%s1883] ss:$8 sm:$0x0] %vm703, %v1859
        %s1886 = scalar_lea.vmem %s404, 35 [#allocation11]
        %1887 = vst.msk [vmem:[%s1886] ss:$8 sm:$0x3] %vm703, %v1861
        %1888 = vst.msk [vmem:[%s1886] ss:$8 sm:$0x0] %vm703, %v1861
        %s1889 = scalar_lea.vmem %s404, 51 [#allocation11]
        %1890 = vst.msk [vmem:[%s1889] ss:$8 sm:$0x3] %vm703, %v1863
        %1891 = vst.msk [vmem:[%s1889] ss:$8 sm:$0x0] %vm703, %v1863
        %s1892 = scalar_lea.vmem %s404, 67 [#allocation11]
        %1893 = vst.msk [vmem:[%s1892] ss:$8 sm:$0x3] %vm703, %v1865
        %1894 = vst.msk [vmem:[%s1892] ss:$8 sm:$0x0] %vm703, %v1865
        %s1895 = scalar_lea.vmem %s404, 83 [#allocation11]
        %1896 = vst.msk [vmem:[%s1895] ss:$8 sm:$0x3] %vm703, %v1867
        %1897 = vst.msk [vmem:[%s1895] ss:$8 sm:$0x0] %vm703, %v1867
        %s1898 = scalar_lea.vmem %s404, 99 [#allocation11]
        %1899 = vst.msk [vmem:[%s1898] ss:$8 sm:$0x3] %vm703, %v1869
        %1900 = vst.msk [vmem:[%s1898] ss:$8 sm:$0x0] %vm703, %v1869
        %s1901 = scalar_lea.vmem %s404, 115 [#allocation11]
        %1902 = vst.msk [vmem:[%s1901] ss:$8 sm:$0x3] %vm703, %v1871
        %1903 = vst.msk [vmem:[%s1901] ss:$8 sm:$0x0] %vm703, %v1871
        %v1905 = vrot.slane %v1801, 1
        %v1906 = vrot.slane %v1801, 2
        %v1907 = vrot.slane %v1801, 3
        %v1908 = vrot.slane %v1801, 4
        %v1909 = vrot.slane %v1801, 5
        %v1910 = vrot.slane %v1801, 6
        %v1911 = vrot.slane %v1801, 7
        %1919 = vst [vmem:[%s397 + $0x3] sm:$0x1] %v1801
        %1920 = vst [vmem:[%s397 + $0xb] sm:$0x1] %v1905
        %1921 = vst [vmem:[%s397 + $0x13] sm:$0x1] %v1906
        %1922 = vst [vmem:[%s397 + $0x1b] sm:$0x1] %v1907
        %1923 = vst [vmem:[%s397 + $0x23] sm:$0x1] %v1908
        %1924 = vst [vmem:[%s397 + $0x2b] sm:$0x1] %v1909
        %1925 = vst [vmem:[%s397 + $0x33] sm:$0x1] %v1910
        %1926 = vst [vmem:[%s397 + $0x3b] sm:$0x1] %v1911
        %s1927 = scalar_lea.vmem %s337, 512 [#allocation5]
        %v1928 = vld [vmem:[%s1927] sm:$0xf]
        %v1929 = vld [vmem:[%s1927 + $0x4] sm:$0xf]
        %v1930 = vld [vmem:[%s1927 + $0x8] sm:$0xf]
        %v1931 = vld [vmem:[%s1927 + $0xc] sm:$0xf]
        %v1932 = vld [vmem:[%s1927 + $0x10] sm:$0xf]
        %v1933 = vld [vmem:[%s1927 + $0x14] sm:$0xf]
        %v1934 = vld [vmem:[%s1927 + $0x18] sm:$0xf]
        %v1935 = vld [vmem:[%s1927 + $0x1c] sm:$0xf]
        %v1936 = vld [vmem:[%s1927 + $0x20] sm:$0xf]
        %v1937 = vld [vmem:[%s1927 + $0x24] sm:$0xf]
        %v1938 = vld [vmem:[%s1927 + $0x28] sm:$0xf]
        %v1939 = vld [vmem:[%s1927 + $0x2c] sm:$0xf]
        %v1940 = vld [vmem:[%s1927 + $0x30] sm:$0xf]
        %v1941 = vld [vmem:[%s1927 + $0x34] sm:$0xf]
        %v1942 = vld [vmem:[%s1927 + $0x38] sm:$0xf]
        %v1943 = vld [vmem:[%s1927 + $0x3c] sm:$0xf]
        %v1944 = vld [vmem:[%s1927 + $0x40] sm:$0xf]
        %v1945 = vld [vmem:[%s1927 + $0x44] sm:$0xf]
        %v1946 = vld [vmem:[%s1927 + $0x48] sm:$0xf]
        %v1947 = vld [vmem:[%s1927 + $0x4c] sm:$0xf]
        %v1948 = vld [vmem:[%s1927 + $0x50] sm:$0xf]
        %v1949 = vld [vmem:[%s1927 + $0x54] sm:$0xf]
        %v1950 = vld [vmem:[%s1927 + $0x58] sm:$0xf]
        %v1951 = vld [vmem:[%s1927 + $0x5c] sm:$0xf]
        %v1952 = vld [vmem:[%s1927 + $0x60] sm:$0xf]
        %v1953 = vld [vmem:[%s1927 + $0x64] sm:$0xf]
        %v1954 = vld [vmem:[%s1927 + $0x68] sm:$0xf]
        %v1955 = vld [vmem:[%s1927 + $0x6c] sm:$0xf]
        %v1956 = vld [vmem:[%s1927 + $0x70] sm:$0xf]
        %v1957 = vld [vmem:[%s1927 + $0x74] sm:$0xf]
        %v1958 = vld [vmem:[%s1927 + $0x78] sm:$0xf]
        %v1959 = vld [vmem:[%s1927 + $0x7c] sm:$0xf]
        %s1960 = scalar_lea.vmem %s357, 4 [#allocation8]
        %v1961 = vld [vmem:[%s1960] sm:$0x1]
        %s1962 = scalar_lea.vmem %s347, 8 [#allocation7]
        %v1963 = vld [vmem:[%s1962] sm:$0x3]
        %v1964 = vld [vmem:[%s327 + $0x4] sm:$0x1]
        %v1965 = vld [vmem:[%s327 + $0xc] sm:$0x1]
        %v1966 = vld [vmem:[%s327 + $0x14] sm:$0x1]
        %v1967 = vld [vmem:[%s327 + $0x1c] sm:$0x1]
        %v1968 = vld [vmem:[%s327 + $0x24] sm:$0x1]
        %v1969 = vld [vmem:[%s327 + $0x2c] sm:$0x1]
        %v1970 = vld [vmem:[%s327 + $0x34] sm:$0x1]
        %v1971 = vld [vmem:[%s327 + $0x3c] sm:$0x1]
        %v1973 = vperm.slane %v1961, 0
        %v1975 = vsub.f32 %v1964, %v1973
        %v1976 = vsub.f32 %v1965, %v1973
        %v1977 = vsub.f32 %v1966, %v1973
        %v1978 = vsub.f32 %v1967, %v1973
        %v1979 = vsub.f32 %v1968, %v1973
        %v1980 = vsub.f32 %v1969, %v1973
        %v1981 = vsub.f32 %v1970, %v1973
        %v1982 = vsub.f32 %v1971, %v1973
        %v1983 = vpack.c.bf16 %v1975, %v1975
        %v1984 = vpack.c.bf16 %v1976, %v1976
        %v1985 = vpack.c.bf16 %v1977, %v1977
        %v1986 = vpack.c.bf16 %v1978, %v1978
        %v1987 = vpack.c.bf16 %v1979, %v1979
        %v1988 = vpack.c.bf16 %v1980, %v1980
        %v1989 = vpack.c.bf16 %v1981, %v1981
        %v1990 = vpack.c.bf16 %v1982, %v1982
        %v1992 = vperm.slane %v1963, 0
        %v1993 = vperm.slane %v1963, 1
        %v2004 = vunpack.c.l.b16 %v1983
        %v2005 = vunpack.c.l.b16 %v1984
        %v2006 = vunpack.c.l.b16 %v1985
        %v2007 = vunpack.c.l.b16 %v1986
        %v2008 = vunpack.c.l.b16 %v1987
        %v2009 = vunpack.c.l.b16 %v1988
        %v2010 = vunpack.c.l.b16 %v1989
        %v2011 = vunpack.c.l.b16 %v1990
        %v2012 = vrot.slane %v2005, 7
        %v2013 = vsel %vm498, %v2012, %v2004
        %v2014 = vrot.slane %v2006, 6
        %v2015 = vsel %vm501, %v2014, %v2013
        %v2016 = vrot.slane %v2007, 5
        %v2017 = vsel %vm504, %v2016, %v2015
        %v2018 = vrot.slane %v2008, 4
        %v2019 = vsel %vm507, %v2018, %v2017
        %v2020 = vrot.slane %v2009, 3
        %v2021 = vsel %vm510, %v2020, %v2019
        %v2022 = vrot.slane %v2010, 2
        %v2023 = vsel %vm513, %v2022, %v2021
        %v2024 = vrot.slane %v2011, 1
        %v2025 = vsel %vm516, %v2024, %v2023
        %v2026 = vpack.c.b16 %v2025, %v2025
        %v2060 = vunpack.c.l.b16 %v1928
        %v2061 = vunpack.c.l.b16 %v1929
        %v2062 = vunpack.c.l.b16 %v1930
        %v2063 = vunpack.c.l.b16 %v1931
        %v2064 = vunpack.c.l.b16 %v1932
        %v2065 = vunpack.c.l.b16 %v1933
        %v2066 = vunpack.c.l.b16 %v1934
        %v2067 = vunpack.c.l.b16 %v1935
        %v2068 = vunpack.c.l.b16 %v1936
        %v2069 = vunpack.c.l.b16 %v1937
        %v2070 = vunpack.c.l.b16 %v1938
        %v2071 = vunpack.c.l.b16 %v1939
        %v2072 = vunpack.c.l.b16 %v1940
        %v2073 = vunpack.c.l.b16 %v1941
        %v2074 = vunpack.c.l.b16 %v1942
        %v2075 = vunpack.c.l.b16 %v1943
        %v2076 = vunpack.c.l.b16 %v1944
        %v2077 = vunpack.c.l.b16 %v1945
        %v2078 = vunpack.c.l.b16 %v1946
        %v2079 = vunpack.c.l.b16 %v1947
        %v2080 = vunpack.c.l.b16 %v1948
        %v2081 = vunpack.c.l.b16 %v1949
        %v2082 = vunpack.c.l.b16 %v1950
        %v2083 = vunpack.c.l.b16 %v1951
        %v2084 = vunpack.c.l.b16 %v1952
        %v2085 = vunpack.c.l.b16 %v1953
        %v2086 = vunpack.c.l.b16 %v1954
        %v2087 = vunpack.c.l.b16 %v1955
        %v2088 = vunpack.c.l.b16 %v1956
        %v2089 = vunpack.c.l.b16 %v1957
        %v2090 = vunpack.c.l.b16 %v1958
        %v2091 = vunpack.c.l.b16 %v1959
        %v2092 = vpack.c.b16 %v2061, %v2060
        %v2093 = vpack.c.b16 %v2063, %v2062
        %v2094 = vpack.c.b16 %v2065, %v2064
        %v2095 = vpack.c.b16 %v2067, %v2066
        %v2096 = vpack.c.b16 %v2069, %v2068
        %v2097 = vpack.c.b16 %v2071, %v2070
        %v2098 = vpack.c.b16 %v2073, %v2072
        %v2099 = vpack.c.b16 %v2075, %v2074
        %v2100 = vpack.c.b16 %v2077, %v2076
        %v2101 = vpack.c.b16 %v2079, %v2078
        %v2102 = vpack.c.b16 %v2081, %v2080
        %v2103 = vpack.c.b16 %v2083, %v2082
        %v2104 = vpack.c.b16 %v2085, %v2084
        %v2105 = vpack.c.b16 %v2087, %v2086
        %v2106 = vpack.c.b16 %v2089, %v2088
        %v2107 = vpack.c.b16 %v2091, %v2090
        %2124 = vmatpush.bf16.xpose.msra.mxu0 %v2099
        %2125 = vmatpush.bf16.xpose.msra.mxu0 %v2098
        %2126 = vmatpush.bf16.xpose.msra.mxu0 %v2097
        %2127 = vmatpush.bf16.xpose.msra.mxu0 %v2096
        %2128 = vmatpush.bf16.xpose.msra.mxu0 %v2095
        %2129 = vmatpush.bf16.xpose.msra.mxu0 %v2094
        %2130 = vmatpush.bf16.xpose.msra.mxu0 %v2093
        %2131 = vmatpush.bf16.xpose.msra.mxu0 %v2092
        %2132 = vmatmul.bf16.gmra.mxu0 %v2026
        %v2133 = vpop.f32.mrf.mxu0
        %v2134 = vadd.f32 %v1992, %v2133
        %v2135 = vpop.f32.mrf.mxu0
        %2136 = vdwg.mxu0
        %2137 = vmatpush.bf16.xpose.msra.mxu0 %v2107
        %2138 = vmatpush.bf16.xpose.msra.mxu0 %v2106
        %2139 = vmatpush.bf16.xpose.msra.mxu0 %v2105
        %2140 = vmatpush.bf16.xpose.msra.mxu0 %v2104
        %2141 = vmatpush.bf16.xpose.msra.mxu0 %v2103
        %2142 = vmatpush.bf16.xpose.msra.mxu0 %v2102
        %2143 = vmatpush.bf16.xpose.msra.mxu0 %v2101
        %2144 = vmatpush.bf16.xpose.msra.mxu0 %v2100
        %2145 = vmatmul.bf16.gmra.mxu0 %v2026
        %v2146 = vpop.f32.mrf.mxu0
        %v2147 = vadd.f32 %v1993, %v2146
        %v2148 = vpop.f32.mrf.mxu0
        %2149 = vdwg.mxu0
        %v2150 = vmax.f32 %v2134, 0.0
        %v2151 = vmax.f32 %v2147, 0.0
        %v2152 = vpack.c.bf16 %v2150, %v2150
        %v2153 = vpack.c.bf16 %v2151, %v2151
        %2154 = vmatpush.bf16.msra.mxu0 %v2099
        %2155 = vmatpush.bf16.msra.mxu0 %v2098
        %2156 = vmatpush.bf16.msra.mxu0 %v2097
        %2157 = vmatpush.bf16.msra.mxu0 %v2096
        %2158 = vmatpush.bf16.msra.mxu0 %v2095
        %2159 = vmatpush.bf16.msra.mxu0 %v2094
        %2160 = vmatpush.bf16.msra.mxu0 %v2093
        %2161 = vmatpush.bf16.msra.mxu0 %v2092
        %2162 = vmatmul.bf16.gmra.mxu0 %v2152
        %v2163 = vpop.f32.mrf.mxu0
        %v2164 = vadd.f32 %v1973, %v2163
        %v2165 = vpop.f32.mrf.mxu0
        %2166 = vdwg.mxu0
        %2167 = vmatpush.bf16.msra.mxu0 %v2107
        %2168 = vmatpush.bf16.msra.mxu0 %v2106
        %2169 = vmatpush.bf16.msra.mxu0 %v2105
        %2170 = vmatpush.bf16.msra.mxu0 %v2104
        %2171 = vmatpush.bf16.msra.mxu0 %v2103
        %2172 = vmatpush.bf16.msra.mxu0 %v2102
        %2173 = vmatpush.bf16.msra.mxu0 %v2101
        %2174 = vmatpush.bf16.msra.mxu0 %v2100
        %2175 = vmatmul.bf16.gmra.mxu0 %v2153
        %v2176 = vpop.f32.mrf.mxu0
        %v2177 = vadd.f32 %v2164, %v2176
        %v2178 = vpop.f32.mrf.mxu0
        %2179 = vdwg.mxu0
        %v2182 = vrot.slane %v2147, 7
        %v2183 = vsel %vm675, %v2134, %v2182
        %v2184 = vsel %vm498, %v2134, %v2182
        %v2185 = vrot.slane %v2184, 1
        %v2186 = vsel %vm501, %v2134, %v2182
        %v2187 = vrot.slane %v2186, 2
        %v2188 = vsel %vm504, %v2134, %v2182
        %v2189 = vrot.slane %v2188, 3
        %v2190 = vsel %vm507, %v2134, %v2182
        %v2191 = vrot.slane %v2190, 4
        %v2192 = vsel %vm510, %v2134, %v2182
        %v2193 = vrot.slane %v2192, 5
        %v2194 = vsel %vm513, %v2134, %v2182
        %v2195 = vrot.slane %v2194, 6
        %v2196 = vsel %vm689, %v2182, %v2134
        %v2197 = vrot.slane %v2196, 7
        %s2206 = scalar_lea.vmem %s411, 4 [#allocation13]
        %2207 = vst.msk [vmem:[%s2206] ss:$8 sm:$0x3] %vm703, %v2183
        %2208 = vst.msk [vmem:[%s2206] ss:$8 sm:$0x0] %vm703, %v2183
        %s2209 = scalar_lea.vmem %s411, 20 [#allocation13]
        %2210 = vst.msk [vmem:[%s2209] ss:$8 sm:$0x3] %vm703, %v2185
        %2211 = vst.msk [vmem:[%s2209] ss:$8 sm:$0x0] %vm703, %v2185
        %s2212 = scalar_lea.vmem %s411, 36 [#allocation13]
        %2213 = vst.msk [vmem:[%s2212] ss:$8 sm:$0x3] %vm703, %v2187
        %2214 = vst.msk [vmem:[%s2212] ss:$8 sm:$0x0] %vm703, %v2187
        %s2215 = scalar_lea.vmem %s411, 52 [#allocation13]
        %2216 = vst.msk [vmem:[%s2215] ss:$8 sm:$0x3] %vm703, %v2189
        %2217 = vst.msk [vmem:[%s2215] ss:$8 sm:$0x0] %vm703, %v2189
        %s2218 = scalar_lea.vmem %s411, 68 [#allocation13]
        %2219 = vst.msk [vmem:[%s2218] ss:$8 sm:$0x3] %vm703, %v2191
        %2220 = vst.msk [vmem:[%s2218] ss:$8 sm:$0x0] %vm703, %v2191
        %s2221 = scalar_lea.vmem %s411, 84 [#allocation13]
        %2222 = vst.msk [vmem:[%s2221] ss:$8 sm:$0x3] %vm703, %v2193
        %2223 = vst.msk [vmem:[%s2221] ss:$8 sm:$0x0] %vm703, %v2193
        %s2224 = scalar_lea.vmem %s411, 100 [#allocation13]
        %2225 = vst.msk [vmem:[%s2224] ss:$8 sm:$0x3] %vm703, %v2195
        %2226 = vst.msk [vmem:[%s2224] ss:$8 sm:$0x0] %vm703, %v2195
        %s2227 = scalar_lea.vmem %s411, 116 [#allocation13]
        %2228 = vst.msk [vmem:[%s2227] ss:$8 sm:$0x3] %vm703, %v2197
        %2229 = vst.msk [vmem:[%s2227] ss:$8 sm:$0x0] %vm703, %v2197
        %v2232 = vrot.slane %v2151, 7
        %v2233 = vsel %vm675, %v2150, %v2232
        %v2234 = vsel %vm498, %v2150, %v2232
        %v2235 = vrot.slane %v2234, 1
        %v2236 = vsel %vm501, %v2150, %v2232
        %v2237 = vrot.slane %v2236, 2
        %v2238 = vsel %vm504, %v2150, %v2232
        %v2239 = vrot.slane %v2238, 3
        %v2240 = vsel %vm507, %v2150, %v2232
        %v2241 = vrot.slane %v2240, 4
        %v2242 = vsel %vm510, %v2150, %v2232
        %v2243 = vrot.slane %v2242, 5
        %v2244 = vsel %vm513, %v2150, %v2232
        %v2245 = vrot.slane %v2244, 6
        %v2246 = vsel %vm689, %v2232, %v2150
        %v2247 = vrot.slane %v2246, 7
        %s2256 = scalar_lea.vmem %s404, 4 [#allocation11]
        %2257 = vst.msk [vmem:[%s2256] ss:$8 sm:$0x3] %vm703, %v2233
        %2258 = vst.msk [vmem:[%s2256] ss:$8 sm:$0x0] %vm703, %v2233
        %s2259 = scalar_lea.vmem %s404, 20 [#allocation11]
        %2260 = vst.msk [vmem:[%s2259] ss:$8 sm:$0x3] %vm703, %v2235
        %2261 = vst.msk [vmem:[%s2259] ss:$8 sm:$0x0] %vm703, %v2235
        %s2262 = scalar_lea.vmem %s404, 36 [#allocation11]
        %2263 = vst.msk [vmem:[%s2262] ss:$8 sm:$0x3] %vm703, %v2237
        %2264 = vst.msk [vmem:[%s2262] ss:$8 sm:$0x0] %vm703, %v2237
        %s2265 = scalar_lea.vmem %s404, 52 [#allocation11]
        %2266 = vst.msk [vmem:[%s2265] ss:$8 sm:$0x3] %vm703, %v2239
        %2267 = vst.msk [vmem:[%s2265] ss:$8 sm:$0x0] %vm703, %v2239
        %s2268 = scalar_lea.vmem %s404, 68 [#allocation11]
        %2269 = vst.msk [vmem:[%s2268] ss:$8 sm:$0x3] %vm703, %v2241
        %2270 = vst.msk [vmem:[%s2268] ss:$8 sm:$0x0] %vm703, %v2241
        %s2271 = scalar_lea.vmem %s404, 84 [#allocation11]
        %2272 = vst.msk [vmem:[%s2271] ss:$8 sm:$0x3] %vm703, %v2243
        %2273 = vst.msk [vmem:[%s2271] ss:$8 sm:$0x0] %vm703, %v2243
        %s2274 = scalar_lea.vmem %s404, 100 [#allocation11]
        %2275 = vst.msk [vmem:[%s2274] ss:$8 sm:$0x3] %vm703, %v2245
        %2276 = vst.msk [vmem:[%s2274] ss:$8 sm:$0x0] %vm703, %v2245
        %s2277 = scalar_lea.vmem %s404, 116 [#allocation11]
        %2278 = vst.msk [vmem:[%s2277] ss:$8 sm:$0x3] %vm703, %v2247
        %2279 = vst.msk [vmem:[%s2277] ss:$8 sm:$0x0] %vm703, %v2247
        %v2281 = vrot.slane %v2177, 1
        %v2282 = vrot.slane %v2177, 2
        %v2283 = vrot.slane %v2177, 3
        %v2284 = vrot.slane %v2177, 4
        %v2285 = vrot.slane %v2177, 5
        %v2286 = vrot.slane %v2177, 6
        %v2287 = vrot.slane %v2177, 7
        %2295 = vst [vmem:[%s397 + $0x4] sm:$0x1] %v2177
        %2296 = vst [vmem:[%s397 + $0xc] sm:$0x1] %v2281
        %2297 = vst [vmem:[%s397 + $0x14] sm:$0x1] %v2282
        %2298 = vst [vmem:[%s397 + $0x1c] sm:$0x1] %v2283
        %2299 = vst [vmem:[%s397 + $0x24] sm:$0x1] %v2284
        %2300 = vst [vmem:[%s397 + $0x2c] sm:$0x1] %v2285
        %2301 = vst [vmem:[%s397 + $0x34] sm:$0x1] %v2286
        %2302 = vst [vmem:[%s397 + $0x3c] sm:$0x1] %v2287
        %s2303 = scalar_lea.vmem %s337, 640 [#allocation5]
        %v2304 = vld [vmem:[%s2303] sm:$0xf]
        %v2305 = vld [vmem:[%s2303 + $0x4] sm:$0xf]
        %v2306 = vld [vmem:[%s2303 + $0x8] sm:$0xf]
        %v2307 = vld [vmem:[%s2303 + $0xc] sm:$0xf]
        %v2308 = vld [vmem:[%s2303 + $0x10] sm:$0xf]
        %v2309 = vld [vmem:[%s2303 + $0x14] sm:$0xf]
        %v2310 = vld [vmem:[%s2303 + $0x18] sm:$0xf]
        %v2311 = vld [vmem:[%s2303 + $0x1c] sm:$0xf]
        %v2312 = vld [vmem:[%s2303 + $0x20] sm:$0xf]
        %v2313 = vld [vmem:[%s2303 + $0x24] sm:$0xf]
        %v2314 = vld [vmem:[%s2303 + $0x28] sm:$0xf]
        %v2315 = vld [vmem:[%s2303 + $0x2c] sm:$0xf]
        %v2316 = vld [vmem:[%s2303 + $0x30] sm:$0xf]
        %v2317 = vld [vmem:[%s2303 + $0x34] sm:$0xf]
        %v2318 = vld [vmem:[%s2303 + $0x38] sm:$0xf]
        %v2319 = vld [vmem:[%s2303 + $0x3c] sm:$0xf]
        %v2320 = vld [vmem:[%s2303 + $0x40] sm:$0xf]
        %v2321 = vld [vmem:[%s2303 + $0x44] sm:$0xf]
        %v2322 = vld [vmem:[%s2303 + $0x48] sm:$0xf]
        %v2323 = vld [vmem:[%s2303 + $0x4c] sm:$0xf]
        %v2324 = vld [vmem:[%s2303 + $0x50] sm:$0xf]
        %v2325 = vld [vmem:[%s2303 + $0x54] sm:$0xf]
        %v2326 = vld [vmem:[%s2303 + $0x58] sm:$0xf]
        %v2327 = vld [vmem:[%s2303 + $0x5c] sm:$0xf]
        %v2328 = vld [vmem:[%s2303 + $0x60] sm:$0xf]
        %v2329 = vld [vmem:[%s2303 + $0x64] sm:$0xf]
        %v2330 = vld [vmem:[%s2303 + $0x68] sm:$0xf]
        %v2331 = vld [vmem:[%s2303 + $0x6c] sm:$0xf]
        %v2332 = vld [vmem:[%s2303 + $0x70] sm:$0xf]
        %v2333 = vld [vmem:[%s2303 + $0x74] sm:$0xf]
        %v2334 = vld [vmem:[%s2303 + $0x78] sm:$0xf]
        %v2335 = vld [vmem:[%s2303 + $0x7c] sm:$0xf]
        %s2336 = scalar_lea.vmem %s357, 5 [#allocation8]
        %v2337 = vld [vmem:[%s2336] sm:$0x1]
        %s2338 = scalar_lea.vmem %s347, 10 [#allocation7]
        %v2339 = vld [vmem:[%s2338] sm:$0x3]
        %v2340 = vld [vmem:[%s327 + $0x5] sm:$0x1]
        %v2341 = vld [vmem:[%s327 + $0xd] sm:$0x1]
        %v2342 = vld [vmem:[%s327 + $0x15] sm:$0x1]
        %v2343 = vld [vmem:[%s327 + $0x1d] sm:$0x1]
        %v2344 = vld [vmem:[%s327 + $0x25] sm:$0x1]
        %v2345 = vld [vmem:[%s327 + $0x2d] sm:$0x1]
        %v2346 = vld [vmem:[%s327 + $0x35] sm:$0x1]
        %v2347 = vld [vmem:[%s327 + $0x3d] sm:$0x1]
        %v2349 = vperm.slane %v2337, 0
        %v2351 = vsub.f32 %v2340, %v2349
        %v2352 = vsub.f32 %v2341, %v2349
        %v2353 = vsub.f32 %v2342, %v2349
        %v2354 = vsub.f32 %v2343, %v2349
        %v2355 = vsub.f32 %v2344, %v2349
        %v2356 = vsub.f32 %v2345, %v2349
        %v2357 = vsub.f32 %v2346, %v2349
        %v2358 = vsub.f32 %v2347, %v2349
        %v2359 = vpack.c.bf16 %v2351, %v2351
        %v2360 = vpack.c.bf16 %v2352, %v2352
        %v2361 = vpack.c.bf16 %v2353, %v2353
        %v2362 = vpack.c.bf16 %v2354, %v2354
        %v2363 = vpack.c.bf16 %v2355, %v2355
        %v2364 = vpack.c.bf16 %v2356, %v2356
        %v2365 = vpack.c.bf16 %v2357, %v2357
        %v2366 = vpack.c.bf16 %v2358, %v2358
        %v2368 = vperm.slane %v2339, 0
        %v2369 = vperm.slane %v2339, 1
        %v2380 = vunpack.c.l.b16 %v2359
        %v2381 = vunpack.c.l.b16 %v2360
        %v2382 = vunpack.c.l.b16 %v2361
        %v2383 = vunpack.c.l.b16 %v2362
        %v2384 = vunpack.c.l.b16 %v2363
        %v2385 = vunpack.c.l.b16 %v2364
        %v2386 = vunpack.c.l.b16 %v2365
        %v2387 = vunpack.c.l.b16 %v2366
        %v2388 = vrot.slane %v2381, 7
        %v2389 = vsel %vm498, %v2388, %v2380
        %v2390 = vrot.slane %v2382, 6
        %v2391 = vsel %vm501, %v2390, %v2389
        %v2392 = vrot.slane %v2383, 5
        %v2393 = vsel %vm504, %v2392, %v2391
        %v2394 = vrot.slane %v2384, 4
        %v2395 = vsel %vm507, %v2394, %v2393
        %v2396 = vrot.slane %v2385, 3
        %v2397 = vsel %vm510, %v2396, %v2395
        %v2398 = vrot.slane %v2386, 2
        %v2399 = vsel %vm513, %v2398, %v2397
        %v2400 = vrot.slane %v2387, 1
        %v2401 = vsel %vm516, %v2400, %v2399
        %v2402 = vpack.c.b16 %v2401, %v2401
        %v2436 = vunpack.c.l.b16 %v2304
        %v2437 = vunpack.c.l.b16 %v2305
        %v2438 = vunpack.c.l.b16 %v2306
        %v2439 = vunpack.c.l.b16 %v2307
        %v2440 = vunpack.c.l.b16 %v2308
        %v2441 = vunpack.c.l.b16 %v2309
        %v2442 = vunpack.c.l.b16 %v2310
        %v2443 = vunpack.c.l.b16 %v2311
        %v2444 = vunpack.c.l.b16 %v2312
        %v2445 = vunpack.c.l.b16 %v2313
        %v2446 = vunpack.c.l.b16 %v2314
        %v2447 = vunpack.c.l.b16 %v2315
        %v2448 = vunpack.c.l.b16 %v2316
        %v2449 = vunpack.c.l.b16 %v2317
        %v2450 = vunpack.c.l.b16 %v2318
        %v2451 = vunpack.c.l.b16 %v2319
        %v2452 = vunpack.c.l.b16 %v2320
        %v2453 = vunpack.c.l.b16 %v2321
        %v2454 = vunpack.c.l.b16 %v2322
        %v2455 = vunpack.c.l.b16 %v2323
        %v2456 = vunpack.c.l.b16 %v2324
        %v2457 = vunpack.c.l.b16 %v2325
        %v2458 = vunpack.c.l.b16 %v2326
        %v2459 = vunpack.c.l.b16 %v2327
        %v2460 = vunpack.c.l.b16 %v2328
        %v2461 = vunpack.c.l.b16 %v2329
        %v2462 = vunpack.c.l.b16 %v2330
        %v2463 = vunpack.c.l.b16 %v2331
        %v2464 = vunpack.c.l.b16 %v2332
        %v2465 = vunpack.c.l.b16 %v2333
        %v2466 = vunpack.c.l.b16 %v2334
        %v2467 = vunpack.c.l.b16 %v2335
        %v2468 = vpack.c.b16 %v2437, %v2436
        %v2469 = vpack.c.b16 %v2439, %v2438
        %v2470 = vpack.c.b16 %v2441, %v2440
        %v2471 = vpack.c.b16 %v2443, %v2442
        %v2472 = vpack.c.b16 %v2445, %v2444
        %v2473 = vpack.c.b16 %v2447, %v2446
        %v2474 = vpack.c.b16 %v2449, %v2448
        %v2475 = vpack.c.b16 %v2451, %v2450
        %v2476 = vpack.c.b16 %v2453, %v2452
        %v2477 = vpack.c.b16 %v2455, %v2454
        %v2478 = vpack.c.b16 %v2457, %v2456
        %v2479 = vpack.c.b16 %v2459, %v2458
        %v2480 = vpack.c.b16 %v2461, %v2460
        %v2481 = vpack.c.b16 %v2463, %v2462
        %v2482 = vpack.c.b16 %v2465, %v2464
        %v2483 = vpack.c.b16 %v2467, %v2466
        %2500 = vmatpush.bf16.xpose.msra.mxu0 %v2475
        %2501 = vmatpush.bf16.xpose.msra.mxu0 %v2474
        %2502 = vmatpush.bf16.xpose.msra.mxu0 %v2473
        %2503 = vmatpush.bf16.xpose.msra.mxu0 %v2472
        %2504 = vmatpush.bf16.xpose.msra.mxu0 %v2471
        %2505 = vmatpush.bf16.xpose.msra.mxu0 %v2470
        %2506 = vmatpush.bf16.xpose.msra.mxu0 %v2469
        %2507 = vmatpush.bf16.xpose.msra.mxu0 %v2468
        %2508 = vmatmul.bf16.gmra.mxu0 %v2402
        %v2509 = vpop.f32.mrf.mxu0
        %v2510 = vadd.f32 %v2368, %v2509
        %v2511 = vpop.f32.mrf.mxu0
        %2512 = vdwg.mxu0
        %2513 = vmatpush.bf16.xpose.msra.mxu0 %v2483
        %2514 = vmatpush.bf16.xpose.msra.mxu0 %v2482
        %2515 = vmatpush.bf16.xpose.msra.mxu0 %v2481
        %2516 = vmatpush.bf16.xpose.msra.mxu0 %v2480
        %2517 = vmatpush.bf16.xpose.msra.mxu0 %v2479
        %2518 = vmatpush.bf16.xpose.msra.mxu0 %v2478
        %2519 = vmatpush.bf16.xpose.msra.mxu0 %v2477
        %2520 = vmatpush.bf16.xpose.msra.mxu0 %v2476
        %2521 = vmatmul.bf16.gmra.mxu0 %v2402
        %v2522 = vpop.f32.mrf.mxu0
        %v2523 = vadd.f32 %v2369, %v2522
        %v2524 = vpop.f32.mrf.mxu0
        %2525 = vdwg.mxu0
        %v2526 = vmax.f32 %v2510, 0.0
        %v2527 = vmax.f32 %v2523, 0.0
        %v2528 = vpack.c.bf16 %v2526, %v2526
        %v2529 = vpack.c.bf16 %v2527, %v2527
        %2530 = vmatpush.bf16.msra.mxu0 %v2475
        %2531 = vmatpush.bf16.msra.mxu0 %v2474
        %2532 = vmatpush.bf16.msra.mxu0 %v2473
        %2533 = vmatpush.bf16.msra.mxu0 %v2472
        %2534 = vmatpush.bf16.msra.mxu0 %v2471
        %2535 = vmatpush.bf16.msra.mxu0 %v2470
        %2536 = vmatpush.bf16.msra.mxu0 %v2469
        %2537 = vmatpush.bf16.msra.mxu0 %v2468
        %2538 = vmatmul.bf16.gmra.mxu0 %v2528
        %v2539 = vpop.f32.mrf.mxu0
        %v2540 = vadd.f32 %v2349, %v2539
        %v2541 = vpop.f32.mrf.mxu0
        %2542 = vdwg.mxu0
        %2543 = vmatpush.bf16.msra.mxu0 %v2483
        %2544 = vmatpush.bf16.msra.mxu0 %v2482
        %2545 = vmatpush.bf16.msra.mxu0 %v2481
        %2546 = vmatpush.bf16.msra.mxu0 %v2480
        %2547 = vmatpush.bf16.msra.mxu0 %v2479
        %2548 = vmatpush.bf16.msra.mxu0 %v2478
        %2549 = vmatpush.bf16.msra.mxu0 %v2477
        %2550 = vmatpush.bf16.msra.mxu0 %v2476
        %2551 = vmatmul.bf16.gmra.mxu0 %v2529
        %v2552 = vpop.f32.mrf.mxu0
        %v2553 = vadd.f32 %v2540, %v2552
        %v2554 = vpop.f32.mrf.mxu0
        %2555 = vdwg.mxu0
        %v2558 = vrot.slane %v2523, 7
        %v2559 = vsel %vm675, %v2510, %v2558
        %v2560 = vsel %vm498, %v2510, %v2558
        %v2561 = vrot.slane %v2560, 1
        %v2562 = vsel %vm501, %v2510, %v2558
        %v2563 = vrot.slane %v2562, 2
        %v2564 = vsel %vm504, %v2510, %v2558
        %v2565 = vrot.slane %v2564, 3
        %v2566 = vsel %vm507, %v2510, %v2558
        %v2567 = vrot.slane %v2566, 4
        %v2568 = vsel %vm510, %v2510, %v2558
        %v2569 = vrot.slane %v2568, 5
        %v2570 = vsel %vm513, %v2510, %v2558
        %v2571 = vrot.slane %v2570, 6
        %v2572 = vsel %vm689, %v2558, %v2510
        %v2573 = vrot.slane %v2572, 7
        %s2582 = scalar_lea.vmem %s411, 5 [#allocation13]
        %2583 = vst.msk [vmem:[%s2582] ss:$8 sm:$0x3] %vm703, %v2559
        %2584 = vst.msk [vmem:[%s2582] ss:$8 sm:$0x0] %vm703, %v2559
        %s2585 = scalar_lea.vmem %s411, 21 [#allocation13]
        %2586 = vst.msk [vmem:[%s2585] ss:$8 sm:$0x3] %vm703, %v2561
        %2587 = vst.msk [vmem:[%s2585] ss:$8 sm:$0x0] %vm703, %v2561
        %s2588 = scalar_lea.vmem %s411, 37 [#allocation13]
        %2589 = vst.msk [vmem:[%s2588] ss:$8 sm:$0x3] %vm703, %v2563
        %2590 = vst.msk [vmem:[%s2588] ss:$8 sm:$0x0] %vm703, %v2563
        %s2591 = scalar_lea.vmem %s411, 53 [#allocation13]
        %2592 = vst.msk [vmem:[%s2591] ss:$8 sm:$0x3] %vm703, %v2565
        %2593 = vst.msk [vmem:[%s2591] ss:$8 sm:$0x0] %vm703, %v2565
        %s2594 = scalar_lea.vmem %s411, 69 [#allocation13]
        %2595 = vst.msk [vmem:[%s2594] ss:$8 sm:$0x3] %vm703, %v2567
        %2596 = vst.msk [vmem:[%s2594] ss:$8 sm:$0x0] %vm703, %v2567
        %s2597 = scalar_lea.vmem %s411, 85 [#allocation13]
        %2598 = vst.msk [vmem:[%s2597] ss:$8 sm:$0x3] %vm703, %v2569
        %2599 = vst.msk [vmem:[%s2597] ss:$8 sm:$0x0] %vm703, %v2569
        %s2600 = scalar_lea.vmem %s411, 101 [#allocation13]
        %2601 = vst.msk [vmem:[%s2600] ss:$8 sm:$0x3] %vm703, %v2571
        %2602 = vst.msk [vmem:[%s2600] ss:$8 sm:$0x0] %vm703, %v2571
        %s2603 = scalar_lea.vmem %s411, 117 [#allocation13]
        %2604 = vst.msk [vmem:[%s2603] ss:$8 sm:$0x3] %vm703, %v2573
        %2605 = vst.msk [vmem:[%s2603] ss:$8 sm:$0x0] %vm703, %v2573
        %v2608 = vrot.slane %v2527, 7
        %v2609 = vsel %vm675, %v2526, %v2608
        %v2610 = vsel %vm498, %v2526, %v2608
        %v2611 = vrot.slane %v2610, 1
        %v2612 = vsel %vm501, %v2526, %v2608
        %v2613 = vrot.slane %v2612, 2
        %v2614 = vsel %vm504, %v2526, %v2608
        %v2615 = vrot.slane %v2614, 3
        %v2616 = vsel %vm507, %v2526, %v2608
        %v2617 = vrot.slane %v2616, 4
        %v2618 = vsel %vm510, %v2526, %v2608
        %v2619 = vrot.slane %v2618, 5
        %v2620 = vsel %vm513, %v2526, %v2608
        %v2621 = vrot.slane %v2620, 6
        %v2622 = vsel %vm689, %v2608, %v2526
        %v2623 = vrot.slane %v2622, 7
        %s2632 = scalar_lea.vmem %s404, 5 [#allocation11]
        %2633 = vst.msk [vmem:[%s2632] ss:$8 sm:$0x3] %vm703, %v2609
        %2634 = vst.msk [vmem:[%s2632] ss:$8 sm:$0x0] %vm703, %v2609
        %s2635 = scalar_lea.vmem %s404, 21 [#allocation11]
        %2636 = vst.msk [vmem:[%s2635] ss:$8 sm:$0x3] %vm703, %v2611
        %2637 = vst.msk [vmem:[%s2635] ss:$8 sm:$0x0] %vm703, %v2611
        %s2638 = scalar_lea.vmem %s404, 37 [#allocation11]
        %2639 = vst.msk [vmem:[%s2638] ss:$8 sm:$0x3] %vm703, %v2613
        %2640 = vst.msk [vmem:[%s2638] ss:$8 sm:$0x0] %vm703, %v2613
        %s2641 = scalar_lea.vmem %s404, 53 [#allocation11]
        %2642 = vst.msk [vmem:[%s2641] ss:$8 sm:$0x3] %vm703, %v2615
        %2643 = vst.msk [vmem:[%s2641] ss:$8 sm:$0x0] %vm703, %v2615
        %s2644 = scalar_lea.vmem %s404, 69 [#allocation11]
        %2645 = vst.msk [vmem:[%s2644] ss:$8 sm:$0x3] %vm703, %v2617
        %2646 = vst.msk [vmem:[%s2644] ss:$8 sm:$0x0] %vm703, %v2617
        %s2647 = scalar_lea.vmem %s404, 85 [#allocation11]
        %2648 = vst.msk [vmem:[%s2647] ss:$8 sm:$0x3] %vm703, %v2619
        %2649 = vst.msk [vmem:[%s2647] ss:$8 sm:$0x0] %vm703, %v2619
        %s2650 = scalar_lea.vmem %s404, 101 [#allocation11]
        %2651 = vst.msk [vmem:[%s2650] ss:$8 sm:$0x3] %vm703, %v2621
        %2652 = vst.msk [vmem:[%s2650] ss:$8 sm:$0x0] %vm703, %v2621
        %s2653 = scalar_lea.vmem %s404, 117 [#allocation11]
        %2654 = vst.msk [vmem:[%s2653] ss:$8 sm:$0x3] %vm703, %v2623
        %2655 = vst.msk [vmem:[%s2653] ss:$8 sm:$0x0] %vm703, %v2623
        %v2657 = vrot.slane %v2553, 1
        %v2658 = vrot.slane %v2553, 2
        %v2659 = vrot.slane %v2553, 3
        %v2660 = vrot.slane %v2553, 4
        %v2661 = vrot.slane %v2553, 5
        %v2662 = vrot.slane %v2553, 6
        %v2663 = vrot.slane %v2553, 7
        %2671 = vst [vmem:[%s397 + $0x5] sm:$0x1] %v2553
        %2672 = vst [vmem:[%s397 + $0xd] sm:$0x1] %v2657
        %2673 = vst [vmem:[%s397 + $0x15] sm:$0x1] %v2658
        %2674 = vst [vmem:[%s397 + $0x1d] sm:$0x1] %v2659
        %2675 = vst [vmem:[%s397 + $0x25] sm:$0x1] %v2660
        %2676 = vst [vmem:[%s397 + $0x2d] sm:$0x1] %v2661
        %2677 = vst [vmem:[%s397 + $0x35] sm:$0x1] %v2662
        %2678 = vst [vmem:[%s397 + $0x3d] sm:$0x1] %v2663
        %s2679 = scalar_lea.vmem %s337, 768 [#allocation5]
        %v2680 = vld [vmem:[%s2679] sm:$0xf]
        %v2681 = vld [vmem:[%s2679 + $0x4] sm:$0xf]
        %v2682 = vld [vmem:[%s2679 + $0x8] sm:$0xf]
        %v2683 = vld [vmem:[%s2679 + $0xc] sm:$0xf]
        %v2684 = vld [vmem:[%s2679 + $0x10] sm:$0xf]
        %v2685 = vld [vmem:[%s2679 + $0x14] sm:$0xf]
        %v2686 = vld [vmem:[%s2679 + $0x18] sm:$0xf]
        %v2687 = vld [vmem:[%s2679 + $0x1c] sm:$0xf]
        %v2688 = vld [vmem:[%s2679 + $0x20] sm:$0xf]
        %v2689 = vld [vmem:[%s2679 + $0x24] sm:$0xf]
        %v2690 = vld [vmem:[%s2679 + $0x28] sm:$0xf]
        %v2691 = vld [vmem:[%s2679 + $0x2c] sm:$0xf]
        %v2692 = vld [vmem:[%s2679 + $0x30] sm:$0xf]
        %v2693 = vld [vmem:[%s2679 + $0x34] sm:$0xf]
        %v2694 = vld [vmem:[%s2679 + $0x38] sm:$0xf]
        %v2695 = vld [vmem:[%s2679 + $0x3c] sm:$0xf]
        %v2696 = vld [vmem:[%s2679 + $0x40] sm:$0xf]
        %v2697 = vld [vmem:[%s2679 + $0x44] sm:$0xf]
        %v2698 = vld [vmem:[%s2679 + $0x48] sm:$0xf]
        %v2699 = vld [vmem:[%s2679 + $0x4c] sm:$0xf]
        %v2700 = vld [vmem:[%s2679 + $0x50] sm:$0xf]
        %v2701 = vld [vmem:[%s2679 + $0x54] sm:$0xf]
        %v2702 = vld [vmem:[%s2679 + $0x58] sm:$0xf]
        %v2703 = vld [vmem:[%s2679 + $0x5c] sm:$0xf]
        %v2704 = vld [vmem:[%s2679 + $0x60] sm:$0xf]
        %v2705 = vld [vmem:[%s2679 + $0x64] sm:$0xf]
        %v2706 = vld [vmem:[%s2679 + $0x68] sm:$0xf]
        %v2707 = vld [vmem:[%s2679 + $0x6c] sm:$0xf]
        %v2708 = vld [vmem:[%s2679 + $0x70] sm:$0xf]
        %v2709 = vld [vmem:[%s2679 + $0x74] sm:$0xf]
        %v2710 = vld [vmem:[%s2679 + $0x78] sm:$0xf]
        %v2711 = vld [vmem:[%s2679 + $0x7c] sm:$0xf]
        %s2712 = scalar_lea.vmem %s357, 6 [#allocation8]
        %v2713 = vld [vmem:[%s2712] sm:$0x1]
        %s2714 = scalar_lea.vmem %s347, 12 [#allocation7]
        %v2715 = vld [vmem:[%s2714] sm:$0x3]
        %v2716 = vld [vmem:[%s327 + $0x6] sm:$0x1]
        %v2717 = vld [vmem:[%s327 + $0xe] sm:$0x1]
        %v2718 = vld [vmem:[%s327 + $0x16] sm:$0x1]
        %v2719 = vld [vmem:[%s327 + $0x1e] sm:$0x1]
        %v2720 = vld [vmem:[%s327 + $0x26] sm:$0x1]
        %v2721 = vld [vmem:[%s327 + $0x2e] sm:$0x1]
        %v2722 = vld [vmem:[%s327 + $0x36] sm:$0x1]
        %v2723 = vld [vmem:[%s327 + $0x3e] sm:$0x1]
        %v2725 = vperm.slane %v2713, 0
        %v2727 = vsub.f32 %v2716, %v2725
        %v2728 = vsub.f32 %v2717, %v2725
        %v2729 = vsub.f32 %v2718, %v2725
        %v2730 = vsub.f32 %v2719, %v2725
        %v2731 = vsub.f32 %v2720, %v2725
        %v2732 = vsub.f32 %v2721, %v2725
        %v2733 = vsub.f32 %v2722, %v2725
        %v2734 = vsub.f32 %v2723, %v2725
        %v2735 = vpack.c.bf16 %v2727, %v2727
        %v2736 = vpack.c.bf16 %v2728, %v2728
        %v2737 = vpack.c.bf16 %v2729, %v2729
        %v2738 = vpack.c.bf16 %v2730, %v2730
        %v2739 = vpack.c.bf16 %v2731, %v2731
        %v2740 = vpack.c.bf16 %v2732, %v2732
        %v2741 = vpack.c.bf16 %v2733, %v2733
        %v2742 = vpack.c.bf16 %v2734, %v2734
        %v2744 = vperm.slane %v2715, 0
        %v2745 = vperm.slane %v2715, 1
        %v2756 = vunpack.c.l.b16 %v2735
        %v2757 = vunpack.c.l.b16 %v2736
        %v2758 = vunpack.c.l.b16 %v2737
        %v2759 = vunpack.c.l.b16 %v2738
        %v2760 = vunpack.c.l.b16 %v2739
        %v2761 = vunpack.c.l.b16 %v2740
        %v2762 = vunpack.c.l.b16 %v2741
        %v2763 = vunpack.c.l.b16 %v2742
        %v2764 = vrot.slane %v2757, 7
        %v2765 = vsel %vm498, %v2764, %v2756
        %v2766 = vrot.slane %v2758, 6
        %v2767 = vsel %vm501, %v2766, %v2765
        %v2768 = vrot.slane %v2759, 5
        %v2769 = vsel %vm504, %v2768, %v2767
        %v2770 = vrot.slane %v2760, 4
        %v2771 = vsel %vm507, %v2770, %v2769
        %v2772 = vrot.slane %v2761, 3
        %v2773 = vsel %vm510, %v2772, %v2771
        %v2774 = vrot.slane %v2762, 2
        %v2775 = vsel %vm513, %v2774, %v2773
        %v2776 = vrot.slane %v2763, 1
        %v2777 = vsel %vm516, %v2776, %v2775
        %v2778 = vpack.c.b16 %v2777, %v2777
        %v2812 = vunpack.c.l.b16 %v2680
        %v2813 = vunpack.c.l.b16 %v2681
        %v2814 = vunpack.c.l.b16 %v2682
        %v2815 = vunpack.c.l.b16 %v2683
        %v2816 = vunpack.c.l.b16 %v2684
        %v2817 = vunpack.c.l.b16 %v2685
        %v2818 = vunpack.c.l.b16 %v2686
        %v2819 = vunpack.c.l.b16 %v2687
        %v2820 = vunpack.c.l.b16 %v2688
        %v2821 = vunpack.c.l.b16 %v2689
        %v2822 = vunpack.c.l.b16 %v2690
        %v2823 = vunpack.c.l.b16 %v2691
        %v2824 = vunpack.c.l.b16 %v2692
        %v2825 = vunpack.c.l.b16 %v2693
        %v2826 = vunpack.c.l.b16 %v2694
        %v2827 = vunpack.c.l.b16 %v2695
        %v2828 = vunpack.c.l.b16 %v2696
        %v2829 = vunpack.c.l.b16 %v2697
        %v2830 = vunpack.c.l.b16 %v2698
        %v2831 = vunpack.c.l.b16 %v2699
        %v2832 = vunpack.c.l.b16 %v2700
        %v2833 = vunpack.c.l.b16 %v2701
        %v2834 = vunpack.c.l.b16 %v2702
        %v2835 = vunpack.c.l.b16 %v2703
        %v2836 = vunpack.c.l.b16 %v2704
        %v2837 = vunpack.c.l.b16 %v2705
        %v2838 = vunpack.c.l.b16 %v2706
        %v2839 = vunpack.c.l.b16 %v2707
        %v2840 = vunpack.c.l.b16 %v2708
        %v2841 = vunpack.c.l.b16 %v2709
        %v2842 = vunpack.c.l.b16 %v2710
        %v2843 = vunpack.c.l.b16 %v2711
        %v2844 = vpack.c.b16 %v2813, %v2812
        %v2845 = vpack.c.b16 %v2815, %v2814
        %v2846 = vpack.c.b16 %v2817, %v2816
        %v2847 = vpack.c.b16 %v2819, %v2818
        %v2848 = vpack.c.b16 %v2821, %v2820
        %v2849 = vpack.c.b16 %v2823, %v2822
        %v2850 = vpack.c.b16 %v2825, %v2824
        %v2851 = vpack.c.b16 %v2827, %v2826
        %v2852 = vpack.c.b16 %v2829, %v2828
        %v2853 = vpack.c.b16 %v2831, %v2830
        %v2854 = vpack.c.b16 %v2833, %v2832
        %v2855 = vpack.c.b16 %v2835, %v2834
        %v2856 = vpack.c.b16 %v2837, %v2836
        %v2857 = vpack.c.b16 %v2839, %v2838
        %v2858 = vpack.c.b16 %v2841, %v2840
        %v2859 = vpack.c.b16 %v2843, %v2842
        %2876 = vmatpush.bf16.xpose.msra.mxu0 %v2851
        %2877 = vmatpush.bf16.xpose.msra.mxu0 %v2850
        %2878 = vmatpush.bf16.xpose.msra.mxu0 %v2849
        %2879 = vmatpush.bf16.xpose.msra.mxu0 %v2848
        %2880 = vmatpush.bf16.xpose.msra.mxu0 %v2847
        %2881 = vmatpush.bf16.xpose.msra.mxu0 %v2846
        %2882 = vmatpush.bf16.xpose.msra.mxu0 %v2845
        %2883 = vmatpush.bf16.xpose.msra.mxu0 %v2844
        %2884 = vmatmul.bf16.gmra.mxu0 %v2778
        %v2885 = vpop.f32.mrf.mxu0
        %v2886 = vadd.f32 %v2744, %v2885
        %v2887 = vpop.f32.mrf.mxu0
        %2888 = vdwg.mxu0
        %2889 = vmatpush.bf16.xpose.msra.mxu0 %v2859
        %2890 = vmatpush.bf16.xpose.msra.mxu0 %v2858
        %2891 = vmatpush.bf16.xpose.msra.mxu0 %v2857
        %2892 = vmatpush.bf16.xpose.msra.mxu0 %v2856
        %2893 = vmatpush.bf16.xpose.msra.mxu0 %v2855
        %2894 = vmatpush.bf16.xpose.msra.mxu0 %v2854
        %2895 = vmatpush.bf16.xpose.msra.mxu0 %v2853
        %2896 = vmatpush.bf16.xpose.msra.mxu0 %v2852
        %2897 = vmatmul.bf16.gmra.mxu0 %v2778
        %v2898 = vpop.f32.mrf.mxu0
        %v2899 = vadd.f32 %v2745, %v2898
        %v2900 = vpop.f32.mrf.mxu0
        %2901 = vdwg.mxu0
        %v2902 = vmax.f32 %v2886, 0.0
        %v2903 = vmax.f32 %v2899, 0.0
        %v2904 = vpack.c.bf16 %v2902, %v2902
        %v2905 = vpack.c.bf16 %v2903, %v2903
        %2906 = vmatpush.bf16.msra.mxu0 %v2851
        %2907 = vmatpush.bf16.msra.mxu0 %v2850
        %2908 = vmatpush.bf16.msra.mxu0 %v2849
        %2909 = vmatpush.bf16.msra.mxu0 %v2848
        %2910 = vmatpush.bf16.msra.mxu0 %v2847
        %2911 = vmatpush.bf16.msra.mxu0 %v2846
        %2912 = vmatpush.bf16.msra.mxu0 %v2845
        %2913 = vmatpush.bf16.msra.mxu0 %v2844
        %2914 = vmatmul.bf16.gmra.mxu0 %v2904
        %v2915 = vpop.f32.mrf.mxu0
        %v2916 = vadd.f32 %v2725, %v2915
        %v2917 = vpop.f32.mrf.mxu0
        %2918 = vdwg.mxu0
        %2919 = vmatpush.bf16.msra.mxu0 %v2859
        %2920 = vmatpush.bf16.msra.mxu0 %v2858
        %2921 = vmatpush.bf16.msra.mxu0 %v2857
        %2922 = vmatpush.bf16.msra.mxu0 %v2856
        %2923 = vmatpush.bf16.msra.mxu0 %v2855
        %2924 = vmatpush.bf16.msra.mxu0 %v2854
        %2925 = vmatpush.bf16.msra.mxu0 %v2853
        %2926 = vmatpush.bf16.msra.mxu0 %v2852
        %2927 = vmatmul.bf16.gmra.mxu0 %v2905
        %v2928 = vpop.f32.mrf.mxu0
        %v2929 = vadd.f32 %v2916, %v2928
        %v2930 = vpop.f32.mrf.mxu0
        %2931 = vdwg.mxu0
        %v2934 = vrot.slane %v2899, 7
        %v2935 = vsel %vm675, %v2886, %v2934
        %v2936 = vsel %vm498, %v2886, %v2934
        %v2937 = vrot.slane %v2936, 1
        %v2938 = vsel %vm501, %v2886, %v2934
        %v2939 = vrot.slane %v2938, 2
        %v2940 = vsel %vm504, %v2886, %v2934
        %v2941 = vrot.slane %v2940, 3
        %v2942 = vsel %vm507, %v2886, %v2934
        %v2943 = vrot.slane %v2942, 4
        %v2944 = vsel %vm510, %v2886, %v2934
        %v2945 = vrot.slane %v2944, 5
        %v2946 = vsel %vm513, %v2886, %v2934
        %v2947 = vrot.slane %v2946, 6
        %v2948 = vsel %vm689, %v2934, %v2886
        %v2949 = vrot.slane %v2948, 7
        %s2958 = scalar_lea.vmem %s411, 6 [#allocation13]
        %2959 = vst.msk [vmem:[%s2958] ss:$8 sm:$0x3] %vm703, %v2935
        %2960 = vst.msk [vmem:[%s2958] ss:$8 sm:$0x0] %vm703, %v2935
        %s2961 = scalar_lea.vmem %s411, 22 [#allocation13]
        %2962 = vst.msk [vmem:[%s2961] ss:$8 sm:$0x3] %vm703, %v2937
        %2963 = vst.msk [vmem:[%s2961] ss:$8 sm:$0x0] %vm703, %v2937
        %s2964 = scalar_lea.vmem %s411, 38 [#allocation13]
        %2965 = vst.msk [vmem:[%s2964] ss:$8 sm:$0x3] %vm703, %v2939
        %2966 = vst.msk [vmem:[%s2964] ss:$8 sm:$0x0] %vm703, %v2939
        %s2967 = scalar_lea.vmem %s411, 54 [#allocation13]
        %2968 = vst.msk [vmem:[%s2967] ss:$8 sm:$0x3] %vm703, %v2941
        %2969 = vst.msk [vmem:[%s2967] ss:$8 sm:$0x0] %vm703, %v2941
        %s2970 = scalar_lea.vmem %s411, 70 [#allocation13]
        %2971 = vst.msk [vmem:[%s2970] ss:$8 sm:$0x3] %vm703, %v2943
        %2972 = vst.msk [vmem:[%s2970] ss:$8 sm:$0x0] %vm703, %v2943
        %s2973 = scalar_lea.vmem %s411, 86 [#allocation13]
        %2974 = vst.msk [vmem:[%s2973] ss:$8 sm:$0x3] %vm703, %v2945
        %2975 = vst.msk [vmem:[%s2973] ss:$8 sm:$0x0] %vm703, %v2945
        %s2976 = scalar_lea.vmem %s411, 102 [#allocation13]
        %2977 = vst.msk [vmem:[%s2976] ss:$8 sm:$0x3] %vm703, %v2947
        %2978 = vst.msk [vmem:[%s2976] ss:$8 sm:$0x0] %vm703, %v2947
        %s2979 = scalar_lea.vmem %s411, 118 [#allocation13]
        %2980 = vst.msk [vmem:[%s2979] ss:$8 sm:$0x3] %vm703, %v2949
        %2981 = vst.msk [vmem:[%s2979] ss:$8 sm:$0x0] %vm703, %v2949
        %v2984 = vrot.slane %v2903, 7
        %v2985 = vsel %vm675, %v2902, %v2984
        %v2986 = vsel %vm498, %v2902, %v2984
        %v2987 = vrot.slane %v2986, 1
        %v2988 = vsel %vm501, %v2902, %v2984
        %v2989 = vrot.slane %v2988, 2
        %v2990 = vsel %vm504, %v2902, %v2984
        %v2991 = vrot.slane %v2990, 3
        %v2992 = vsel %vm507, %v2902, %v2984
        %v2993 = vrot.slane %v2992, 4
        %v2994 = vsel %vm510, %v2902, %v2984
        %v2995 = vrot.slane %v2994, 5
        %v2996 = vsel %vm513, %v2902, %v2984
        %v2997 = vrot.slane %v2996, 6
        %v2998 = vsel %vm689, %v2984, %v2902
        %v2999 = vrot.slane %v2998, 7
        %s3008 = scalar_lea.vmem %s404, 6 [#allocation11]
        %3009 = vst.msk [vmem:[%s3008] ss:$8 sm:$0x3] %vm703, %v2985
        %3010 = vst.msk [vmem:[%s3008] ss:$8 sm:$0x0] %vm703, %v2985
        %s3011 = scalar_lea.vmem %s404, 22 [#allocation11]
        %3012 = vst.msk [vmem:[%s3011] ss:$8 sm:$0x3] %vm703, %v2987
        %3013 = vst.msk [vmem:[%s3011] ss:$8 sm:$0x0] %vm703, %v2987
        %s3014 = scalar_lea.vmem %s404, 38 [#allocation11]
        %3015 = vst.msk [vmem:[%s3014] ss:$8 sm:$0x3] %vm703, %v2989
        %3016 = vst.msk [vmem:[%s3014] ss:$8 sm:$0x0] %vm703, %v2989
        %s3017 = scalar_lea.vmem %s404, 54 [#allocation11]
        %3018 = vst.msk [vmem:[%s3017] ss:$8 sm:$0x3] %vm703, %v2991
        %3019 = vst.msk [vmem:[%s3017] ss:$8 sm:$0x0] %vm703, %v2991
        %s3020 = scalar_lea.vmem %s404, 70 [#allocation11]
        %3021 = vst.msk [vmem:[%s3020] ss:$8 sm:$0x3] %vm703, %v2993
        %3022 = vst.msk [vmem:[%s3020] ss:$8 sm:$0x0] %vm703, %v2993
        %s3023 = scalar_lea.vmem %s404, 86 [#allocation11]
        %3024 = vst.msk [vmem:[%s3023] ss:$8 sm:$0x3] %vm703, %v2995
        %3025 = vst.msk [vmem:[%s3023] ss:$8 sm:$0x0] %vm703, %v2995
        %s3026 = scalar_lea.vmem %s404, 102 [#allocation11]
        %3027 = vst.msk [vmem:[%s3026] ss:$8 sm:$0x3] %vm703, %v2997
        %3028 = vst.msk [vmem:[%s3026] ss:$8 sm:$0x0] %vm703, %v2997
        %s3029 = scalar_lea.vmem %s404, 118 [#allocation11]
        %3030 = vst.msk [vmem:[%s3029] ss:$8 sm:$0x3] %vm703, %v2999
        %3031 = vst.msk [vmem:[%s3029] ss:$8 sm:$0x0] %vm703, %v2999
        %v3033 = vrot.slane %v2929, 1
        %v3034 = vrot.slane %v2929, 2
        %v3035 = vrot.slane %v2929, 3
        %v3036 = vrot.slane %v2929, 4
        %v3037 = vrot.slane %v2929, 5
        %v3038 = vrot.slane %v2929, 6
        %v3039 = vrot.slane %v2929, 7
        %3047 = vst [vmem:[%s397 + $0x6] sm:$0x1] %v2929
        %3048 = vst [vmem:[%s397 + $0xe] sm:$0x1] %v3033
        %3049 = vst [vmem:[%s397 + $0x16] sm:$0x1] %v3034
        %3050 = vst [vmem:[%s397 + $0x1e] sm:$0x1] %v3035
        %3051 = vst [vmem:[%s397 + $0x26] sm:$0x1] %v3036
        %3052 = vst [vmem:[%s397 + $0x2e] sm:$0x1] %v3037
        %3053 = vst [vmem:[%s397 + $0x36] sm:$0x1] %v3038
        %3054 = vst [vmem:[%s397 + $0x3e] sm:$0x1] %v3039
        %s3055 = scalar_lea.vmem %s337, 896 [#allocation5]
        %v3056 = vld [vmem:[%s3055] sm:$0xf]
        %v3057 = vld [vmem:[%s3055 + $0x4] sm:$0xf]
        %v3058 = vld [vmem:[%s3055 + $0x8] sm:$0xf]
        %v3059 = vld [vmem:[%s3055 + $0xc] sm:$0xf]
        %v3060 = vld [vmem:[%s3055 + $0x10] sm:$0xf]
        %v3061 = vld [vmem:[%s3055 + $0x14] sm:$0xf]
        %v3062 = vld [vmem:[%s3055 + $0x18] sm:$0xf]
        %v3063 = vld [vmem:[%s3055 + $0x1c] sm:$0xf]
        %v3064 = vld [vmem:[%s3055 + $0x20] sm:$0xf]
        %v3065 = vld [vmem:[%s3055 + $0x24] sm:$0xf]
        %v3066 = vld [vmem:[%s3055 + $0x28] sm:$0xf]
        %v3067 = vld [vmem:[%s3055 + $0x2c] sm:$0xf]
        %v3068 = vld [vmem:[%s3055 + $0x30] sm:$0xf]
        %v3069 = vld [vmem:[%s3055 + $0x34] sm:$0xf]
        %v3070 = vld [vmem:[%s3055 + $0x38] sm:$0xf]
        %v3071 = vld [vmem:[%s3055 + $0x3c] sm:$0xf]
        %v3072 = vld [vmem:[%s3055 + $0x40] sm:$0xf]
        %v3073 = vld [vmem:[%s3055 + $0x44] sm:$0xf]
        %v3074 = vld [vmem:[%s3055 + $0x48] sm:$0xf]
        %v3075 = vld [vmem:[%s3055 + $0x4c] sm:$0xf]
        %v3076 = vld [vmem:[%s3055 + $0x50] sm:$0xf]
        %v3077 = vld [vmem:[%s3055 + $0x54] sm:$0xf]
        %v3078 = vld [vmem:[%s3055 + $0x58] sm:$0xf]
        %v3079 = vld [vmem:[%s3055 + $0x5c] sm:$0xf]
        %v3080 = vld [vmem:[%s3055 + $0x60] sm:$0xf]
        %v3081 = vld [vmem:[%s3055 + $0x64] sm:$0xf]
        %v3082 = vld [vmem:[%s3055 + $0x68] sm:$0xf]
        %v3083 = vld [vmem:[%s3055 + $0x6c] sm:$0xf]
        %v3084 = vld [vmem:[%s3055 + $0x70] sm:$0xf]
        %v3085 = vld [vmem:[%s3055 + $0x74] sm:$0xf]
        %v3086 = vld [vmem:[%s3055 + $0x78] sm:$0xf]
        %v3087 = vld [vmem:[%s3055 + $0x7c] sm:$0xf]
        %s3088 = scalar_lea.vmem %s357, 7 [#allocation8]
        %v3089 = vld [vmem:[%s3088] sm:$0x1]
        %s3090 = scalar_lea.vmem %s347, 14 [#allocation7]
        %v3091 = vld [vmem:[%s3090] sm:$0x3]
        %v3092 = vld [vmem:[%s327 + $0x7] sm:$0x1]
        %v3093 = vld [vmem:[%s327 + $0xf] sm:$0x1]
        %v3094 = vld [vmem:[%s327 + $0x17] sm:$0x1]
        %v3095 = vld [vmem:[%s327 + $0x1f] sm:$0x1]
        %v3096 = vld [vmem:[%s327 + $0x27] sm:$0x1]
        %v3097 = vld [vmem:[%s327 + $0x2f] sm:$0x1]
        %v3098 = vld [vmem:[%s327 + $0x37] sm:$0x1]
        %v3099 = vld [vmem:[%s327 + $0x3f] sm:$0x1]
        %v3101 = vperm.slane %v3089, 0
        %v3103 = vsub.f32 %v3092, %v3101
        %v3104 = vsub.f32 %v3093, %v3101
        %v3105 = vsub.f32 %v3094, %v3101
        %v3106 = vsub.f32 %v3095, %v3101
        %v3107 = vsub.f32 %v3096, %v3101
        %v3108 = vsub.f32 %v3097, %v3101
        %v3109 = vsub.f32 %v3098, %v3101
        %v3110 = vsub.f32 %v3099, %v3101
        %v3111 = vpack.c.bf16 %v3103, %v3103
        %v3112 = vpack.c.bf16 %v3104, %v3104
        %v3113 = vpack.c.bf16 %v3105, %v3105
        %v3114 = vpack.c.bf16 %v3106, %v3106
        %v3115 = vpack.c.bf16 %v3107, %v3107
        %v3116 = vpack.c.bf16 %v3108, %v3108
        %v3117 = vpack.c.bf16 %v3109, %v3109
        %v3118 = vpack.c.bf16 %v3110, %v3110
        %v3120 = vperm.slane %v3091, 0
        %v3121 = vperm.slane %v3091, 1
        %v3132 = vunpack.c.l.b16 %v3111
        %v3133 = vunpack.c.l.b16 %v3112
        %v3134 = vunpack.c.l.b16 %v3113
        %v3135 = vunpack.c.l.b16 %v3114
        %v3136 = vunpack.c.l.b16 %v3115
        %v3137 = vunpack.c.l.b16 %v3116
        %v3138 = vunpack.c.l.b16 %v3117
        %v3139 = vunpack.c.l.b16 %v3118
        %v3140 = vrot.slane %v3133, 7
        %v3141 = vsel %vm498, %v3140, %v3132
        %v3142 = vrot.slane %v3134, 6
        %v3143 = vsel %vm501, %v3142, %v3141
        %v3144 = vrot.slane %v3135, 5
        %v3145 = vsel %vm504, %v3144, %v3143
        %v3146 = vrot.slane %v3136, 4
        %v3147 = vsel %vm507, %v3146, %v3145
        %v3148 = vrot.slane %v3137, 3
        %v3149 = vsel %vm510, %v3148, %v3147
        %v3150 = vrot.slane %v3138, 2
        %v3151 = vsel %vm513, %v3150, %v3149
        %v3152 = vrot.slane %v3139, 1
        %v3153 = vsel %vm516, %v3152, %v3151
        %v3154 = vpack.c.b16 %v3153, %v3153
        %v3188 = vunpack.c.l.b16 %v3056
        %v3189 = vunpack.c.l.b16 %v3057
        %v3190 = vunpack.c.l.b16 %v3058
        %v3191 = vunpack.c.l.b16 %v3059
        %v3192 = vunpack.c.l.b16 %v3060
        %v3193 = vunpack.c.l.b16 %v3061
        %v3194 = vunpack.c.l.b16 %v3062
        %v3195 = vunpack.c.l.b16 %v3063
        %v3196 = vunpack.c.l.b16 %v3064
        %v3197 = vunpack.c.l.b16 %v3065
        %v3198 = vunpack.c.l.b16 %v3066
        %v3199 = vunpack.c.l.b16 %v3067
        %v3200 = vunpack.c.l.b16 %v3068
        %v3201 = vunpack.c.l.b16 %v3069
        %v3202 = vunpack.c.l.b16 %v3070
        %v3203 = vunpack.c.l.b16 %v3071
        %v3204 = vunpack.c.l.b16 %v3072
        %v3205 = vunpack.c.l.b16 %v3073
        %v3206 = vunpack.c.l.b16 %v3074
        %v3207 = vunpack.c.l.b16 %v3075
        %v3208 = vunpack.c.l.b16 %v3076
        %v3209 = vunpack.c.l.b16 %v3077
        %v3210 = vunpack.c.l.b16 %v3078
        %v3211 = vunpack.c.l.b16 %v3079
        %v3212 = vunpack.c.l.b16 %v3080
        %v3213 = vunpack.c.l.b16 %v3081
        %v3214 = vunpack.c.l.b16 %v3082
        %v3215 = vunpack.c.l.b16 %v3083
        %v3216 = vunpack.c.l.b16 %v3084
        %v3217 = vunpack.c.l.b16 %v3085
        %v3218 = vunpack.c.l.b16 %v3086
        %v3219 = vunpack.c.l.b16 %v3087
        %v3220 = vpack.c.b16 %v3189, %v3188
        %v3221 = vpack.c.b16 %v3191, %v3190
        %v3222 = vpack.c.b16 %v3193, %v3192
        %v3223 = vpack.c.b16 %v3195, %v3194
        %v3224 = vpack.c.b16 %v3197, %v3196
        %v3225 = vpack.c.b16 %v3199, %v3198
        %v3226 = vpack.c.b16 %v3201, %v3200
        %v3227 = vpack.c.b16 %v3203, %v3202
        %v3228 = vpack.c.b16 %v3205, %v3204
        %v3229 = vpack.c.b16 %v3207, %v3206
        %v3230 = vpack.c.b16 %v3209, %v3208
        %v3231 = vpack.c.b16 %v3211, %v3210
        %v3232 = vpack.c.b16 %v3213, %v3212
        %v3233 = vpack.c.b16 %v3215, %v3214
        %v3234 = vpack.c.b16 %v3217, %v3216
        %v3235 = vpack.c.b16 %v3219, %v3218
        %3252 = vmatpush.bf16.xpose.msra.mxu0 %v3227
        %3253 = vmatpush.bf16.xpose.msra.mxu0 %v3226
        %3254 = vmatpush.bf16.xpose.msra.mxu0 %v3225
        %3255 = vmatpush.bf16.xpose.msra.mxu0 %v3224
        %3256 = vmatpush.bf16.xpose.msra.mxu0 %v3223
        %3257 = vmatpush.bf16.xpose.msra.mxu0 %v3222
        %3258 = vmatpush.bf16.xpose.msra.mxu0 %v3221
        %3259 = vmatpush.bf16.xpose.msra.mxu0 %v3220
        %3260 = vmatmul.bf16.gmra.mxu0 %v3154
        %v3261 = vpop.f32.mrf.mxu0
        %v3262 = vadd.f32 %v3120, %v3261
        %v3263 = vpop.f32.mrf.mxu0
        %3264 = vdwg.mxu0
        %3265 = vmatpush.bf16.xpose.msra.mxu0 %v3235
        %3266 = vmatpush.bf16.xpose.msra.mxu0 %v3234
        %3267 = vmatpush.bf16.xpose.msra.mxu0 %v3233
        %3268 = vmatpush.bf16.xpose.msra.mxu0 %v3232
        %3269 = vmatpush.bf16.xpose.msra.mxu0 %v3231
        %3270 = vmatpush.bf16.xpose.msra.mxu0 %v3230
        %3271 = vmatpush.bf16.xpose.msra.mxu0 %v3229
        %3272 = vmatpush.bf16.xpose.msra.mxu0 %v3228
        %3273 = vmatmul.bf16.gmra.mxu0 %v3154
        %v3274 = vpop.f32.mrf.mxu0
        %v3275 = vadd.f32 %v3121, %v3274
        %v3276 = vpop.f32.mrf.mxu0
        %3277 = vdwg.mxu0
        %v3278 = vmax.f32 %v3262, 0.0
        %v3279 = vmax.f32 %v3275, 0.0
        %v3280 = vpack.c.bf16 %v3278, %v3278
        %v3281 = vpack.c.bf16 %v3279, %v3279
        %3282 = vmatpush.bf16.msra.mxu0 %v3227
        %3283 = vmatpush.bf16.msra.mxu0 %v3226
        %3284 = vmatpush.bf16.msra.mxu0 %v3225
        %3285 = vmatpush.bf16.msra.mxu0 %v3224
        %3286 = vmatpush.bf16.msra.mxu0 %v3223
        %3287 = vmatpush.bf16.msra.mxu0 %v3222
        %3288 = vmatpush.bf16.msra.mxu0 %v3221
        %3289 = vmatpush.bf16.msra.mxu0 %v3220
        %3290 = vmatmul.bf16.gmra.mxu0 %v3280
        %v3291 = vpop.f32.mrf.mxu0
        %v3292 = vadd.f32 %v3101, %v3291
        %v3293 = vpop.f32.mrf.mxu0
        %3294 = vdwg.mxu0
        %3295 = vmatpush.bf16.msra.mxu0 %v3235
        %3296 = vmatpush.bf16.msra.mxu0 %v3234
        %3297 = vmatpush.bf16.msra.mxu0 %v3233
        %3298 = vmatpush.bf16.msra.mxu0 %v3232
        %3299 = vmatpush.bf16.msra.mxu0 %v3231
        %3300 = vmatpush.bf16.msra.mxu0 %v3230
        %3301 = vmatpush.bf16.msra.mxu0 %v3229
        %3302 = vmatpush.bf16.msra.mxu0 %v3228
        %3303 = vmatmul.bf16.gmra.mxu0 %v3281
        %v3304 = vpop.f32.mrf.mxu0
        %v3305 = vadd.f32 %v3292, %v3304
        %v3306 = vpop.f32.mrf.mxu0
        %3307 = vdwg.mxu0
        %v3310 = vrot.slane %v3275, 7
        %v3311 = vsel %vm675, %v3262, %v3310
        %v3312 = vsel %vm498, %v3262, %v3310
        %v3313 = vrot.slane %v3312, 1
        %v3314 = vsel %vm501, %v3262, %v3310
        %v3315 = vrot.slane %v3314, 2
        %v3316 = vsel %vm504, %v3262, %v3310
        %v3317 = vrot.slane %v3316, 3
        %v3318 = vsel %vm507, %v3262, %v3310
        %v3319 = vrot.slane %v3318, 4
        %v3320 = vsel %vm510, %v3262, %v3310
        %v3321 = vrot.slane %v3320, 5
        %v3322 = vsel %vm513, %v3262, %v3310
        %v3323 = vrot.slane %v3322, 6
        %v3324 = vsel %vm689, %v3310, %v3262
        %v3325 = vrot.slane %v3324, 7
        %s3334 = scalar_lea.vmem %s411, 7 [#allocation13]
        %3335 = vst.msk [vmem:[%s3334] ss:$8 sm:$0x3] %vm703, %v3311
        %3336 = vst.msk [vmem:[%s3334] ss:$8 sm:$0x0] %vm703, %v3311
        %s3337 = scalar_lea.vmem %s411, 23 [#allocation13]
        %3338 = vst.msk [vmem:[%s3337] ss:$8 sm:$0x3] %vm703, %v3313
        %3339 = vst.msk [vmem:[%s3337] ss:$8 sm:$0x0] %vm703, %v3313
        %s3340 = scalar_lea.vmem %s411, 39 [#allocation13]
        %3341 = vst.msk [vmem:[%s3340] ss:$8 sm:$0x3] %vm703, %v3315
        %3342 = vst.msk [vmem:[%s3340] ss:$8 sm:$0x0] %vm703, %v3315
        %s3343 = scalar_lea.vmem %s411, 55 [#allocation13]
        %3344 = vst.msk [vmem:[%s3343] ss:$8 sm:$0x3] %vm703, %v3317
        %3345 = vst.msk [vmem:[%s3343] ss:$8 sm:$0x0] %vm703, %v3317
        %s3346 = scalar_lea.vmem %s411, 71 [#allocation13]
        %3347 = vst.msk [vmem:[%s3346] ss:$8 sm:$0x3] %vm703, %v3319
        %3348 = vst.msk [vmem:[%s3346] ss:$8 sm:$0x0] %vm703, %v3319
        %s3349 = scalar_lea.vmem %s411, 87 [#allocation13]
        %3350 = vst.msk [vmem:[%s3349] ss:$8 sm:$0x3] %vm703, %v3321
        %3351 = vst.msk [vmem:[%s3349] ss:$8 sm:$0x0] %vm703, %v3321
        %s3352 = scalar_lea.vmem %s411, 103 [#allocation13]
        %3353 = vst.msk [vmem:[%s3352] ss:$8 sm:$0x3] %vm703, %v3323
        %3354 = vst.msk [vmem:[%s3352] ss:$8 sm:$0x0] %vm703, %v3323
        %s3355 = scalar_lea.vmem %s411, 119 [#allocation13]
        %3356 = vst.msk [vmem:[%s3355] ss:$8 sm:$0x3] %vm703, %v3325
        %3357 = vst.msk [vmem:[%s3355] ss:$8 sm:$0x0] %vm703, %v3325
        %v3360 = vrot.slane %v3279, 7
        %v3361 = vsel %vm675, %v3278, %v3360
        %v3362 = vsel %vm498, %v3278, %v3360
        %v3363 = vrot.slane %v3362, 1
        %v3364 = vsel %vm501, %v3278, %v3360
        %v3365 = vrot.slane %v3364, 2
        %v3366 = vsel %vm504, %v3278, %v3360
        %v3367 = vrot.slane %v3366, 3
        %v3368 = vsel %vm507, %v3278, %v3360
        %v3369 = vrot.slane %v3368, 4
        %v3370 = vsel %vm510, %v3278, %v3360
        %v3371 = vrot.slane %v3370, 5
        %v3372 = vsel %vm513, %v3278, %v3360
        %v3373 = vrot.slane %v3372, 6
        %v3374 = vsel %vm689, %v3360, %v3278
        %v3375 = vrot.slane %v3374, 7
        %s3384 = scalar_lea.vmem %s404, 7 [#allocation11]
        %3385 = vst.msk [vmem:[%s3384] ss:$8 sm:$0x3] %vm703, %v3361
        %3386 = vst.msk [vmem:[%s3384] ss:$8 sm:$0x0] %vm703, %v3361
        %s3387 = scalar_lea.vmem %s404, 23 [#allocation11]
        %3388 = vst.msk [vmem:[%s3387] ss:$8 sm:$0x3] %vm703, %v3363
        %3389 = vst.msk [vmem:[%s3387] ss:$8 sm:$0x0] %vm703, %v3363
        %s3390 = scalar_lea.vmem %s404, 39 [#allocation11]
        %3391 = vst.msk [vmem:[%s3390] ss:$8 sm:$0x3] %vm703, %v3365
        %3392 = vst.msk [vmem:[%s3390] ss:$8 sm:$0x0] %vm703, %v3365
        %s3393 = scalar_lea.vmem %s404, 55 [#allocation11]
        %3394 = vst.msk [vmem:[%s3393] ss:$8 sm:$0x3] %vm703, %v3367
        %3395 = vst.msk [vmem:[%s3393] ss:$8 sm:$0x0] %vm703, %v3367
        %s3396 = scalar_lea.vmem %s404, 71 [#allocation11]
        %3397 = vst.msk [vmem:[%s3396] ss:$8 sm:$0x3] %vm703, %v3369
        %3398 = vst.msk [vmem:[%s3396] ss:$8 sm:$0x0] %vm703, %v3369
        %s3399 = scalar_lea.vmem %s404, 87 [#allocation11]
        %3400 = vst.msk [vmem:[%s3399] ss:$8 sm:$0x3] %vm703, %v3371
        %3401 = vst.msk [vmem:[%s3399] ss:$8 sm:$0x0] %vm703, %v3371
        %s3402 = scalar_lea.vmem %s404, 103 [#allocation11]
        %3403 = vst.msk [vmem:[%s3402] ss:$8 sm:$0x3] %vm703, %v3373
        %3404 = vst.msk [vmem:[%s3402] ss:$8 sm:$0x0] %vm703, %v3373
        %s3405 = scalar_lea.vmem %s404, 119 [#allocation11]
        %3406 = vst.msk [vmem:[%s3405] ss:$8 sm:$0x3] %vm703, %v3375
        %3407 = vst.msk [vmem:[%s3405] ss:$8 sm:$0x0] %vm703, %v3375
        %v3409 = vrot.slane %v3305, 1
        %v3410 = vrot.slane %v3305, 2
        %v3411 = vrot.slane %v3305, 3
        %v3412 = vrot.slane %v3305, 4
        %v3413 = vrot.slane %v3305, 5
        %v3414 = vrot.slane %v3305, 6
        %v3415 = vrot.slane %v3305, 7
        %3423 = vst [vmem:[%s397 + $0x7] sm:$0x1] %v3305
        %3424 = vst [vmem:[%s397 + $0xf] sm:$0x1] %v3409
        %3425 = vst [vmem:[%s397 + $0x17] sm:$0x1] %v3410
        %3426 = vst [vmem:[%s397 + $0x1f] sm:$0x1] %v3411
        %3427 = vst [vmem:[%s397 + $0x27] sm:$0x1] %v3412
        %3428 = vst [vmem:[%s397 + $0x2f] sm:$0x1] %v3413
        %3429 = vst [vmem:[%s397 + $0x37] sm:$0x1] %v3414
        %3430 = vst [vmem:[%s397 + $0x3f] sm:$0x1] %v3415
        %s3431 = sand.u32 %s145, 1
        %s3432 = scalar_lea.sflag [#allocation4], %s3431
        %s3433 = sand.u32 %s145, 1
        %s3434 = smul.addr %s3433, 64
        %s3435 = scalar_lea.vmem [#allocation10], %s3434
        %s3436 = sand.u32 %s33, 1
        %s3437 = scalar_lea.sflag [#allocation12], %s3436
        %s3438 = sand.u32 %s171, 1
        %s3439 = smul.addr %s3438, 128
        %s3440 = scalar_lea.vmem [#allocation11], %s3439
        %s3441 = sand.u32 %s33, 1
        %s3442 = scalar_lea.sflag [#allocation12], %s3441
        %s3443 = sand.u32 %s197, 1
        %s3444 = smul.addr %s3443, 128
        %s3445 = scalar_lea.vmem [#allocation13], %s3444
        // Predicated region
        $region53: #{tpu_custom_call.1} parent=35 // pred_check
          %p3446 = pneg %p155
        $region54: #{tpu_custom_call.1} parent=35 // pred_check_branch
          %3448 = sbr.rel (%p3446) target = $region56
        $region55: #{tpu_custom_call.1} parent=35 // pred_region
          %3450 = vsyncadd %s3432, 0
          %s3451 = smul.addr %s33, 8
          %s3452 = scalar_lea.hbm %s4, %s3451
          %s3453 = sshll.u32 %s3435, 4
          %s3454 = int_to_ptr.vmem [resolvable:$true] %s3453
          %s3455 = sshll.u32 %s3452, 4
          %s3456 = int_to_ptr.hbm [resolvable:$true] %s3455
          %3461 = dma.vmem_to_hbm [thread:$0]  %s3454, 1024, %s3456, %s3432, 128, 256, 8
        $region56: #{tpu_custom_call.1} parent=35 // pred_fallthru
          _
        // Predicated region
        $region57: #{tpu_custom_call.1} parent=35 // pred_check
          %p3462 = pneg %p181
        $region58: #{tpu_custom_call.1} parent=35 // pred_check_branch
          %3464 = sbr.rel (%p3462) target = $region60
        $region59: #{tpu_custom_call.1} parent=35 // pred_region
          %3466 = vsyncadd %s3437, 0
          %s3467 = smul.addr %s33, 2
          %s3468 = smul.addr %s3467, 8
          %s3469 = scalar_lea.hbm %s5, %s3468
          %s3470 = sshll.u32 %s3440, 4
          %s3471 = int_to_ptr.vmem [resolvable:$true] %s3470
          %s3472 = sshll.u32 %s3469, 4
          %s3473 = int_to_ptr.hbm [resolvable:$true] %s3472
          %3478 = dma.vmem_to_hbm [thread:$0]  %s3471, 2048, %s3473, %s3437, 256, 512, 16
        $region60: #{tpu_custom_call.1} parent=35 // pred_fallthru
          _
        // Predicated region
        $region61: #{tpu_custom_call.1} parent=35 // pred_check
          %p3479 = pneg %p207
        $region62: #{tpu_custom_call.1} parent=35 // pred_check_branch
          %3481 = sbr.rel (%p3479) target = $region64
        $region63: #{tpu_custom_call.1} parent=35 // pred_region
          %3483 = vsyncadd %s3442, 0
          %s3484 = smul.addr %s33, 2
          %s3485 = smul.addr %s3484, 8
          %s3486 = scalar_lea.hbm %s6, %s3485
          %s3487 = sshll.u32 %s3445, 4
          %s3488 = int_to_ptr.vmem [resolvable:$true] %s3487
          %s3489 = sshll.u32 %s3486, 4
          %s3490 = int_to_ptr.hbm [resolvable:$true] %s3489
          %3495 = dma.vmem_to_hbm [thread:$0]  %s3488, 2048, %s3490, %s3442, 256, 512, 16
        $region64: #{tpu_custom_call.1} parent=35 // pred_fallthru
          _
      $region36: #{tpu_custom_call.1} parent=5 // pred_fallthru
        _
      %p3496 = scmp.le.s32.totalorder 2, %s28
      // Predicated region
      $region65: #{tpu_custom_call.1} parent=5 // pred_check
        %p3497 = pneg %p3496
      $region66: #{tpu_custom_call.1} parent=5 // pred_check_branch
        %3499 = sbr.rel (%p3497) target = $region68
      $region67: #{tpu_custom_call.1} parent=5 // pred_region
        %s3500 = ssub.s32 %s28, 2
        // Predicated region
        $region69: #{tpu_custom_call.1} parent=67 // pred_check
          %p3501 = pneg %p161
        $region70: #{tpu_custom_call.1} parent=67 // pred_check_branch
          %3503 = sbr.rel (%p3501) target = $region72
        $region71: #{tpu_custom_call.1} parent=67 // pred_region
          %s3504 = sand.u32 %s146, 1
          %s3505 = scalar_lea.sflag [#allocation4], %s3504
          %s3506 = sand.u32 %s146, 1
          %s3507 = smul.addr %s3506, 64
          %s3508 = scalar_lea.vmem [#allocation10], %s3507
          %3510 = dma.done %s3505, 1024
        $region72: #{tpu_custom_call.1} parent=67 // pred_fallthru
          _
        // Predicated region
        $region73: #{tpu_custom_call.1} parent=67 // pred_check
          %p3511 = pneg %p187
        $region74: #{tpu_custom_call.1} parent=67 // pred_check_branch
          %3513 = sbr.rel (%p3511) target = $region76
        $region75: #{tpu_custom_call.1} parent=67 // pred_region
          %s3514 = sand.u32 %s34, 1
          %s3515 = scalar_lea.sflag [#allocation12], %s3514
          %s3516 = sand.u32 %s172, 1
          %s3517 = smul.addr %s3516, 128
          %s3518 = scalar_lea.vmem [#allocation11], %s3517
          %3520 = dma.done %s3515, 2048
        $region76: #{tpu_custom_call.1} parent=67 // pred_fallthru
          _
        // Predicated region
        $region77: #{tpu_custom_call.1} parent=67 // pred_check
          %p3521 = pneg %p213
        $region78: #{tpu_custom_call.1} parent=67 // pred_check_branch
          %3523 = sbr.rel (%p3521) target = $region80
        $region79: #{tpu_custom_call.1} parent=67 // pred_region
          %s3524 = sand.u32 %s34, 1
          %s3525 = scalar_lea.sflag [#allocation12], %s3524
          %s3526 = sand.u32 %s198, 1
          %s3527 = smul.addr %s3526, 128
          %s3528 = scalar_lea.vmem [#allocation13], %s3527
          %3530 = dma.done %s3525, 2048
        $region80: #{tpu_custom_call.1} parent=67 // pred_fallthru
          _
      $region68: #{tpu_custom_call.1} parent=5 // pred_fallthru
        _
    $region6: #{tpu_custom_call.1} parent=1 // loop_footer
      %s32 = sadd.s32 1, %s28
    $region7: #{tpu_custom_call.1} parent=1 // loop_footer_branch
      %27 = sbr.rel target = $region3
    $region8: #{tpu_custom_call.1} parent=1 // loop_exit
      _
    %3531 = vsyncpa [#allocation3], 1
    %s3532 = scalar_lea.sflag [#allocation3], 1
    %3533 = vsyncpa %s3532, 1
    %3534 = vsyncpa [#allocation6], 1
    %s3535 = scalar_lea.sflag [#allocation6], 1
    %3536 = vsyncpa %s3535, 1
    %3537 = vsyncpa [#allocation9], 1
    %s3538 = scalar_lea.sflag [#allocation9], 1
    %3539 = vsyncpa %s3538, 1
    %3540 = vsyncpa [#allocation4], 1
    %s3541 = scalar_lea.sflag [#allocation4], 1
    %3542 = vsyncpa %s3541, 1
    %3543 = vsyncpa [#allocation12], 1
    %s3544 = scalar_lea.sflag [#allocation12], 1
    %3545 = vsyncpa %s3544, 1

</llo_original>
